<compile_context>
chip_gen: v5e
topology: v5e:2x2
jax: 0.10.0
libtpu: 0.0.40
codegen_flags: <defaults>
</compile_context>

<pallas_src>
import functools

import jax
import jax.numpy as jnp
from jax import lax
from jax.experimental import pallas as pl
from jax.experimental.pallas import tpu as pltpu


def _round_up(n, m):
    return ((n + m - 1) // m) * m


def _cursor_rnn_kernel(x_ref, wih_ref, whh_ref, b_ref,
                       wattn_ref, wres_ref, bres_ref,
                       gamma_ref, beta_ref, wfc_ref, bfc_ref,
                       out_ref, attn_ref, xg_ref, lstm_ref,
                       *, seq_len, batch_padded, hidden):
    T, Bp, H = seq_len, batch_padded, hidden
    Hp = wattn_ref.shape[1]          # hidden dim padded to a multiple of 128
    Tp = attn_ref.shape[1]           # seq len padded to a multiple of 128

    # ---- hoisted input projection: ONE big MXU matmul + bias for all timesteps ----
    xg_ref[...] = (jnp.dot(x_ref[...], wih_ref[...],
                           preferred_element_type=jnp.float32) + b_ref[...])

    w_attn = wattn_ref[...]                                        # (1, Hp)

    # ---- LSTM recurrence (gate order i, f, g, o; matches torch.nn.LSTM) ----
    # Loop body is just the recurrence; h_t is stored to the lstm_out scratch and all
    # attention / softmax work happens after the loop (off the serial critical path).
    def step(t, carry):
        h, c = carry
        row0 = pl.multiple_of(t * Bp, Bp)                          # sublane-tile aligned
        xg_t = xg_ref[pl.ds(row0, Bp), :]                          # (Bp, 4*Hp), unmasked
        gates = xg_t + jnp.dot(h, whh_ref[...],
                               preferred_element_type=jnp.float32)
        # Hp is a multiple of 128 -> every gate slice is lane-tile aligned.
        i_g = jax.nn.sigmoid(gates[:, 0 * Hp:1 * Hp])
        f_g = jax.nn.sigmoid(gates[:, 1 * Hp:2 * Hp])
        g_g = jnp.tanh(gates[:, 2 * Hp:3 * Hp])
        o_g = jax.nn.sigmoid(gates[:, 3 * Hp:4 * Hp])
        c_new = f_g * c + i_g * g_g
        h_new = o_g * jnp.tanh(c_new)                              # (Bp, Hp)
        lstm_ref[t] = h_new                                        # full-tile store
        return (h_new, c_new)

    h0 = jnp.zeros((Bp, Hp), jnp.float32)
    c0 = jnp.zeros((Bp, Hp), jnp.float32)
    lax.fori_loop(0, T, step, (h0, c0), unroll=min(T, 8))

    # ---- deferred attention: scores in a lane-dense (Bp, Tp) layout ----
    # Pad time lanes stay -inf -> exp() == 0, so the softmax sum only covers real steps.
    t_lanes = lax.broadcasted_iota(jnp.int32, (Bp, Tp), 1)
    scores = jnp.full((Bp, Tp), -jnp.inf, jnp.float32)
    for t in range(T):                                             # static; post-loop, tiny
        s_t = jnp.sum(lstm_ref[t] * w_attn, axis=-1, keepdims=True)   # (Bp, 1)
        scores = jnp.where(t_lanes == t, s_t, scores)

    m = jnp.max(scores, axis=-1, keepdims=True)                    # (Bp, 1)
    e = jnp.exp(scores - m)
    l = jnp.sum(e, axis=-1, keepdims=True)
    inv_l = pl.reciprocal(l)                                       # exact; shared
    p = e * inv_l                                                  # (Bp, Tp)
    attn_ref[...] = p                                              # lane-dense store

    # weighted context: sum_t p[:, t] * h_t  (static loop; lane-broadcast of a 1-lane slice)
    context = jnp.zeros((Bp, Hp), jnp.float32)
    for t in range(T):
        context = context + p[:, t:t + 1] * lstm_ref[t]

    # ---- residual branch on last timestep ----
    x_last = x_ref[pl.ds((T - 1) * Bp, Bp), :]                     # (Bp, D), static start
    residual = (jnp.dot(x_last, wres_ref[...],
                        preferred_element_type=jnp.float32) + bres_ref[...])

    # ---- LayerNorm(context + residual) over the real H lanes ----
    # Correct only because every padded column of context / wres / bres / gamma / beta is
    # exactly zero (see wrapper padding); the mask below keeps the centered pad lanes zero.
    combined = context + residual                                  # (Bp, Hp)
    h_mask = (lax.broadcasted_iota(jnp.int32, (1, Hp), 1) < H).astype(jnp.float32)
    mean = jnp.sum(combined, axis=-1, keepdims=True) * (1.0 / H)
    cent = (combined - mean) * h_mask
    var = jnp.sum(cent * cent, axis=-1, keepdims=True) * (1.0 / H)
    normed = cent * lax.rsqrt(var + 1e-5) * gamma_ref[...] + beta_ref[...]

    # ---- final fc (lane-dense padded output) ----
    out_ref[...] = (jnp.dot(normed, wfc_ref[...],
                            preferred_element_type=jnp.float32) + bfc_ref[...])


def _pad_gate_cols(w, H, Hp):
    """(..., 4*H) gate-concat layout -> (..., 4*Hp), each gate zero-padded to Hp lanes."""
    lead = w.shape[:-1]
    w4 = w.reshape(*lead, 4, H)
    w4 = jnp.pad(w4, [(0, 0)] * len(lead) + [(0, 0), (0, Hp - H)])
    return w4.reshape(*lead, 4 * Hp)


def cursor_rnn_forward(x, params):
    """x: (B, T, D) float32 -> (output (B, O), attn_weights (B, T, 1))."""
    B, T, D = x.shape
    H = params["whh"].shape[0]
    O = params["wfc"].shape[1]
    Bp = _round_up(B, 8)           # sublane-aligned batch
    Hp = _round_up(H, 128)
    Op = _round_up(O, 128)
    Tp = _round_up(T, 128)

    # pad batch to 8 sublanes, go time-major, flatten to (T*Bp, D): one input-proj matmul
    x_p = jnp.pad(x.astype(jnp.float32), ((0, Bp - B), (0, 0), (0, 0)))
    x_tm = jnp.transpose(x_p, (1, 0, 2)).reshape(T * Bp, D)

    # zero-pad parameters to lane-aligned (Hp / Op) layouts
    wih_ex = _pad_gate_cols(params["wih"].astype(jnp.float32), H, Hp)          # (D, 4*Hp)
    whh_ex = _pad_gate_cols(params["whh"].astype(jnp.float32), H, Hp)          # (H, 4*Hp)
    whh_ex = jnp.pad(whh_ex, ((0, Hp - H), (0, 0)))                            # (Hp, 4*Hp)
    b_ex = _pad_gate_cols(params["b"].astype(jnp.float32), H, Hp)              # (1, 4*Hp)
    wattn_ex = jnp.pad(params["wattn"].astype(jnp.float32), ((0, 0), (0, Hp - H)))
    wres_ex = jnp.pad(params["wres"].astype(jnp.float32), ((0, 0), (0, Hp - H)))
    bres_ex = jnp.pad(params["bres"].astype(jnp.float32), ((0, 0), (0, Hp - H)))
    gamma_ex = jnp.pad(params["gamma"].astype(jnp.float32), ((0, 0), (0, Hp - H)))
    beta_ex = jnp.pad(params["beta"].astype(jnp.float32), ((0, 0), (0, Hp - H)))
    wfc_ex = jnp.pad(params["wfc"].astype(jnp.float32), ((0, Hp - H), (0, Op - O)))
    bfc_ex = jnp.pad(params["bfc"].astype(jnp.float32), ((0, 0), (0, Op - O)))

    operands = (x_tm, wih_ex, whh_ex, b_ex, wattn_ex, wres_ex, bres_ex,
                gamma_ex, beta_ex, wfc_ex, bfc_ex)

    # explicit VMEM budget: inputs + outputs + xg/lstm scratches, x2 margin + headroom
    param_bytes = sum(int(a.size) * 4 for a in operands)
    scratch_bytes = (T * Bp * 4 * Hp + T * Bp * Hp) * 4
    out_bytes = (Bp * Op + Bp * Tp) * 4
    vmem_bytes = int(min(2 * (param_bytes + scratch_bytes + out_bytes) + (4 << 20),
                         32 << 20))

    vmem = functools.partial(pl.BlockSpec, memory_space=pltpu.MemorySpace.VMEM)
    kernel = functools.partial(_cursor_rnn_kernel, seq_len=T, batch_padded=Bp, hidden=H)

    out_p, attn_p = pl.pallas_call(
        kernel,
        out_shape=(jax.ShapeDtypeStruct((Bp, Op), jnp.float32),
                   jax.ShapeDtypeStruct((Bp, Tp), jnp.float32)),
        in_specs=[vmem()] * len(operands),
        out_specs=(vmem(), vmem()),
        scratch_shapes=[pltpu.VMEM((T * Bp, 4 * Hp), jnp.float32),   # hoisted x @ W_ih + b
                        pltpu.VMEM((T, Bp, Hp), jnp.float32)],       # lstm_out slab
        compiler_params=pltpu.CompilerParams(vmem_limit_bytes=vmem_bytes),
    )(*operands)

    output = out_p[:B, :O]                                         # (B, O)
    attn_weights = attn_p[:B, :T][:, :, None]                      # (B, T, 1)
    return output, attn_weights


def init_params(key, input_dim, hidden_dim, output_dim):
    ks = jax.random.split(key, 8)
    kH = 1.0 / float(hidden_dim) ** 0.5
    kD = 1.0 / float(input_dim) ** 0.5
    u = lambda k, shape, b: jax.random.uniform(k, shape, jnp.float32, -b, b)
    # Note: torch LSTM's b_ih + b_hh are folded into a single bias (mathematically identical).
    # TODO(synk): nn.LSTM dropout only applies between stacked layers; num_layers=1 => no-op here.
    return {
        "wih":   u(ks[0], (input_dim, 4 * hidden_dim), kH),   # W_ih^T
        "whh":   u(ks[1], (hidden_dim, 4 * hidden_dim), kH),  # W_hh^T
        "b":     u(ks[2], (1, 4 * hidden_dim), kH),
        "wattn": u(ks[3], (1, hidden_dim), kH),               # attention Linear(H, 1, bias=False)
        "wres":  u(ks[4], (input_dim, hidden_dim), kD),       # residual_fc W^T
        "bres":  u(ks[5], (1, hidden_dim), kD),
        "gamma": jnp.ones((1, hidden_dim), jnp.float32),
        "beta":  jnp.zeros((1, hidden_dim), jnp.float32),
        "wfc":   u(ks[6], (hidden_dim, output_dim), kH),      # fc W^T
        "bfc":   u(ks[7], (1, output_dim), kH),
    }


def reference_forward(x, params):
    """Pure-JAX reference (mirrors the PyTorch forward) for correctness checking."""
    B, T, _ = x.shape
    H = params["whh"].shape[0]
    h = jnp.zeros((B, H), jnp.float32)
    c = jnp.zeros((B, H), jnp.float32)
    outs = []
    for t in range(T):
        gates = x[:, t, :] @ params["wih"] + h @ params["whh"] + params["b"]
        i_g = jax.nn.sigmoid(gates[:, :H])
        f_g = jax.nn.sigmoid(gates[:, H:2 * H])
        g_g = jnp.tanh(gates[:, 2 * H:3 * H])
        o_g = jax.nn.sigmoid(gates[:, 3 * H:])
        c = f_g * c + i_g * g_g
        h = o_g * jnp.tanh(c)
        outs.append(h)
    lstm_out = jnp.stack(outs, axis=1)                              # (B, T, H)
    scores = lstm_out @ params["wattn"].T                           # (B, T, 1)
    attn = jax.nn.softmax(scores, axis=1)
    context = jnp.sum(attn * lstm_out, axis=1)
    residual = x[:, -1, :] @ params["wres"] + params["bres"]
    comb = context + residual
    mean = comb.mean(-1, keepdims=True)
    var = ((comb - mean) ** 2).mean(-1, keepdims=True)
    normed = (comb - mean) / jnp.sqrt(var + 1e-5) * params["gamma"] + params["beta"]
    out = normed @ params["wfc"] + params["bfc"]
    return out, attn


if __name__ == "__main__":
    B, T, D, H, O = 2, 8, 4, 32, 8

    key = jax.random.PRNGKey(0)
    k_x, k_p = jax.random.split(key)
    x = jax.random.normal(k_x, (B, T, D), jnp.float32)
    params = init_params(k_p, D, H, O)

    out, attn = jax.block_until_ready(cursor_rnn_forward(x, params))

    out_ref, attn_ref = reference_forward(x, params)
    assert out.shape == (B, O) and attn.shape == (B, T, 1)
    assert jnp.allclose(out, out_ref, atol=2e-4, rtol=2e-4)
    assert jnp.allclose(attn, attn_ref, atol=2e-4, rtol=2e-4)

    print("KERNEL_OK")
</pallas_src>

<mosaic_0001>
module attributes {stable_mosaic.version = 11 : i64} {
  func.func @_cursor_rnn_kernel(%arg0: memref<64x4xf32, #tpu.memory_space<vmem>>, %arg1: memref<4x512xf32, #tpu.memory_space<vmem>>, %arg2: memref<128x512xf32, #tpu.memory_space<vmem>>, %arg3: memref<1x512xf32, #tpu.memory_space<vmem>>, %arg4: memref<1x128xf32, #tpu.memory_space<vmem>>, %arg5: memref<4x128xf32, #tpu.memory_space<vmem>>, %arg6: memref<1x128xf32, #tpu.memory_space<vmem>>, %arg7: memref<1x128xf32, #tpu.memory_space<vmem>>, %arg8: memref<1x128xf32, #tpu.memory_space<vmem>>, %arg9: memref<128x128xf32, #tpu.memory_space<vmem>>, %arg10: memref<1x128xf32, #tpu.memory_space<vmem>>, %arg11: memref<8x128xf32, #tpu.memory_space<vmem>>, %arg12: memref<8x128xf32, #tpu.memory_space<vmem>>, %arg13: memref<64x512xf32, #tpu.memory_space<vmem>>, %arg14: memref<8x8x128xf32, #tpu.memory_space<vmem>>) attributes {dimension_semantics = [], scalar_prefetch = 0 : i64, scratch_operands = 2 : i64, tpu.core_type = #tpu.core_type<tc>} {
    %c0 = arith.constant 0 : index
    %c0_0 = arith.constant 0 : index
    %0 = vector.load %arg0[%c0, %c0_0] : memref<64x4xf32, #tpu.memory_space<vmem>>, vector<64x4xf32>
    %c0_1 = arith.constant 0 : index
    %c0_2 = arith.constant 0 : index
    %1 = vector.load %arg1[%c0_1, %c0_2] : memref<4x512xf32, #tpu.memory_space<vmem>>, vector<4x512xf32>
    %cst = arith.constant dense<0.000000e+00> : vector<64x512xf32>
    %2 = tpu.matmul %0, %1, %cst {dimension_numbers = #tpu.dot_dimension_numbers<[1], [0], [0], [1], [0, 0, 1, 1], [], []>} : vector<64x4xf32>, vector<4x512xf32>, vector<64x512xf32> -> vector<64x512xf32>
    %c0_3 = arith.constant 0 : index
    %c0_4 = arith.constant 0 : index
    %3 = vector.load %arg3[%c0_3, %c0_4] : memref<1x512xf32, #tpu.memory_space<vmem>>, vector<1x512xf32>
    %4 = vector.broadcast %3 : vector<1x512xf32> to vector<64x512xf32>
    %5 = arith.addf %2, %4 : vector<64x512xf32>
    %c0_5 = arith.constant 0 : index
    %c0_6 = arith.constant 0 : index
    %6 = vector.load %arg13[%c0_5, %c0_6] : memref<64x512xf32, #tpu.memory_space<vmem>>, vector<64x512xf32>
    tpu.vector_store %arg13[%c0_5, %c0_6], %5 {strides = array<i32>} : memref<64x512xf32, #tpu.memory_space<vmem>>, vector<64x512xf32>,
    %c0_7 = arith.constant 0 : index
    %c0_8 = arith.constant 0 : index
    %7 = vector.load %arg4[%c0_7, %c0_8] : memref<1x128xf32, #tpu.memory_space<vmem>>, vector<1x128xf32>
    %cst_9 = arith.constant 0.000000e+00 : f32
    %8 = vector.broadcast %cst_9 : f32 to vector<8x128xf32>
    %cst_10 = arith.constant 0.000000e+00 : f32
    %9 = vector.broadcast %cst_10 : f32 to vector<8x128xf32>
    %c0_i32 = arith.constant 0 : i32
    %c8_i32 = arith.constant 8 : i32
    %10 = arith.muli %c0_i32, %c8_i32 : i32
    %11 = tpu.assume_multiple %10, 8 : i32
    %12 = arith.index_cast %11 : i32 to index
    %c0_11 = arith.constant 0 : index
    %13 = vector.load %arg13[%12, %c0_11] : memref<64x512xf32, #tpu.memory_space<vmem>>, vector<8x512xf32>
    %c0_12 = arith.constant 0 : index
    %c0_13 = arith.constant 0 : index
    %14 = vector.load %arg2[%c0_12, %c0_13] : memref<128x512xf32, #tpu.memory_space<vmem>>, vector<128x512xf32>
    %cst_14 = arith.constant dense<0.000000e+00> : vector<8x512xf32>
    %15 = tpu.matmul %8, %14, %cst_14 {dimension_numbers = #tpu.dot_dimension_numbers<[1], [0], [0], [1], [0, 0, 1, 1], [], []>} : vector<8x128xf32>, vector<128x512xf32>, vector<8x512xf32> -> vector<8x512xf32>
    %16 = arith.addf %13, %15 : vector<8x512xf32>
    %17 = vector.extract_strided_slice %16 {offsets = [0, 0], sizes = [8, 128], strides = [1, 1]} : vector<8x512xf32> to vector<8x128xf32>
    %18 = arith.negf %17 : vector<8x128xf32>
    %19 = math.exp %18 : vector<8x128xf32>
    %cst_15 = arith.constant 1.000000e+00 : f32
    %20 = vector.broadcast %cst_15 : f32 to vector<8x128xf32>
    %21 = arith.addf %20, %19 : vector<8x128xf32>
    %22 = arith.divf %20, %21 : vector<8x128xf32>
    %23 = vector.extract_strided_slice %16 {offsets = [0, 128], sizes = [8, 128], strides = [1, 1]} : vector<8x512xf32> to vector<8x128xf32>
    %24 = arith.negf %23 : vector<8x128xf32>
    %25 = math.exp %24 : vector<8x128xf32>
    %cst_16 = arith.constant 1.000000e+00 : f32
    %26 = vector.broadcast %cst_16 : f32 to vector<8x128xf32>
    %27 = arith.addf %26, %25 : vector<8x128xf32>
    %28 = arith.divf %26, %27 : vector<8x128xf32>
    %29 = vector.extract_strided_slice %16 {offsets = [0, 256], sizes = [8, 128], strides = [1, 1]} : vector<8x512xf32> to vector<8x128xf32>
    %30 = math.tanh %29 : vector<8x128xf32>
    %31 = vector.extract_strided_slice %16 {offsets = [0, 384], sizes = [8, 128], strides = [1, 1]} : vector<8x512xf32> to vector<8x128xf32>
    %32 = arith.negf %31 : vector<8x128xf32>
    %33 = math.exp %32 : vector<8x128xf32>
    %cst_17 = arith.constant 1.000000e+00 : f32
    %34 = vector.broadcast %cst_17 : f32 to vector<8x128xf32>
    %35 = arith.addf %34, %33 : vector<8x128xf32>
    %36 = arith.divf %34, %35 : vector<8x128xf32>
    %37 = arith.mulf %28, %9 : vector<8x128xf32>
    %38 = arith.mulf %22, %30 : vector<8x128xf32>
    %39 = arith.addf %37, %38 : vector<8x128xf32>
    %40 = math.tanh %39 : vector<8x128xf32>
    %41 = arith.mulf %36, %40 : vector<8x128xf32>
    %42 = arith.index_cast %c0_i32 : i32 to index
    %c0_18 = arith.constant 0 : index
    %c0_19 = arith.constant 0 : index
    %43 = vector.load %arg14[%42, %c0_18, %c0_19] : memref<8x8x128xf32, #tpu.memory_space<vmem>>, vector<1x8x128xf32>
    %44 = vector.shape_cast %43 : vector<1x8x128xf32> to vector<8x128xf32>
    %45 = vector.shape_cast %41 : vector<8x128xf32> to vector<1x8x128xf32>
    tpu.vector_store %arg14[%42, %c0_18, %c0_19], %45 {strides = array<i32>} : memref<8x8x128xf32, #tpu.memory_space<vmem>>, vector<1x8x128xf32>,
    %c1_i32 = arith.constant 1 : i32
    %c8_i32_20 = arith.constant 8 : i32
    %46 = arith.muli %c1_i32, %c8_i32_20 : i32
    %47 = tpu.assume_multiple %46, 8 : i32
    %48 = arith.index_cast %47 : i32 to index
    %c0_21 = arith.constant 0 : index
    %49 = vector.load %arg13[%48, %c0_21] : memref<64x512xf32, #tpu.memory_space<vmem>>, vector<8x512xf32>
    %c0_22 = arith.constant 0 : index
    %c0_23 = arith.constant 0 : index
    %50 = vector.load %arg2[%c0_22, %c0_23] : memref<128x512xf32, #tpu.memory_space<vmem>>, vector<128x512xf32>
    %cst_24 = arith.constant dense<0.000000e+00> : vector<8x512xf32>
    %51 = tpu.matmul %41, %50, %cst_24 {dimension_numbers = #tpu.dot_dimension_numbers<[1], [0], [0], [1], [0, 0, 1, 1], [], []>} : vector<8x128xf32>, vector<128x512xf32>, vector<8x512xf32> -> vector<8x512xf32>
    %52 = arith.addf %49, %51 : vector<8x512xf32>
    %53 = vector.extract_strided_slice %52 {offsets = [0, 0], sizes = [8, 128], strides = [1, 1]} : vector<8x512xf32> to vector<8x128xf32>
    %54 = arith.negf %53 : vector<8x128xf32>
    %55 = math.exp %54 : vector<8x128xf32>
    %cst_25 = arith.constant 1.000000e+00 : f32
    %56 = vector.broadcast %cst_25 : f32 to vector<8x128xf32>
    %57 = arith.addf %56, %55 : vector<8x128xf32>
    %58 = arith.divf %56, %57 : vector<8x128xf32>
    %59 = vector.extract_strided_slice %52 {offsets = [0, 128], sizes = [8, 128], strides = [1, 1]} : vector<8x512xf32> to vector<8x128xf32>
    %60 = arith.negf %59 : vector<8x128xf32>
    %61 = math.exp %60 : vector<8x128xf32>
    %cst_26 = arith.constant 1.000000e+00 : f32
    %62 = vector.broadcast %cst_26 : f32 to vector<8x128xf32>
    %63 = arith.addf %62, %61 : vector<8x128xf32>
    %64 = arith.divf %62, %63 : vector<8x128xf32>
    %65 = vector.extract_strided_slice %52 {offsets = [0, 256], sizes = [8, 128], strides = [1, 1]} : vector<8x512xf32> to vector<8x128xf32>
    %66 = math.tanh %65 : vector<8x128xf32>
    %67 = vector.extract_strided_slice %52 {offsets = [0, 384], sizes = [8, 128], strides = [1, 1]} : vector<8x512xf32> to vector<8x128xf32>
    %68 = arith.negf %67 : vector<8x128xf32>
    %69 = math.exp %68 : vector<8x128xf32>
    %cst_27 = arith.constant 1.000000e+00 : f32
    %70 = vector.broadcast %cst_27 : f32 to vector<8x128xf32>
    %71 = arith.addf %70, %69 : vector<8x128xf32>
    %72 = arith.divf %70, %71 : vector<8x128xf32>
    %73 = arith.mulf %64, %39 : vector<8x128xf32>
    %74 = arith.mulf %58, %66 : vector<8x128xf32>
    %75 = arith.addf %73, %74 : vector<8x128xf32>
    %76 = math.tanh %75 : vector<8x128xf32>
    %77 = arith.mulf %72, %76 : vector<8x128xf32>
    %78 = arith.index_cast %c1_i32 : i32 to index
    %c0_28 = arith.constant 0 : index
    %c0_29 = arith.constant 0 : index
    %79 = vector.load %arg14[%78, %c0_28, %c0_29] : memref<8x8x128xf32, #tpu.memory_space<vmem>>, vector<1x8x128xf32>
    %80 = vector.shape_cast %79 : vector<1x8x128xf32> to vector<8x128xf32>
    %81 = vector.shape_cast %77 : vector<8x128xf32> to vector<1x8x128xf32>
    tpu.vector_store %arg14[%78, %c0_28, %c0_29], %81 {strides = array<i32>} : memref<8x8x128xf32, #tpu.memory_space<vmem>>, vector<1x8x128xf32>,
    %c2_i32 = arith.constant 2 : i32
    %c8_i32_30 = arith.constant 8 : i32
    %82 = arith.muli %c2_i32, %c8_i32_30 : i32
    %83 = tpu.assume_multiple %82, 8 : i32
    %84 = arith.index_cast %83 : i32 to index
    %c0_31 = arith.constant 0 : index
    %85 = vector.load %arg13[%84, %c0_31] : memref<64x512xf32, #tpu.memory_space<vmem>>, vector<8x512xf32>
    %c0_32 = arith.constant 0 : index
    %c0_33 = arith.constant 0 : index
    %86 = vector.load %arg2[%c0_32, %c0_33] : memref<128x512xf32, #tpu.memory_space<vmem>>, vector<128x512xf32>
    %cst_34 = arith.constant dense<0.000000e+00> : vector<8x512xf32>
    %87 = tpu.matmul %77, %86, %cst_34 {dimension_numbers = #tpu.dot_dimension_numbers<[1], [0], [0], [1], [0, 0, 1, 1], [], []>} : vector<8x128xf32>, vector<128x512xf32>, vector<8x512xf32> -> vector<8x512xf32>
    %88 = arith.addf %85, %87 : vector<8x512xf32>
    %89 = vector.extract_strided_slice %88 {offsets = [0, 0], sizes = [8, 128], strides = [1, 1]} : vector<8x512xf32> to vector<8x128xf32>
    %90 = arith.negf %89 : vector<8x128xf32>
    %91 = math.exp %90 : vector<8x128xf32>
    %cst_35 = arith.constant 1.000000e+00 : f32
    %92 = vector.broadcast %cst_35 : f32 to vector<8x128xf32>
    %93 = arith.addf %92, %91 : vector<8x128xf32>
    %94 = arith.divf %92, %93 : vector<8x128xf32>
    %95 = vector.extract_strided_slice %88 {offsets = [0, 128], sizes = [8, 128], strides = [1, 1]} : vector<8x512xf32> to vector<8x128xf32>
    %96 = arith.negf %95 : vector<8x128xf32>
    %97 = math.exp %96 : vector<8x128xf32>
    %cst_36 = arith.constant 1.000000e+00 : f32
    %98 = vector.broadcast %cst_36 : f32 to vector<8x128xf32>
    %99 = arith.addf %98, %97 : vector<8x128xf32>
    %100 = arith.divf %98, %99 : vector<8x128xf32>
    %101 = vector.extract_strided_slice %88 {offsets = [0, 256], sizes = [8, 128], strides = [1, 1]} : vector<8x512xf32> to vector<8x128xf32>
    %102 = math.tanh %101 : vector<8x128xf32>
    %103 = vector.extract_strided_slice %88 {offsets = [0, 384], sizes = [8, 128], strides = [1, 1]} : vector<8x512xf32> to vector<8x128xf32>
    %104 = arith.negf %103 : vector<8x128xf32>
    %105 = math.exp %104 : vector<8x128xf32>
    %cst_37 = arith.constant 1.000000e+00 : f32
    %106 = vector.broadcast %cst_37 : f32 to vector<8x128xf32>
    %107 = arith.addf %106, %105 : vector<8x128xf32>
    %108 = arith.divf %106, %107 : vector<8x128xf32>
    %109 = arith.mulf %100, %75 : vector<8x128xf32>
    %110 = arith.mulf %94, %102 : vector<8x128xf32>
    %111 = arith.addf %109, %110 : vector<8x128xf32>
    %112 = math.tanh %111 : vector<8x128xf32>
    %113 = arith.mulf %108, %112 : vector<8x128xf32>
    %114 = arith.index_cast %c2_i32 : i32 to index
    %c0_38 = arith.constant 0 : index
    %c0_39 = arith.constant 0 : index
    %115 = vector.load %arg14[%114, %c0_38, %c0_39] : memref<8x8x128xf32, #tpu.memory_space<vmem>>, vector<1x8x128xf32>
    %116 = vector.shape_cast %115 : vector<1x8x128xf32> to vector<8x128xf32>
    %117 = vector.shape_cast %113 : vector<8x128xf32> to vector<1x8x128xf32>
    tpu.vector_store %arg14[%114, %c0_38, %c0_39], %117 {strides = array<i32>} : memref<8x8x128xf32, #tpu.memory_space<vmem>>, vector<1x8x128xf32>,
    %c3_i32 = arith.constant 3 : i32
    %c8_i32_40 = arith.constant 8 : i32
    %118 = arith.muli %c3_i32, %c8_i32_40 : i32
    %119 = tpu.assume_multiple %118, 8 : i32
    %120 = arith.index_cast %119 : i32 to index
    %c0_41 = arith.constant 0 : index
    %121 = vector.load %arg13[%120, %c0_41] : memref<64x512xf32, #tpu.memory_space<vmem>>, vector<8x512xf32>
    %c0_42 = arith.constant 0 : index
    %c0_43 = arith.constant 0 : index
    %122 = vector.load %arg2[%c0_42, %c0_43] : memref<128x512xf32, #tpu.memory_space<vmem>>, vector<128x512xf32>
    %cst_44 = arith.constant dense<0.000000e+00> : vector<8x512xf32>
    %123 = tpu.matmul %113, %122, %cst_44 {dimension_numbers = #tpu.dot_dimension_numbers<[1], [0], [0], [1], [0, 0, 1, 1], [], []>} : vector<8x128xf32>, vector<128x512xf32>, vector<8x512xf32> -> vector<8x512xf32>
    %124 = arith.addf %121, %123 : vector<8x512xf32>
    %125 = vector.extract_strided_slice %124 {offsets = [0, 0], sizes = [8, 128], strides = [1, 1]} : vector<8x512xf32> to vector<8x128xf32>
    %126 = arith.negf %125 : vector<8x128xf32>
    %127 = math.exp %126 : vector<8x128xf32>
    %cst_45 = arith.constant 1.000000e+00 : f32
    %128 = vector.broadcast %cst_45 : f32 to vector<8x128xf32>
    %129 = arith.addf %128, %127 : vector<8x128xf32>
    %130 = arith.divf %128, %129 : vector<8x128xf32>
    %131 = vector.extract_strided_slice %124 {offsets = [0, 128], sizes = [8, 128], strides = [1, 1]} : vector<8x512xf32> to vector<8x128xf32>
    %132 = arith.negf %131 : vector<8x128xf32>
    %133 = math.exp %132 : vector<8x128xf32>
    %cst_46 = arith.constant 1.000000e+00 : f32
    %134 = vector.broadcast %cst_46 : f32 to vector<8x128xf32>
    %135 = arith.addf %134, %133 : vector<8x128xf32>
    %136 = arith.divf %134, %135 : vector<8x128xf32>
    %137 = vector.extract_strided_slice %124 {offsets = [0, 256], sizes = [8, 128], strides = [1, 1]} : vector<8x512xf32> to vector<8x128xf32>
    %138 = math.tanh %137 : vector<8x128xf32>
    %139 = vector.extract_strided_slice %124 {offsets = [0, 384], sizes = [8, 128], strides = [1, 1]} : vector<8x512xf32> to vector<8x128xf32>
    %140 = arith.negf %139 : vector<8x128xf32>
    %141 = math.exp %140 : vector<8x128xf32>
    %cst_47 = arith.constant 1.000000e+00 : f32
    %142 = vector.broadcast %cst_47 : f32 to vector<8x128xf32>
    %143 = arith.addf %142, %141 : vector<8x128xf32>
    %144 = arith.divf %142, %143 : vector<8x128xf32>
    %145 = arith.mulf %136, %111 : vector<8x128xf32>
    %146 = arith.mulf %130, %138 : vector<8x128xf32>
    %147 = arith.addf %145, %146 : vector<8x128xf32>
    %148 = math.tanh %147 : vector<8x128xf32>
    %149 = arith.mulf %144, %148 : vector<8x128xf32>
    %150 = arith.index_cast %c3_i32 : i32 to index
    %c0_48 = arith.constant 0 : index
    %c0_49 = arith.constant 0 : index
    %151 = vector.load %arg14[%150, %c0_48, %c0_49] : memref<8x8x128xf32, #tpu.memory_space<vmem>>, vector<1x8x128xf32>
    %152 = vector.shape_cast %151 : vector<1x8x128xf32> to vector<8x128xf32>
    %153 = vector.shape_cast %149 : vector<8x128xf32> to vector<1x8x128xf32>
    tpu.vector_store %arg14[%150, %c0_48, %c0_49], %153 {strides = array<i32>} : memref<8x8x128xf32, #tpu.memory_space<vmem>>, vector<1x8x128xf32>,
    %c4_i32 = arith.constant 4 : i32
    %c8_i32_50 = arith.constant 8 : i32
    %154 = arith.muli %c4_i32, %c8_i32_50 : i32
    %155 = tpu.assume_multiple %154, 8 : i32
    %156 = arith.index_cast %155 : i32 to index
    %c0_51 = arith.constant 0 : index
    %157 = vector.load %arg13[%156, %c0_51] : memref<64x512xf32, #tpu.memory_space<vmem>>, vector<8x512xf32>
    %c0_52 = arith.constant 0 : index
    %c0_53 = arith.constant 0 : index
    %158 = vector.load %arg2[%c0_52, %c0_53] : memref<128x512xf32, #tpu.memory_space<vmem>>, vector<128x512xf32>
    %cst_54 = arith.constant dense<0.000000e+00> : vector<8x512xf32>
    %159 = tpu.matmul %149, %158, %cst_54 {dimension_numbers = #tpu.dot_dimension_numbers<[1], [0], [0], [1], [0, 0, 1, 1], [], []>} : vector<8x128xf32>, vector<128x512xf32>, vector<8x512xf32> -> vector<8x512xf32>
    %160 = arith.addf %157, %159 : vector<8x512xf32>
    %161 = vector.extract_strided_slice %160 {offsets = [0, 0], sizes = [8, 128], strides = [1, 1]} : vector<8x512xf32> to vector<8x128xf32>
    %162 = arith.negf %161 : vector<8x128xf32>
    %163 = math.exp %162 : vector<8x128xf32>
    %cst_55 = arith.constant 1.000000e+00 : f32
    %164 = vector.broadcast %cst_55 : f32 to vector<8x128xf32>
    %165 = arith.addf %164, %163 : vector<8x128xf32>
    %166 = arith.divf %164, %165 : vector<8x128xf32>
    %167 = vector.extract_strided_slice %160 {offsets = [0, 128], sizes = [8, 128], strides = [1, 1]} : vector<8x512xf32> to vector<8x128xf32>
    %168 = arith.negf %167 : vector<8x128xf32>
    %169 = math.exp %168 : vector<8x128xf32>
    %cst_56 = arith.constant 1.000000e+00 : f32
    %170 = vector.broadcast %cst_56 : f32 to vector<8x128xf32>
    %171 = arith.addf %170, %169 : vector<8x128xf32>
    %172 = arith.divf %170, %171 : vector<8x128xf32>
    %173 = vector.extract_strided_slice %160 {offsets = [0, 256], sizes = [8, 128], strides = [1, 1]} : vector<8x512xf32> to vector<8x128xf32>
    %174 = math.tanh %173 : vector<8x128xf32>
    %175 = vector.extract_strided_slice %160 {offsets = [0, 384], sizes = [8, 128], strides = [1, 1]} : vector<8x512xf32> to vector<8x128xf32>
    %176 = arith.negf %175 : vector<8x128xf32>
    %177 = math.exp %176 : vector<8x128xf32>
    %cst_57 = arith.constant 1.000000e+00 : f32
    %178 = vector.broadcast %cst_57 : f32 to vector<8x128xf32>
    %179 = arith.addf %178, %177 : vector<8x128xf32>
    %180 = arith.divf %178, %179 : vector<8x128xf32>
    %181 = arith.mulf %172, %147 : vector<8x128xf32>
    %182 = arith.mulf %166, %174 : vector<8x128xf32>
    %183 = arith.addf %181, %182 : vector<8x128xf32>
    %184 = math.tanh %183 : vector<8x128xf32>
    %185 = arith.mulf %180, %184 : vector<8x128xf32>
    %186 = arith.index_cast %c4_i32 : i32 to index
    %c0_58 = arith.constant 0 : index
    %c0_59 = arith.constant 0 : index
    %187 = vector.load %arg14[%186, %c0_58, %c0_59] : memref<8x8x128xf32, #tpu.memory_space<vmem>>, vector<1x8x128xf32>
    %188 = vector.shape_cast %187 : vector<1x8x128xf32> to vector<8x128xf32>
    %189 = vector.shape_cast %185 : vector<8x128xf32> to vector<1x8x128xf32>
    tpu.vector_store %arg14[%186, %c0_58, %c0_59], %189 {strides = array<i32>} : memref<8x8x128xf32, #tpu.memory_space<vmem>>, vector<1x8x128xf32>,
    %c5_i32 = arith.constant 5 : i32
    %c8_i32_60 = arith.constant 8 : i32
    %190 = arith.muli %c5_i32, %c8_i32_60 : i32
    %191 = tpu.assume_multiple %190, 8 : i32
    %192 = arith.index_cast %191 : i32 to index
    %c0_61 = arith.constant 0 : index
    %193 = vector.load %arg13[%192, %c0_61] : memref<64x512xf32, #tpu.memory_space<vmem>>, vector<8x512xf32>
    %c0_62 = arith.constant 0 : index
    %c0_63 = arith.constant 0 : index
    %194 = vector.load %arg2[%c0_62, %c0_63] : memref<128x512xf32, #tpu.memory_space<vmem>>, vector<128x512xf32>
    %cst_64 = arith.constant dense<0.000000e+00> : vector<8x512xf32>
    %195 = tpu.matmul %185, %194, %cst_64 {dimension_numbers = #tpu.dot_dimension_numbers<[1], [0], [0], [1], [0, 0, 1, 1], [], []>} : vector<8x128xf32>, vector<128x512xf32>, vector<8x512xf32> -> vector<8x512xf32>
    %196 = arith.addf %193, %195 : vector<8x512xf32>
    %197 = vector.extract_strided_slice %196 {offsets = [0, 0], sizes = [8, 128], strides = [1, 1]} : vector<8x512xf32> to vector<8x128xf32>
    %198 = arith.negf %197 : vector<8x128xf32>
    %199 = math.exp %198 : vector<8x128xf32>
    %cst_65 = arith.constant 1.000000e+00 : f32
    %200 = vector.broadcast %cst_65 : f32 to vector<8x128xf32>
    %201 = arith.addf %200, %199 : vector<8x128xf32>
    %202 = arith.divf %200, %201 : vector<8x128xf32>
    %203 = vector.extract_strided_slice %196 {offsets = [0, 128], sizes = [8, 128], strides = [1, 1]} : vector<8x512xf32> to vector<8x128xf32>
    %204 = arith.negf %203 : vector<8x128xf32>
    %205 = math.exp %204 : vector<8x128xf32>
    %cst_66 = arith.constant 1.000000e+00 : f32
    %206 = vector.broadcast %cst_66 : f32 to vector<8x128xf32>
    %207 = arith.addf %206, %205 : vector<8x128xf32>
    %208 = arith.divf %206, %207 : vector<8x128xf32>
    %209 = vector.extract_strided_slice %196 {offsets = [0, 256], sizes = [8, 128], strides = [1, 1]} : vector<8x512xf32> to vector<8x128xf32>
    %210 = math.tanh %209 : vector<8x128xf32>
    %211 = vector.extract_strided_slice %196 {offsets = [0, 384], sizes = [8, 128], strides = [1, 1]} : vector<8x512xf32> to vector<8x128xf32>
    %212 = arith.negf %211 : vector<8x128xf32>
    %213 = math.exp %212 : vector<8x128xf32>
    %cst_67 = arith.constant 1.000000e+00 : f32
    %214 = vector.broadcast %cst_67 : f32 to vector<8x128xf32>
    %215 = arith.addf %214, %213 : vector<8x128xf32>
    %216 = arith.divf %214, %215 : vector<8x128xf32>
    %217 = arith.mulf %208, %183 : vector<8x128xf32>
    %218 = arith.mulf %202, %210 : vector<8x128xf32>
    %219 = arith.addf %217, %218 : vector<8x128xf32>
    %220 = math.tanh %219 : vector<8x128xf32>
    %221 = arith.mulf %216, %220 : vector<8x128xf32>
    %222 = arith.index_cast %c5_i32 : i32 to index
    %c0_68 = arith.constant 0 : index
    %c0_69 = arith.constant 0 : index
    %223 = vector.load %arg14[%222, %c0_68, %c0_69] : memref<8x8x128xf32, #tpu.memory_space<vmem>>, vector<1x8x128xf32>
    %224 = vector.shape_cast %223 : vector<1x8x128xf32> to vector<8x128xf32>
    %225 = vector.shape_cast %221 : vector<8x128xf32> to vector<1x8x128xf32>
    tpu.vector_store %arg14[%222, %c0_68, %c0_69], %225 {strides = array<i32>} : memref<8x8x128xf32, #tpu.memory_space<vmem>>, vector<1x8x128xf32>,
    %c6_i32 = arith.constant 6 : i32
    %c8_i32_70 = arith.constant 8 : i32
    %226 = arith.muli %c6_i32, %c8_i32_70 : i32
    %227 = tpu.assume_multiple %226, 8 : i32
    %228 = arith.index_cast %227 : i32 to index
    %c0_71 = arith.constant 0 : index
    %229 = vector.load %arg13[%228, %c0_71] : memref<64x512xf32, #tpu.memory_space<vmem>>, vector<8x512xf32>
    %c0_72 = arith.constant 0 : index
    %c0_73 = arith.constant 0 : index
    %230 = vector.load %arg2[%c0_72, %c0_73] : memref<128x512xf32, #tpu.memory_space<vmem>>, vector<128x512xf32>
    %cst_74 = arith.constant dense<0.000000e+00> : vector<8x512xf32>
    %231 = tpu.matmul %221, %230, %cst_74 {dimension_numbers = #tpu.dot_dimension_numbers<[1], [0], [0], [1], [0, 0, 1, 1], [], []>} : vector<8x128xf32>, vector<128x512xf32>, vector<8x512xf32> -> vector<8x512xf32>
    %232 = arith.addf %229, %231 : vector<8x512xf32>
    %233 = vector.extract_strided_slice %232 {offsets = [0, 0], sizes = [8, 128], strides = [1, 1]} : vector<8x512xf32> to vector<8x128xf32>
    %234 = arith.negf %233 : vector<8x128xf32>
    %235 = math.exp %234 : vector<8x128xf32>
    %cst_75 = arith.constant 1.000000e+00 : f32
    %236 = vector.broadcast %cst_75 : f32 to vector<8x128xf32>
    %237 = arith.addf %236, %235 : vector<8x128xf32>
    %238 = arith.divf %236, %237 : vector<8x128xf32>
    %239 = vector.extract_strided_slice %232 {offsets = [0, 128], sizes = [8, 128], strides = [1, 1]} : vector<8x512xf32> to vector<8x128xf32>
    %240 = arith.negf %239 : vector<8x128xf32>
    %241 = math.exp %240 : vector<8x128xf32>
    %cst_76 = arith.constant 1.000000e+00 : f32
    %242 = vector.broadcast %cst_76 : f32 to vector<8x128xf32>
    %243 = arith.addf %242, %241 : vector<8x128xf32>
    %244 = arith.divf %242, %243 : vector<8x128xf32>
    %245 = vector.extract_strided_slice %232 {offsets = [0, 256], sizes = [8, 128], strides = [1, 1]} : vector<8x512xf32> to vector<8x128xf32>
    %246 = math.tanh %245 : vector<8x128xf32>
    %247 = vector.extract_strided_slice %232 {offsets = [0, 384], sizes = [8, 128], strides = [1, 1]} : vector<8x512xf32> to vector<8x128xf32>
    %248 = arith.negf %247 : vector<8x128xf32>
    %249 = math.exp %248 : vector<8x128xf32>
    %cst_77 = arith.constant 1.000000e+00 : f32
    %250 = vector.broadcast %cst_77 : f32 to vector<8x128xf32>
    %251 = arith.addf %250, %249 : vector<8x128xf32>
    %252 = arith.divf %250, %251 : vector<8x128xf32>
    %253 = arith.mulf %244, %219 : vector<8x128xf32>
    %254 = arith.mulf %238, %246 : vector<8x128xf32>
    %255 = arith.addf %253, %254 : vector<8x128xf32>
    %256 = math.tanh %255 : vector<8x128xf32>
    %257 = arith.mulf %252, %256 : vector<8x128xf32>
    %258 = arith.index_cast %c6_i32 : i32 to index
    %c0_78 = arith.constant 0 : index
    %c0_79 = arith.constant 0 : index
    %259 = vector.load %arg14[%258, %c0_78, %c0_79] : memref<8x8x128xf32, #tpu.memory_space<vmem>>, vector<1x8x128xf32>
    %260 = vector.shape_cast %259 : vector<1x8x128xf32> to vector<8x128xf32>
    %261 = vector.shape_cast %257 : vector<8x128xf32> to vector<1x8x128xf32>
    tpu.vector_store %arg14[%258, %c0_78, %c0_79], %261 {strides = array<i32>} : memref<8x8x128xf32, #tpu.memory_space<vmem>>, vector<1x8x128xf32>,
    %c7_i32 = arith.constant 7 : i32
    %c8_i32_80 = arith.constant 8 : i32
    %262 = arith.muli %c7_i32, %c8_i32_80 : i32
    %263 = tpu.assume_multiple %262, 8 : i32
    %264 = arith.index_cast %263 : i32 to index
    %c0_81 = arith.constant 0 : index
    %265 = vector.load %arg13[%264, %c0_81] : memref<64x512xf32, #tpu.memory_space<vmem>>, vector<8x512xf32>
    %c0_82 = arith.constant 0 : index
    %c0_83 = arith.constant 0 : index
    %266 = vector.load %arg2[%c0_82, %c0_83] : memref<128x512xf32, #tpu.memory_space<vmem>>, vector<128x512xf32>
    %cst_84 = arith.constant dense<0.000000e+00> : vector<8x512xf32>
    %267 = tpu.matmul %257, %266, %cst_84 {dimension_numbers = #tpu.dot_dimension_numbers<[1], [0], [0], [1], [0, 0, 1, 1], [], []>} : vector<8x128xf32>, vector<128x512xf32>, vector<8x512xf32> -> vector<8x512xf32>
    %268 = arith.addf %265, %267 : vector<8x512xf32>
    %269 = vector.extract_strided_slice %268 {offsets = [0, 0], sizes = [8, 128], strides = [1, 1]} : vector<8x512xf32> to vector<8x128xf32>
    %270 = arith.negf %269 : vector<8x128xf32>
    %271 = math.exp %270 : vector<8x128xf32>
    %cst_85 = arith.constant 1.000000e+00 : f32
    %272 = vector.broadcast %cst_85 : f32 to vector<8x128xf32>
    %273 = arith.addf %272, %271 : vector<8x128xf32>
    %274 = arith.divf %272, %273 : vector<8x128xf32>
    %275 = vector.extract_strided_slice %268 {offsets = [0, 128], sizes = [8, 128], strides = [1, 1]} : vector<8x512xf32> to vector<8x128xf32>
    %276 = arith.negf %275 : vector<8x128xf32>
    %277 = math.exp %276 : vector<8x128xf32>
    %cst_86 = arith.constant 1.000000e+00 : f32
    %278 = vector.broadcast %cst_86 : f32 to vector<8x128xf32>
    %279 = arith.addf %278, %277 : vector<8x128xf32>
    %280 = arith.divf %278, %279 : vector<8x128xf32>
    %281 = vector.extract_strided_slice %268 {offsets = [0, 256], sizes = [8, 128], strides = [1, 1]} : vector<8x512xf32> to vector<8x128xf32>
    %282 = math.tanh %281 : vector<8x128xf32>
    %283 = vector.extract_strided_slice %268 {offsets = [0, 384], sizes = [8, 128], strides = [1, 1]} : vector<8x512xf32> to vector<8x128xf32>
    %284 = arith.negf %283 : vector<8x128xf32>
    %285 = math.exp %284 : vector<8x128xf32>
    %cst_87 = arith.constant 1.000000e+00 : f32
    %286 = vector.broadcast %cst_87 : f32 to vector<8x128xf32>
    %287 = arith.addf %286, %285 : vector<8x128xf32>
    %288 = arith.divf %286, %287 : vector<8x128xf32>
    %289 = arith.mulf %280, %255 : vector<8x128xf32>
    %290 = arith.mulf %274, %282 : vector<8x128xf32>
    %291 = arith.addf %289, %290 : vector<8x128xf32>
    %292 = math.tanh %291 : vector<8x128xf32>
    %293 = arith.mulf %288, %292 : vector<8x128xf32>
    %294 = arith.index_cast %c7_i32 : i32 to index
    %c0_88 = arith.constant 0 : index
    %c0_89 = arith.constant 0 : index
    %295 = vector.load %arg14[%294, %c0_88, %c0_89] : memref<8x8x128xf32, #tpu.memory_space<vmem>>, vector<1x8x128xf32>
    %296 = vector.shape_cast %295 : vector<1x8x128xf32> to vector<8x128xf32>
    %297 = vector.shape_cast %293 : vector<8x128xf32> to vector<1x8x128xf32>
    tpu.vector_store %arg14[%294, %c0_88, %c0_89], %297 {strides = array<i32>} : memref<8x8x128xf32, #tpu.memory_space<vmem>>, vector<1x8x128xf32>,
    %c8_i32_90 = arith.constant 8 : i32
    %298 = tpu.iota {dimensions = array<i32: 1>} : vector<8x128xi32>
    %cst_91 = arith.constant 0xFF800000 : f32
    %299 = vector.broadcast %cst_91 : f32 to vector<8x128xf32>
    %c0_92 = arith.constant 0 : index
    %c0_93 = arith.constant 0 : index
    %c0_94 = arith.constant 0 : index
    %300 = vector.load %arg14[%c0_92, %c0_93, %c0_94] : memref<8x8x128xf32, #tpu.memory_space<vmem>>, vector<1x8x128xf32>
    %301 = vector.shape_cast %300 : vector<1x8x128xf32> to vector<8x128xf32>
    %302 = vector.broadcast %7 : vector<1x128xf32> to vector<8x128xf32>
    %303 = arith.mulf %301, %302 : vector<8x128xf32>
    %cst_95 = arith.constant dense<0.000000e+00> : vector<8xf32>
    %304 = vector.multi_reduction <add>, %303, %cst_95 [1] : vector<8x128xf32> to vector<8xf32>
    %305 = vector.shape_cast %304 : vector<8xf32> to vector<8x1xf32>
    %c0_i32_96 = arith.constant 0 : i32
    %306 = vector.broadcast %c0_i32_96 : i32 to vector<8x128xi32>
    %307 = arith.cmpi eq, %298, %306 : vector<8x128xi32>
    %308 = vector.shape_cast %305 : vector<8x1xf32> to vector<8x1xf32>
    %309 = vector.broadcast %308 : vector<8x1xf32> to vector<8x128xf32>
    %310 = arith.select %307, %309, %299 : vector<8x128xi1>, vector<8x128xf32>
    %c1 = arith.constant 1 : index
    %c0_97 = arith.constant 0 : index
    %c0_98 = arith.constant 0 : index
    %311 = vector.load %arg14[%c1, %c0_97, %c0_98] : memref<8x8x128xf32, #tpu.memory_space<vmem>>, vector<1x8x128xf32>
    %312 = vector.shape_cast %311 : vector<1x8x128xf32> to vector<8x128xf32>
    %313 = vector.broadcast %7 : vector<1x128xf32> to vector<8x128xf32>
    %314 = arith.mulf %312, %313 : vector<8x128xf32>
    %cst_99 = arith.constant dense<0.000000e+00> : vector<8xf32>
    %315 = vector.multi_reduction <add>, %314, %cst_99 [1] : vector<8x128xf32> to vector<8xf32>
    %316 = vector.shape_cast %315 : vector<8xf32> to vector<8x1xf32>
    %c1_i32_100 = arith.constant 1 : i32
    %317 = vector.broadcast %c1_i32_100 : i32 to vector<8x128xi32>
    %318 = arith.cmpi eq, %298, %317 : vector<8x128xi32>
    %319 = vector.shape_cast %316 : vector<8x1xf32> to vector<8x1xf32>
    %320 = vector.broadcast %319 : vector<8x1xf32> to vector<8x128xf32>
    %321 = arith.select %318, %320, %310 : vector<8x128xi1>, vector<8x128xf32>
    %c2 = arith.constant 2 : index
    %c0_101 = arith.constant 0 : index
    %c0_102 = arith.constant 0 : index
    %322 = vector.load %arg14[%c2, %c0_101, %c0_102] : memref<8x8x128xf32, #tpu.memory_space<vmem>>, vector<1x8x128xf32>
    %323 = vector.shape_cast %322 : vector<1x8x128xf32> to vector<8x128xf32>
    %324 = vector.broadcast %7 : vector<1x128xf32> to vector<8x128xf32>
    %325 = arith.mulf %323, %324 : vector<8x128xf32>
    %cst_103 = arith.constant dense<0.000000e+00> : vector<8xf32>
    %326 = vector.multi_reduction <add>, %325, %cst_103 [1] : vector<8x128xf32> to vector<8xf32>
    %327 = vector.shape_cast %326 : vector<8xf32> to vector<8x1xf32>
    %c2_i32_104 = arith.constant 2 : i32
    %328 = vector.broadcast %c2_i32_104 : i32 to vector<8x128xi32>
    %329 = arith.cmpi eq, %298, %328 : vector<8x128xi32>
    %330 = vector.shape_cast %327 : vector<8x1xf32> to vector<8x1xf32>
    %331 = vector.broadcast %330 : vector<8x1xf32> to vector<8x128xf32>
    %332 = arith.select %329, %331, %321 : vector<8x128xi1>, vector<8x128xf32>
    %c3 = arith.constant 3 : index
    %c0_105 = arith.constant 0 : index
    %c0_106 = arith.constant 0 : index
    %333 = vector.load %arg14[%c3, %c0_105, %c0_106] : memref<8x8x128xf32, #tpu.memory_space<vmem>>, vector<1x8x128xf32>
    %334 = vector.shape_cast %333 : vector<1x8x128xf32> to vector<8x128xf32>
    %335 = vector.broadcast %7 : vector<1x128xf32> to vector<8x128xf32>
    %336 = arith.mulf %334, %335 : vector<8x128xf32>
    %cst_107 = arith.constant dense<0.000000e+00> : vector<8xf32>
    %337 = vector.multi_reduction <add>, %336, %cst_107 [1] : vector<8x128xf32> to vector<8xf32>
    %338 = vector.shape_cast %337 : vector<8xf32> to vector<8x1xf32>
    %c3_i32_108 = arith.constant 3 : i32
    %339 = vector.broadcast %c3_i32_108 : i32 to vector<8x128xi32>
    %340 = arith.cmpi eq, %298, %339 : vector<8x128xi32>
    %341 = vector.shape_cast %338 : vector<8x1xf32> to vector<8x1xf32>
    %342 = vector.broadcast %341 : vector<8x1xf32> to vector<8x128xf32>
    %343 = arith.select %340, %342, %332 : vector<8x128xi1>, vector<8x128xf32>
    %c4 = arith.constant 4 : index
    %c0_109 = arith.constant 0 : index
    %c0_110 = arith.constant 0 : index
    %344 = vector.load %arg14[%c4, %c0_109, %c0_110] : memref<8x8x128xf32, #tpu.memory_space<vmem>>, vector<1x8x128xf32>
    %345 = vector.shape_cast %344 : vector<1x8x128xf32> to vector<8x128xf32>
    %346 = vector.broadcast %7 : vector<1x128xf32> to vector<8x128xf32>
    %347 = arith.mulf %345, %346 : vector<8x128xf32>
    %cst_111 = arith.constant dense<0.000000e+00> : vector<8xf32>
    %348 = vector.multi_reduction <add>, %347, %cst_111 [1] : vector<8x128xf32> to vector<8xf32>
    %349 = vector.shape_cast %348 : vector<8xf32> to vector<8x1xf32>
    %c4_i32_112 = arith.constant 4 : i32
    %350 = vector.broadcast %c4_i32_112 : i32 to vector<8x128xi32>
    %351 = arith.cmpi eq, %298, %350 : vector<8x128xi32>
    %352 = vector.shape_cast %349 : vector<8x1xf32> to vector<8x1xf32>
    %353 = vector.broadcast %352 : vector<8x1xf32> to vector<8x128xf32>
    %354 = arith.select %351, %353, %343 : vector<8x128xi1>, vector<8x128xf32>
    %c5 = arith.constant 5 : index
    %c0_113 = arith.constant 0 : index
    %c0_114 = arith.constant 0 : index
    %355 = vector.load %arg14[%c5, %c0_113, %c0_114] : memref<8x8x128xf32, #tpu.memory_space<vmem>>, vector<1x8x128xf32>
    %356 = vector.shape_cast %355 : vector<1x8x128xf32> to vector<8x128xf32>
    %357 = vector.broadcast %7 : vector<1x128xf32> to vector<8x128xf32>
    %358 = arith.mulf %356, %357 : vector<8x128xf32>
    %cst_115 = arith.constant dense<0.000000e+00> : vector<8xf32>
    %359 = vector.multi_reduction <add>, %358, %cst_115 [1] : vector<8x128xf32> to vector<8xf32>
    %360 = vector.shape_cast %359 : vector<8xf32> to vector<8x1xf32>
    %c5_i32_116 = arith.constant 5 : i32
    %361 = vector.broadcast %c5_i32_116 : i32 to vector<8x128xi32>
    %362 = arith.cmpi eq, %298, %361 : vector<8x128xi32>
    %363 = vector.shape_cast %360 : vector<8x1xf32> to vector<8x1xf32>
    %364 = vector.broadcast %363 : vector<8x1xf32> to vector<8x128xf32>
    %365 = arith.select %362, %364, %354 : vector<8x128xi1>, vector<8x128xf32>
    %c6 = arith.constant 6 : index
    %c0_117 = arith.constant 0 : index
    %c0_118 = arith.constant 0 : index
    %366 = vector.load %arg14[%c6, %c0_117, %c0_118] : memref<8x8x128xf32, #tpu.memory_space<vmem>>, vector<1x8x128xf32>
    %367 = vector.shape_cast %366 : vector<1x8x128xf32> to vector<8x128xf32>
    %368 = vector.broadcast %7 : vector<1x128xf32> to vector<8x128xf32>
    %369 = arith.mulf %367, %368 : vector<8x128xf32>
    %cst_119 = arith.constant dense<0.000000e+00> : vector<8xf32>
    %370 = vector.multi_reduction <add>, %369, %cst_119 [1] : vector<8x128xf32> to vector<8xf32>
    %371 = vector.shape_cast %370 : vector<8xf32> to vector<8x1xf32>
    %c6_i32_120 = arith.constant 6 : i32
    %372 = vector.broadcast %c6_i32_120 : i32 to vector<8x128xi32>
    %373 = arith.cmpi eq, %298, %372 : vector<8x128xi32>
    %374 = vector.shape_cast %371 : vector<8x1xf32> to vector<8x1xf32>
    %375 = vector.broadcast %374 : vector<8x1xf32> to vector<8x128xf32>
    %376 = arith.select %373, %375, %365 : vector<8x128xi1>, vector<8x128xf32>
    %c7 = arith.constant 7 : index
    %c0_121 = arith.constant 0 : index
    %c0_122 = arith.constant 0 : index
    %377 = vector.load %arg14[%c7, %c0_121, %c0_122] : memref<8x8x128xf32, #tpu.memory_space<vmem>>, vector<1x8x128xf32>
    %378 = vector.shape_cast %377 : vector<1x8x128xf32> to vector<8x128xf32>
    %379 = vector.broadcast %7 : vector<1x128xf32> to vector<8x128xf32>
    %380 = arith.mulf %378, %379 : vector<8x128xf32>
    %cst_123 = arith.constant dense<0.000000e+00> : vector<8xf32>
    %381 = vector.multi_reduction <add>, %380, %cst_123 [1] : vector<8x128xf32> to vector<8xf32>
    %382 = vector.shape_cast %381 : vector<8xf32> to vector<8x1xf32>
    %c7_i32_124 = arith.constant 7 : i32
    %383 = vector.broadcast %c7_i32_124 : i32 to vector<8x128xi32>
    %384 = arith.cmpi eq, %298, %383 : vector<8x128xi32>
    %385 = vector.shape_cast %382 : vector<8x1xf32> to vector<8x1xf32>
    %386 = vector.broadcast %385 : vector<8x1xf32> to vector<8x128xf32>
    %387 = arith.select %384, %386, %376 : vector<8x128xi1>, vector<8x128xf32>
    %cst_125 = arith.constant dense<0xFF800000> : vector<8xf32>
    %388 = vector.multi_reduction <maximumf>, %387, %cst_125 [1] : vector<8x128xf32> to vector<8xf32>
    %389 = vector.shape_cast %388 : vector<8xf32> to vector<8x1xf32>
    %390 = vector.broadcast %389 : vector<8x1xf32> to vector<8x128xf32>
    %391 = arith.subf %387, %390 : vector<8x128xf32>
    %392 = math.exp %391 : vector<8x128xf32>
    %cst_126 = arith.constant dense<0.000000e+00> : vector<8xf32>
    %393 = vector.multi_reduction <add>, %392, %cst_126 [1] : vector<8x128xf32> to vector<8xf32>
    %394 = vector.shape_cast %393 : vector<8xf32> to vector<8x1xf32>
    %395 = tpu.reciprocal %394 : vector<8x1xf32> -> vector<8x1xf32>
    %396 = vector.broadcast %395 : vector<8x1xf32> to vector<8x128xf32>
    %397 = arith.mulf %392, %396 : vector<8x128xf32>
    %c0_127 = arith.constant 0 : index
    %c0_128 = arith.constant 0 : index
    %398 = vector.load %arg12[%c0_127, %c0_128] : memref<8x128xf32, #tpu.memory_space<vmem>>, vector<8x128xf32>
    tpu.vector_store %arg12[%c0_127, %c0_128], %397 {strides = array<i32>} : memref<8x128xf32, #tpu.memory_space<vmem>>, vector<8x128xf32>,
    %cst_129 = arith.constant 0.000000e+00 : f32
    %399 = vector.broadcast %cst_129 : f32 to vector<8x128xf32>
    %400 = vector.extract_strided_slice %397 {offsets = [0, 0], sizes = [8, 1], strides = [1, 1]} : vector<8x128xf32> to vector<8x1xf32>
    %c0_130 = arith.constant 0 : index
    %c0_131 = arith.constant 0 : index
    %c0_132 = arith.constant 0 : index
    %401 = vector.load %arg14[%c0_130, %c0_131, %c0_132] : memref<8x8x128xf32, #tpu.memory_space<vmem>>, vector<1x8x128xf32>
    %402 = vector.shape_cast %401 : vector<1x8x128xf32> to vector<8x128xf32>
    %403 = vector.broadcast %400 : vector<8x1xf32> to vector<8x128xf32>
    %404 = arith.mulf %403, %402 : vector<8x128xf32>
    %405 = arith.addf %399, %404 : vector<8x128xf32>
    %406 = vector.extract_strided_slice %397 {offsets = [0, 1], sizes = [8, 1], strides = [1, 1]} : vector<8x128xf32> to vector<8x1xf32>
    %c1_133 = arith.constant 1 : index
    %c0_134 = arith.constant 0 : index
    %c0_135 = arith.constant 0 : index
    %407 = vector.load %arg14[%c1_133, %c0_134, %c0_135] : memref<8x8x128xf32, #tpu.memory_space<vmem>>, vector<1x8x128xf32>
    %408 = vector.shape_cast %407 : vector<1x8x128xf32> to vector<8x128xf32>
    %409 = vector.broadcast %406 : vector<8x1xf32> to vector<8x128xf32>
    %410 = arith.mulf %409, %408 : vector<8x128xf32>
    %411 = arith.addf %405, %410 : vector<8x128xf32>
    %412 = vector.extract_strided_slice %397 {offsets = [0, 2], sizes = [8, 1], strides = [1, 1]} : vector<8x128xf32> to vector<8x1xf32>
    %c2_136 = arith.constant 2 : index
    %c0_137 = arith.constant 0 : index
    %c0_138 = arith.constant 0 : index
    %413 = vector.load %arg14[%c2_136, %c0_137, %c0_138] : memref<8x8x128xf32, #tpu.memory_space<vmem>>, vector<1x8x128xf32>
    %414 = vector.shape_cast %413 : vector<1x8x128xf32> to vector<8x128xf32>
    %415 = vector.broadcast %412 : vector<8x1xf32> to vector<8x128xf32>
    %416 = arith.mulf %415, %414 : vector<8x128xf32>
    %417 = arith.addf %411, %416 : vector<8x128xf32>
    %418 = vector.extract_strided_slice %397 {offsets = [0, 3], sizes = [8, 1], strides = [1, 1]} : vector<8x128xf32> to vector<8x1xf32>
    %c3_139 = arith.constant 3 : index
    %c0_140 = arith.constant 0 : index
    %c0_141 = arith.constant 0 : index
    %419 = vector.load %arg14[%c3_139, %c0_140, %c0_141] : memref<8x8x128xf32, #tpu.memory_space<vmem>>, vector<1x8x128xf32>
    %420 = vector.shape_cast %419 : vector<1x8x128xf32> to vector<8x128xf32>
    %421 = vector.broadcast %418 : vector<8x1xf32> to vector<8x128xf32>
    %422 = arith.mulf %421, %420 : vector<8x128xf32>
    %423 = arith.addf %417, %422 : vector<8x128xf32>
    %424 = vector.extract_strided_slice %397 {offsets = [0, 4], sizes = [8, 1], strides = [1, 1]} : vector<8x128xf32> to vector<8x1xf32>
    %c4_142 = arith.constant 4 : index
    %c0_143 = arith.constant 0 : index
    %c0_144 = arith.constant 0 : index
    %425 = vector.load %arg14[%c4_142, %c0_143, %c0_144] : memref<8x8x128xf32, #tpu.memory_space<vmem>>, vector<1x8x128xf32>
    %426 = vector.shape_cast %425 : vector<1x8x128xf32> to vector<8x128xf32>
    %427 = vector.broadcast %424 : vector<8x1xf32> to vector<8x128xf32>
    %428 = arith.mulf %427, %426 : vector<8x128xf32>
    %429 = arith.addf %423, %428 : vector<8x128xf32>
    %430 = vector.extract_strided_slice %397 {offsets = [0, 5], sizes = [8, 1], strides = [1, 1]} : vector<8x128xf32> to vector<8x1xf32>
    %c5_145 = arith.constant 5 : index
    %c0_146 = arith.constant 0 : index
    %c0_147 = arith.constant 0 : index
    %431 = vector.load %arg14[%c5_145, %c0_146, %c0_147] : memref<8x8x128xf32, #tpu.memory_space<vmem>>, vector<1x8x128xf32>
    %432 = vector.shape_cast %431 : vector<1x8x128xf32> to vector<8x128xf32>
    %433 = vector.broadcast %430 : vector<8x1xf32> to vector<8x128xf32>
    %434 = arith.mulf %433, %432 : vector<8x128xf32>
    %435 = arith.addf %429, %434 : vector<8x128xf32>
    %436 = vector.extract_strided_slice %397 {offsets = [0, 6], sizes = [8, 1], strides = [1, 1]} : vector<8x128xf32> to vector<8x1xf32>
    %c6_148 = arith.constant 6 : index
    %c0_149 = arith.constant 0 : index
    %c0_150 = arith.constant 0 : index
    %437 = vector.load %arg14[%c6_148, %c0_149, %c0_150] : memref<8x8x128xf32, #tpu.memory_space<vmem>>, vector<1x8x128xf32>
    %438 = vector.shape_cast %437 : vector<1x8x128xf32> to vector<8x128xf32>
    %439 = vector.broadcast %436 : vector<8x1xf32> to vector<8x128xf32>
    %440 = arith.mulf %439, %438 : vector<8x128xf32>
    %441 = arith.addf %435, %440 : vector<8x128xf32>
    %442 = vector.extract_strided_slice %397 {offsets = [0, 7], sizes = [8, 1], strides = [1, 1]} : vector<8x128xf32> to vector<8x1xf32>
    %c7_151 = arith.constant 7 : index
    %c0_152 = arith.constant 0 : index
    %c0_153 = arith.constant 0 : index
    %443 = vector.load %arg14[%c7_151, %c0_152, %c0_153] : memref<8x8x128xf32, #tpu.memory_space<vmem>>, vector<1x8x128xf32>
    %444 = vector.shape_cast %443 : vector<1x8x128xf32> to vector<8x128xf32>
    %445 = vector.broadcast %442 : vector<8x1xf32> to vector<8x128xf32>
    %446 = arith.mulf %445, %444 : vector<8x128xf32>
    %447 = arith.addf %441, %446 : vector<8x128xf32>
    %c56 = arith.constant 56 : index
    %c0_154 = arith.constant 0 : index
    %448 = vector.load %arg0[%c56, %c0_154] : memref<64x4xf32, #tpu.memory_space<vmem>>, vector<8x4xf32>
    %c0_155 = arith.constant 0 : index
    %c0_156 = arith.constant 0 : index
    %449 = vector.load %arg5[%c0_155, %c0_156] : memref<4x128xf32, #tpu.memory_space<vmem>>, vector<4x128xf32>
    %cst_157 = arith.constant dense<0.000000e+00> : vector<8x128xf32>
    %450 = tpu.matmul %448, %449, %cst_157 {dimension_numbers = #tpu.dot_dimension_numbers<[1], [0], [0], [1], [0, 0, 1, 1], [], []>} : vector<8x4xf32>, vector<4x128xf32>, vector<8x128xf32> -> vector<8x128xf32>
    %c0_158 = arith.constant 0 : index
    %c0_159 = arith.constant 0 : index
    %451 = vector.load %arg6[%c0_158, %c0_159] : memref<1x128xf32, #tpu.memory_space<vmem>>, vector<1x128xf32>
    %452 = vector.broadcast %451 : vector<1x128xf32> to vector<8x128xf32>
    %453 = arith.addf %450, %452 : vector<8x128xf32>
    %454 = arith.addf %447, %453 : vector<8x128xf32>
    %455 = tpu.iota {dimensions = array<i32: 1>} : vector<1x128xi32>
    %c32_i32 = arith.constant 32 : i32
    %456 = vector.broadcast %c32_i32 : i32 to vector<1x128xi32>
    %457 = arith.cmpi slt, %455, %456 : vector<1x128xi32>
    %458 = arith.extui %457 : vector<1x128xi1> to vector<1x128xi32>
    %459 = arith.sitofp %458 : vector<1x128xi32> to vector<1x128xf32>
    %cst_160 = arith.constant dense<0.000000e+00> : vector<8xf32>
    %460 = vector.multi_reduction <add>, %454, %cst_160 [1] : vector<8x128xf32> to vector<8xf32>
    %461 = vector.shape_cast %460 : vector<8xf32> to vector<8x1xf32>
    %cst_161 = arith.constant 3.125000e-02 : f32
    %462 = vector.broadcast %cst_161 : f32 to vector<8x1xf32>
    %463 = arith.mulf %461, %462 : vector<8x1xf32>
    %464 = vector.broadcast %463 : vector<8x1xf32> to vector<8x128xf32>
    %465 = arith.subf %454, %464 : vector<8x128xf32>
    %466 = vector.broadcast %459 : vector<1x128xf32> to vector<8x128xf32>
    %467 = arith.mulf %465, %466 : vector<8x128xf32>
    %468 = arith.mulf %467, %467 : vector<8x128xf32>
    %cst_162 = arith.constant dense<0.000000e+00> : vector<8xf32>
    %469 = vector.multi_reduction <add>, %468, %cst_162 [1] : vector<8x128xf32> to vector<8xf32>
    %470 = vector.shape_cast %469 : vector<8xf32> to vector<8x1xf32>
    %cst_163 = arith.constant 3.125000e-02 : f32
    %471 = vector.broadcast %cst_163 : f32 to vector<8x1xf32>
    %472 = arith.mulf %470, %471 : vector<8x1xf32>
    %cst_164 = arith.constant 9.99999974E-6 : f32
    %473 = vector.broadcast %cst_164 : f32 to vector<8x1xf32>
    %474 = arith.addf %472, %473 : vector<8x1xf32>
    %475 = math.rsqrt %474 : vector<8x1xf32>
    %476 = vector.broadcast %475 : vector<8x1xf32> to vector<8x128xf32>
    %477 = arith.mulf %467, %476 : vector<8x128xf32>
    %c0_165 = arith.constant 0 : index
    %c0_166 = arith.constant 0 : index
    %478 = vector.load %arg7[%c0_165, %c0_166] : memref<1x128xf32, #tpu.memory_space<vmem>>, vector<1x128xf32>
    %479 = vector.broadcast %478 : vector<1x128xf32> to vector<8x128xf32>
    %480 = arith.mulf %477, %479 : vector<8x128xf32>
    %c0_167 = arith.constant 0 : index
    %c0_168 = arith.constant 0 : index
    %481 = vector.load %arg8[%c0_167, %c0_168] : memref<1x128xf32, #tpu.memory_space<vmem>>, vector<1x128xf32>
    %482 = vector.broadcast %481 : vector<1x128xf32> to vector<8x128xf32>
    %483 = arith.addf %480, %482 : vector<8x128xf32>
    %c0_169 = arith.constant 0 : index
    %c0_170 = arith.constant 0 : index
    %484 = vector.load %arg9[%c0_169, %c0_170] : memref<128x128xf32, #tpu.memory_space<vmem>>, vector<128x128xf32>
    %cst_171 = arith.constant dense<0.000000e+00> : vector<8x128xf32>
    %485 = tpu.matmul %483, %484, %cst_171 {dimension_numbers = #tpu.dot_dimension_numbers<[1], [0], [0], [1], [0, 0, 1, 1], [], []>} : vector<8x128xf32>, vector<128x128xf32>, vector<8x128xf32> -> vector<8x128xf32>
    %c0_172 = arith.constant 0 : index
    %c0_173 = arith.constant 0 : index
    %486 = vector.load %arg10[%c0_172, %c0_173] : memref<1x128xf32, #tpu.memory_space<vmem>>, vector<1x128xf32>
    %487 = vector.broadcast %486 : vector<1x128xf32> to vector<8x128xf32>
    %488 = arith.addf %485, %487 : vector<8x128xf32>
    %c0_174 = arith.constant 0 : index
    %c0_175 = arith.constant 0 : index
    %489 = vector.load %arg11[%c0_174, %c0_175] : memref<8x128xf32, #tpu.memory_space<vmem>>, vector<8x128xf32>
    tpu.vector_store %arg11[%c0_174, %c0_175], %488 {strides = array<i32>} : memref<8x128xf32, #tpu.memory_space<vmem>>, vector<8x128xf32>,
    return
  }
}

</mosaic_0001>

<llo_original>
// kernel: tpu_custom_call.1
$region0: #{tpu_custom_call.1}
  #allocation0 [shape = 'u32[]', space=smem, size = 0x4, offset = 0x4, fixed_abs, tag = 'smem constant byte address 0x4 - core index']
  #allocation1 [shape = 'u32[72,128]{1,0:T(1,128)}', space=vmem, size = 0x9000, scoped, tag = 'internal scratch']
  #allocation2 [shape = 'f32[64,512]{1,0:T(8,128)}', space=vmem, size = 0x20000, scoped, tag = 'scratch operand']
  #allocation3 [shape = 'f32[8,8,128]{2,1,0:T(8,128)}', space=vmem, size = 0x8000, scoped, tag = 'scratch operand']
  %s0 = inlined_call_operand.vmem [shape: f32[64,4], index: 0, kind: input, shape index: {}]
  %s1 = inlined_call_operand.vmem [shape: f32[4,512], index: 1, kind: input, shape index: {}]
  %s2 = inlined_call_operand.hbm [shape: f32[128,512], index: 2, kind: input, shape index: {}]
  %s3 = inlined_call_operand.vmem [shape: f32[1,512], index: 3, kind: input, shape index: {}]
  %s4 = inlined_call_operand.vmem [shape: f32[1,128], index: 4, kind: input, shape index: {}]
  %s5 = inlined_call_operand.vmem [shape: f32[4,128], index: 5, kind: input, shape index: {}]
  %s6 = inlined_call_operand.vmem [shape: f32[1,128], index: 6, kind: input, shape index: {}]
  %s7 = inlined_call_operand.vmem [shape: f32[1,128], index: 7, kind: input, shape index: {}]
  %s8 = inlined_call_operand.vmem [shape: f32[1,128], index: 8, kind: input, shape index: {}]
  %s9 = inlined_call_operand.hbm [shape: f32[128,128], index: 9, kind: input, shape index: {}]
  %s10 = inlined_call_operand.vmem [shape: f32[1,128], index: 10, kind: input, shape index: {}]
  %s11 = inlined_call_operand.hbm [shape: f32[8,128], index: 11, kind: output, shape index: {0}]
  %s12 = inlined_call_operand.hbm [shape: f32[8,128], index: 12, kind: output, shape index: {1}]
  %13 = xla_tuple %s11, %s12
  %s14 = sld [smem:[#allocation0]]
  $region70: #{tpu_custom_call.1} parent=0
    _
  %s16 = ssub.s32 1, %s14
  %s17 = scalar_select 0, %s16, %s14
  $region1: #{tpu_custom_call.1} parent=0
    #allocation4 [shape = 'u8[262144]{0}', space=vmem, size = 0x40000, scoped, tag = 'input window, operand 2, single buffered']
    #allocation5 [shape = 's32[1]{0}', space=sflag, size = 0x4, scoped, tag = 'scoped memory for tpu_custom_call.1']
    #allocation6 [shape = 's32[1]{0}', space=sflag, size = 0x4, scoped, tag = 'scoped memory for tpu_custom_call.1']
    #allocation7 [shape = 'u8[65536]{0}', space=vmem, size = 0x10000, scoped, tag = 'input window, operand 9, single buffered']
    #allocation8 [shape = 's32[1]{0}', space=sflag, size = 0x4, scoped, tag = 'scoped memory for tpu_custom_call.1']
    #allocation9 [shape = 'u8[4096]{0}', space=vmem, size = 0x1000, scoped, tag = 'output window, operand 0, single buffered']
    #allocation10 [shape = 'u8[4096]{0}', space=vmem, size = 0x1000, scoped, tag = 'output window, operand 1, single buffered']
    #allocation11 [shape = 's32[1]{0}', space=sflag, size = 0x4, scoped, tag = 'scoped memory for tpu_custom_call.1']
    %18 = vsyncpa [#allocation5], 0
    %19 = vsyncpa [#allocation8], 0
    %20 = vsyncpa [#allocation6], 0
    %21 = vsyncpa [#allocation11], 0
    // Predicated region
    $region2: #{tpu_custom_call.1} parent=1 // pred_check
      _
    $region3: #{tpu_custom_call.1} parent=1 // pred_check_branch
      %23 = sbr.rel (0) target = $region5
    $region4: #{tpu_custom_call.1} parent=1 // pred_region
      _
    $region5: #{tpu_custom_call.1} parent=1 // pred_fallthru
      _
    // Predicated region
    $region6: #{tpu_custom_call.1} parent=1 // pred_check
      _
    $region7: #{tpu_custom_call.1} parent=1 // pred_check_branch
      %25 = sbr.rel (0) target = $region9
    $region8: #{tpu_custom_call.1} parent=1 // pred_region
      _
    $region9: #{tpu_custom_call.1} parent=1 // pred_fallthru
      _
    // Predicated region
    $region10: #{tpu_custom_call.1} parent=1 // pred_check
      _
    $region11: #{tpu_custom_call.1} parent=1 // pred_check_branch
      %27 = sbr.rel (0) target = $region13
    $region12: #{tpu_custom_call.1} parent=1 // pred_region
      %29 = vsyncadd [#allocation5], 0
      %s30 = sshll.u32 %s2, 4
      %s31 = int_to_ptr.hbm [resolvable:$true] %s30
      %s32 = sshll.u32 [#allocation4], 4
      %s33 = int_to_ptr.vmem [resolvable:$true] %s32
      %38 = dma.hbm_to_vmem [thread:$0]  %s31, 8192, %s33, [#allocation5], 512, 512, 32
    $region13: #{tpu_custom_call.1} parent=1 // pred_fallthru
      _
    // Predicated region
    $region14: #{tpu_custom_call.1} parent=1 // pred_check
      _
    $region15: #{tpu_custom_call.1} parent=1 // pred_check_branch
      %40 = sbr.rel (0) target = $region17
    $region16: #{tpu_custom_call.1} parent=1 // pred_region
      _
    $region17: #{tpu_custom_call.1} parent=1 // pred_fallthru
      _
    // Predicated region
    $region18: #{tpu_custom_call.1} parent=1 // pred_check
      _
    $region19: #{tpu_custom_call.1} parent=1 // pred_check_branch
      %42 = sbr.rel (0) target = $region21
    $region20: #{tpu_custom_call.1} parent=1 // pred_region
      _
    $region21: #{tpu_custom_call.1} parent=1 // pred_fallthru
      _
    // Predicated region
    $region22: #{tpu_custom_call.1} parent=1 // pred_check
      _
    $region23: #{tpu_custom_call.1} parent=1 // pred_check_branch
      %44 = sbr.rel (0) target = $region25
    $region24: #{tpu_custom_call.1} parent=1 // pred_region
      _
    $region25: #{tpu_custom_call.1} parent=1 // pred_fallthru
      _
    // Predicated region
    $region26: #{tpu_custom_call.1} parent=1 // pred_check
      _
    $region27: #{tpu_custom_call.1} parent=1 // pred_check_branch
      %46 = sbr.rel (0) target = $region29
    $region28: #{tpu_custom_call.1} parent=1 // pred_region
      _
    $region29: #{tpu_custom_call.1} parent=1 // pred_fallthru
      _
    // Predicated region
    $region30: #{tpu_custom_call.1} parent=1 // pred_check
      _
    $region31: #{tpu_custom_call.1} parent=1 // pred_check_branch
      %48 = sbr.rel (0) target = $region33
    $region32: #{tpu_custom_call.1} parent=1 // pred_region
      _
    $region33: #{tpu_custom_call.1} parent=1 // pred_fallthru
      _
    // Predicated region
    $region34: #{tpu_custom_call.1} parent=1 // pred_check
      _
    $region35: #{tpu_custom_call.1} parent=1 // pred_check_branch
      %50 = sbr.rel (0) target = $region37
    $region36: #{tpu_custom_call.1} parent=1 // pred_region
      _
    $region37: #{tpu_custom_call.1} parent=1 // pred_fallthru
      _
    // Predicated region
    $region38: #{tpu_custom_call.1} parent=1 // pred_check
      _
    $region39: #{tpu_custom_call.1} parent=1 // pred_check_branch
      %52 = sbr.rel (0) target = $region41
    $region40: #{tpu_custom_call.1} parent=1 // pred_region
      %54 = vsyncadd [#allocation8], 0
      %s55 = sshll.u32 %s9, 4
      %s56 = int_to_ptr.hbm [resolvable:$true] %s55
      %s57 = sshll.u32 [#allocation7], 4
      %s58 = int_to_ptr.vmem [resolvable:$true] %s57
      %63 = dma.hbm_to_vmem [thread:$0]  %s56, 2048, %s58, [#allocation8], 128, 128, 8
    $region41: #{tpu_custom_call.1} parent=1 // pred_fallthru
      _
    // Predicated region
    $region42: #{tpu_custom_call.1} parent=1 // pred_check
      _
    $region43: #{tpu_custom_call.1} parent=1 // pred_check_branch
      %65 = sbr.rel (0) target = $region45
    $region44: #{tpu_custom_call.1} parent=1 // pred_region
      _
    $region45: #{tpu_custom_call.1} parent=1 // pred_fallthru
      _
    // Predicated region
    $region46: #{tpu_custom_call.1} parent=1 // pred_check
      _
    $region47: #{tpu_custom_call.1} parent=1 // pred_check_branch
      %67 = sbr.rel (0) target = $region49
    $region48: #{tpu_custom_call.1} parent=1 // pred_region
      %69 = dma.done [#allocation5], 8192
    $region49: #{tpu_custom_call.1} parent=1 // pred_fallthru
      _
    // Predicated region
    $region50: #{tpu_custom_call.1} parent=1 // pred_check
      _
    $region51: #{tpu_custom_call.1} parent=1 // pred_check_branch
      %71 = sbr.rel (0) target = $region53
    $region52: #{tpu_custom_call.1} parent=1 // pred_region
      %73 = dma.done [#allocation8], 2048
    $region53: #{tpu_custom_call.1} parent=1 // pred_fallthru
      _
    %v74 = vld [vmem:[%s0] sm:$0xff]
    %v75 = vld [vmem:[%s0 + $0x8] sm:$0xff]
    %v76 = vld [vmem:[%s0 + $0x10] sm:$0xff]
    %v77 = vld [vmem:[%s0 + $0x18] sm:$0xff]
    %v78 = vld [vmem:[%s0 + $0x20] sm:$0xff]
    %v79 = vld [vmem:[%s0 + $0x28] sm:$0xff]
    %v80 = vld [vmem:[%s0 + $0x30] sm:$0xff]
    %v81 = vld [vmem:[%s0 + $0x38] sm:$0xff]
    %v82 = vld [vmem:[%s1] sm:$0xff]
    %v83 = vld [vmem:[%s1 + $0x8] sm:$0xff]
    %v84 = vld [vmem:[%s3] sm:$0xf]
    %v86 = vperm.slane %v84, 0
    %v87 = vperm.slane %v84, 1
    %v88 = vperm.slane %v84, 2
    %v89 = vperm.slane %v84, 3
    %96 = vst [vmem:[#allocation1] ss:$2 sm:$0xff] %v82
    %s97 = scalar_lea.vmem [#allocation1], 16
    %98 = vst [vmem:[%s97] ss:$2 sm:$0xff] %v83
    %v99 = vld.sshfl [vmem:[#allocation1] sm:$0xff pattern:$0x75316420]
    %v100 = vld.sshfl [vmem:[#allocation1 + $0x8] sm:$0xff pattern:$0x75316420]
    %v101 = vld.sshfl [vmem:[#allocation1 + $0x10] sm:$0xff pattern:$0x75316420]
    %v102 = vld.sshfl [vmem:[#allocation1 + $0x18] sm:$0xff pattern:$0x75316420]
    %vm103 = vcmask 31744
    %v105 = vsel %vm103, %v74, 0
    %v108 = vsel %vm103, %v75, 0
    %v111 = vsel %vm103, %v76, 0
    %v114 = vsel %vm103, %v77, 0
    %v117 = vsel %vm103, %v78, 0
    %v120 = vsel %vm103, %v79, 0
    %v123 = vsel %vm103, %v80, 0
    %v126 = vsel %vm103, %v81, 0
    %vm128 = vcmask 1043456
    %v129 = vsel %vm128, %v99, 0
    %v131 = vsel %vm128, %v100, 0
    %v133 = vsel %vm128, %v101, 0
    %v135 = vsel %vm128, %v102, 0
    %137 = vmatpush.msra.mxu0 0.0
    %138 = vmatpush.msra.mxu0 0.0
    %139 = vmatpush.msra.mxu0 0.0
    %140 = vmatpush.msra.mxu0 0.0
    %141 = vmatpush.msra.mxu0 0.0
    %142 = vmatpush.msra.mxu0 0.0
    %143 = vmatpush.msra.mxu0 0.0
    %144 = vmatpush.msra.mxu0 0.0
    %145 = vmatpush.msra.mxu0 0.0
    %146 = vmatpush.msra.mxu0 0.0
    %147 = vmatpush.msra.mxu0 0.0
    %148 = vmatpush.msra.mxu0 0.0
    %149 = vmatpush.msra.mxu0 0.0
    %150 = vmatpush.msra.mxu0 0.0
    %151 = vmatpush.msra.mxu0 0.0
    %152 = vmatpush.msra.mxu0 %v129
    %153 = vmatmul.f32.gmra.mxu0 %v105
    %v154 = vpop.f32.mrf.mxu0
    %v155 = vadd.f32 %v86, %v154
    %156 = vmatmul.f32.gmra.mxu0 %v108
    %v157 = vpop.f32.mrf.mxu0
    %v158 = vadd.f32 %v86, %v157
    %159 = vmatmul.f32.gmra.mxu0 %v111
    %v160 = vpop.f32.mrf.mxu0
    %v161 = vadd.f32 %v86, %v160
    %162 = vmatmul.f32.gmra.mxu0 %v114
    %v163 = vpop.f32.mrf.mxu0
    %v164 = vadd.f32 %v86, %v163
    %165 = vmatmul.f32.gmra.mxu0 %v117
    %v166 = vpop.f32.mrf.mxu0
    %v167 = vadd.f32 %v86, %v166
    %168 = vmatmul.f32.gmra.mxu0 %v120
    %v169 = vpop.f32.mrf.mxu0
    %v170 = vadd.f32 %v86, %v169
    %171 = vmatmul.f32.gmra.mxu0 %v123
    %v172 = vpop.f32.mrf.mxu0
    %v173 = vadd.f32 %v86, %v172
    %174 = vmatmul.f32.gmra.mxu0 %v126
    %v175 = vpop.f32.mrf.mxu0
    %v176 = vadd.f32 %v86, %v175
    %177 = vdwg.mxu0
    %178 = vmatpush.msra.mxu0 0.0
    %179 = vmatpush.msra.mxu0 0.0
    %180 = vmatpush.msra.mxu0 0.0
    %181 = vmatpush.msra.mxu0 0.0
    %182 = vmatpush.msra.mxu0 0.0
    %183 = vmatpush.msra.mxu0 0.0
    %184 = vmatpush.msra.mxu0 0.0
    %185 = vmatpush.msra.mxu0 0.0
    %186 = vmatpush.msra.mxu0 0.0
    %187 = vmatpush.msra.mxu0 0.0
    %188 = vmatpush.msra.mxu0 0.0
    %189 = vmatpush.msra.mxu0 0.0
    %190 = vmatpush.msra.mxu0 0.0
    %191 = vmatpush.msra.mxu0 0.0
    %192 = vmatpush.msra.mxu0 0.0
    %193 = vmatpush.msra.mxu0 %v131
    %194 = vmatmul.f32.gmra.mxu0 %v105
    %v195 = vpop.f32.mrf.mxu0
    %v196 = vadd.f32 %v87, %v195
    %197 = vmatmul.f32.gmra.mxu0 %v108
    %v198 = vpop.f32.mrf.mxu0
    %v199 = vadd.f32 %v87, %v198
    %200 = vmatmul.f32.gmra.mxu0 %v111
    %v201 = vpop.f32.mrf.mxu0
    %v202 = vadd.f32 %v87, %v201
    %203 = vmatmul.f32.gmra.mxu0 %v114
    %v204 = vpop.f32.mrf.mxu0
    %v205 = vadd.f32 %v87, %v204
    %206 = vmatmul.f32.gmra.mxu0 %v117
    %v207 = vpop.f32.mrf.mxu0
    %v208 = vadd.f32 %v87, %v207
    %209 = vmatmul.f32.gmra.mxu0 %v120
    %v210 = vpop.f32.mrf.mxu0
    %v211 = vadd.f32 %v87, %v210
    %212 = vmatmul.f32.gmra.mxu0 %v123
    %v213 = vpop.f32.mrf.mxu0
    %v214 = vadd.f32 %v87, %v213
    %215 = vmatmul.f32.gmra.mxu0 %v126
    %v216 = vpop.f32.mrf.mxu0
    %v217 = vadd.f32 %v87, %v216
    %218 = vdwg.mxu0
    %219 = vmatpush.msra.mxu0 0.0
    %220 = vmatpush.msra.mxu0 0.0
    %221 = vmatpush.msra.mxu0 0.0
    %222 = vmatpush.msra.mxu0 0.0
    %223 = vmatpush.msra.mxu0 0.0
    %224 = vmatpush.msra.mxu0 0.0
    %225 = vmatpush.msra.mxu0 0.0
    %226 = vmatpush.msra.mxu0 0.0
    %227 = vmatpush.msra.mxu0 0.0
    %228 = vmatpush.msra.mxu0 0.0
    %229 = vmatpush.msra.mxu0 0.0
    %230 = vmatpush.msra.mxu0 0.0
    %231 = vmatpush.msra.mxu0 0.0
    %232 = vmatpush.msra.mxu0 0.0
    %233 = vmatpush.msra.mxu0 0.0
    %234 = vmatpush.msra.mxu0 %v133
    %235 = vmatmul.f32.gmra.mxu0 %v105
    %v236 = vpop.f32.mrf.mxu0
    %v237 = vadd.f32 %v88, %v236
    %238 = vmatmul.f32.gmra.mxu0 %v108
    %v239 = vpop.f32.mrf.mxu0
    %v240 = vadd.f32 %v88, %v239
    %241 = vmatmul.f32.gmra.mxu0 %v111
    %v242 = vpop.f32.mrf.mxu0
    %v243 = vadd.f32 %v88, %v242
    %244 = vmatmul.f32.gmra.mxu0 %v114
    %v245 = vpop.f32.mrf.mxu0
    %v246 = vadd.f32 %v88, %v245
    %247 = vmatmul.f32.gmra.mxu0 %v117
    %v248 = vpop.f32.mrf.mxu0
    %v249 = vadd.f32 %v88, %v248
    %250 = vmatmul.f32.gmra.mxu0 %v120
    %v251 = vpop.f32.mrf.mxu0
    %v252 = vadd.f32 %v88, %v251
    %253 = vmatmul.f32.gmra.mxu0 %v123
    %v254 = vpop.f32.mrf.mxu0
    %v255 = vadd.f32 %v88, %v254
    %256 = vmatmul.f32.gmra.mxu0 %v126
    %v257 = vpop.f32.mrf.mxu0
    %v258 = vadd.f32 %v88, %v257
    %259 = vdwg.mxu0
    %260 = vmatpush.msra.mxu0 0.0
    %261 = vmatpush.msra.mxu0 0.0
    %262 = vmatpush.msra.mxu0 0.0
    %263 = vmatpush.msra.mxu0 0.0
    %264 = vmatpush.msra.mxu0 0.0
    %265 = vmatpush.msra.mxu0 0.0
    %266 = vmatpush.msra.mxu0 0.0
    %267 = vmatpush.msra.mxu0 0.0
    %268 = vmatpush.msra.mxu0 0.0
    %269 = vmatpush.msra.mxu0 0.0
    %270 = vmatpush.msra.mxu0 0.0
    %271 = vmatpush.msra.mxu0 0.0
    %272 = vmatpush.msra.mxu0 0.0
    %273 = vmatpush.msra.mxu0 0.0
    %274 = vmatpush.msra.mxu0 0.0
    %275 = vmatpush.msra.mxu0 %v135
    %276 = vmatmul.f32.gmra.mxu0 %v105
    %v277 = vpop.f32.mrf.mxu0
    %v278 = vadd.f32 %v89, %v277
    %279 = vmatmul.f32.gmra.mxu0 %v108
    %v280 = vpop.f32.mrf.mxu0
    %v281 = vadd.f32 %v89, %v280
    %282 = vmatmul.f32.gmra.mxu0 %v111
    %v283 = vpop.f32.mrf.mxu0
    %v284 = vadd.f32 %v89, %v283
    %285 = vmatmul.f32.gmra.mxu0 %v114
    %v286 = vpop.f32.mrf.mxu0
    %v287 = vadd.f32 %v89, %v286
    %288 = vmatmul.f32.gmra.mxu0 %v117
    %v289 = vpop.f32.mrf.mxu0
    %v290 = vadd.f32 %v89, %v289
    %291 = vmatmul.f32.gmra.mxu0 %v120
    %v292 = vpop.f32.mrf.mxu0
    %v293 = vadd.f32 %v89, %v292
    %294 = vmatmul.f32.gmra.mxu0 %v123
    %v295 = vpop.f32.mrf.mxu0
    %v296 = vadd.f32 %v89, %v295
    %297 = vmatmul.f32.gmra.mxu0 %v126
    %v298 = vpop.f32.mrf.mxu0
    %v299 = vadd.f32 %v89, %v298
    %300 = vdwg.mxu0
    %301 = vst [vmem:[#allocation2] sm:$0xff] %v155
    %302 = vst [vmem:[#allocation2 + $0x8] sm:$0xff] %v196
    %303 = vst [vmem:[#allocation2 + $0x10] sm:$0xff] %v237
    %304 = vst [vmem:[#allocation2 + $0x18] sm:$0xff] %v278
    %305 = vst [vmem:[#allocation2 + $0x20] sm:$0xff] %v158
    %306 = vst [vmem:[#allocation2 + $0x28] sm:$0xff] %v199
    %307 = vst [vmem:[#allocation2 + $0x30] sm:$0xff] %v240
    %308 = vst [vmem:[#allocation2 + $0x38] sm:$0xff] %v281
    %309 = vst [vmem:[#allocation2 + $0x40] sm:$0xff] %v161
    %310 = vst [vmem:[#allocation2 + $0x48] sm:$0xff] %v202
    %311 = vst [vmem:[#allocation2 + $0x50] sm:$0xff] %v243
    %312 = vst [vmem:[#allocation2 + $0x58] sm:$0xff] %v284
    %313 = vst [vmem:[#allocation2 + $0x60] sm:$0xff] %v164
    %314 = vst [vmem:[#allocation2 + $0x68] sm:$0xff] %v205
    %315 = vst [vmem:[#allocation2 + $0x70] sm:$0xff] %v246
    %316 = vst [vmem:[#allocation2 + $0x78] sm:$0xff] %v287
    %317 = vst [vmem:[#allocation2 + $0x80] sm:$0xff] %v167
    %318 = vst [vmem:[#allocation2 + $0x88] sm:$0xff] %v208
    %319 = vst [vmem:[#allocation2 + $0x90] sm:$0xff] %v249
    %320 = vst [vmem:[#allocation2 + $0x98] sm:$0xff] %v290
    %321 = vst [vmem:[#allocation2 + $0xa0] sm:$0xff] %v170
    %322 = vst [vmem:[#allocation2 + $0xa8] sm:$0xff] %v211
    %323 = vst [vmem:[#allocation2 + $0xb0] sm:$0xff] %v252
    %324 = vst [vmem:[#allocation2 + $0xb8] sm:$0xff] %v293
    %325 = vst [vmem:[#allocation2 + $0xc0] sm:$0xff] %v173
    %326 = vst [vmem:[#allocation2 + $0xc8] sm:$0xff] %v214
    %327 = vst [vmem:[#allocation2 + $0xd0] sm:$0xff] %v255
    %328 = vst [vmem:[#allocation2 + $0xd8] sm:$0xff] %v296
    %329 = vst [vmem:[#allocation2 + $0xe0] sm:$0xff] %v176
    %330 = vst [vmem:[#allocation2 + $0xe8] sm:$0xff] %v217
    %331 = vst [vmem:[#allocation2 + $0xf0] sm:$0xff] %v258
    %332 = vst [vmem:[#allocation2 + $0xf8] sm:$0xff] %v299
    %v333 = vld [vmem:[%s4] sm:$0x1]
    %s334 = smul.u32 0, 4
    %s335 = smul.addr %s334, 8
    %s336 = scalar_lea.vmem [#allocation2], %s335
    %v337 = vld [vmem:[%s336] sm:$0xff]
    %v338 = vld [vmem:[%s336 + $0x8] sm:$0xff]
    %v339 = vld [vmem:[%s336 + $0x10] sm:$0xff]
    %v340 = vld [vmem:[%s336 + $0x18] sm:$0xff]
    %v341 = vld [vmem:[#allocation4] sm:$0xff]
    %v342 = vld [vmem:[#allocation4 + $0x8] sm:$0xff]
    %v343 = vld [vmem:[#allocation4 + $0x10] sm:$0xff]
    %v344 = vld [vmem:[#allocation4 + $0x18] sm:$0xff]
    %v345 = vld [vmem:[#allocation4 + $0x20] sm:$0xff]
    %v346 = vld [vmem:[#allocation4 + $0x28] sm:$0xff]
    %v347 = vld [vmem:[#allocation4 + $0x30] sm:$0xff]
    %v348 = vld [vmem:[#allocation4 + $0x38] sm:$0xff]
    %v349 = vld [vmem:[#allocation4 + $0x40] sm:$0xff]
    %v350 = vld [vmem:[#allocation4 + $0x48] sm:$0xff]
    %v351 = vld [vmem:[#allocation4 + $0x50] sm:$0xff]
    %v352 = vld [vmem:[#allocation4 + $0x58] sm:$0xff]
    %v353 = vld [vmem:[#allocation4 + $0x60] sm:$0xff]
    %v354 = vld [vmem:[#allocation4 + $0x68] sm:$0xff]
    %v355 = vld [vmem:[#allocation4 + $0x70] sm:$0xff]
    %v356 = vld [vmem:[#allocation4 + $0x78] sm:$0xff]
    %v357 = vld [vmem:[#allocation4 + $0x80] sm:$0xff]
    %v358 = vld [vmem:[#allocation4 + $0x88] sm:$0xff]
    %v359 = vld [vmem:[#allocation4 + $0x90] sm:$0xff]
    %v360 = vld [vmem:[#allocation4 + $0x98] sm:$0xff]
    %v361 = vld [vmem:[#allocation4 + $0xa0] sm:$0xff]
    %v362 = vld [vmem:[#allocation4 + $0xa8] sm:$0xff]
    %v363 = vld [vmem:[#allocation4 + $0xb0] sm:$0xff]
    %v364 = vld [vmem:[#allocation4 + $0xb8] sm:$0xff]
    %v365 = vld [vmem:[#allocation4 + $0xc0] sm:$0xff]
    %v366 = vld [vmem:[#allocation4 + $0xc8] sm:$0xff]
    %v367 = vld [vmem:[#allocation4 + $0xd0] sm:$0xff]
    %v368 = vld [vmem:[#allocation4 + $0xd8] sm:$0xff]
    %v369 = vld [vmem:[#allocation4 + $0xe0] sm:$0xff]
    %v370 = vld [vmem:[#allocation4 + $0xe8] sm:$0xff]
    %v371 = vld [vmem:[#allocation4 + $0xf0] sm:$0xff]
    %v372 = vld [vmem:[#allocation4 + $0xf8] sm:$0xff]
    %v373 = vld [vmem:[#allocation4 + $0x100] sm:$0xff]
    %v374 = vld [vmem:[#allocation4 + $0x108] sm:$0xff]
    %v375 = vld [vmem:[#allocation4 + $0x110] sm:$0xff]
    %v376 = vld [vmem:[#allocation4 + $0x118] sm:$0xff]
    %v377 = vld [vmem:[#allocation4 + $0x120] sm:$0xff]
    %v378 = vld [vmem:[#allocation4 + $0x128] sm:$0xff]
    %v379 = vld [vmem:[#allocation4 + $0x130] sm:$0xff]
    %v380 = vld [vmem:[#allocation4 + $0x138] sm:$0xff]
    %v381 = vld [vmem:[#allocation4 + $0x140] sm:$0xff]
    %v382 = vld [vmem:[#allocation4 + $0x148] sm:$0xff]
    %v383 = vld [vmem:[#allocation4 + $0x150] sm:$0xff]
    %v384 = vld [vmem:[#allocation4 + $0x158] sm:$0xff]
    %v385 = vld [vmem:[#allocation4 + $0x160] sm:$0xff]
    %v386 = vld [vmem:[#allocation4 + $0x168] sm:$0xff]
    %v387 = vld [vmem:[#allocation4 + $0x170] sm:$0xff]
    %v388 = vld [vmem:[#allocation4 + $0x178] sm:$0xff]
    %v389 = vld [vmem:[#allocation4 + $0x180] sm:$0xff]
    %v390 = vld [vmem:[#allocation4 + $0x188] sm:$0xff]
    %v391 = vld [vmem:[#allocation4 + $0x190] sm:$0xff]
    %v392 = vld [vmem:[#allocation4 + $0x198] sm:$0xff]
    %v393 = vld [vmem:[#allocation4 + $0x1a0] sm:$0xff]
    %v394 = vld [vmem:[#allocation4 + $0x1a8] sm:$0xff]
    %v395 = vld [vmem:[#allocation4 + $0x1b0] sm:$0xff]
    %v396 = vld [vmem:[#allocation4 + $0x1b8] sm:$0xff]
    %v397 = vld [vmem:[#allocation4 + $0x1c0] sm:$0xff]
    %v398 = vld [vmem:[#allocation4 + $0x1c8] sm:$0xff]
    %v399 = vld [vmem:[#allocation4 + $0x1d0] sm:$0xff]
    %v400 = vld [vmem:[#allocation4 + $0x1d8] sm:$0xff]
    %v401 = vld [vmem:[#allocation4 + $0x1e0] sm:$0xff]
    %v402 = vld [vmem:[#allocation4 + $0x1e8] sm:$0xff]
    %v403 = vld [vmem:[#allocation4 + $0x1f0] sm:$0xff]
    %v404 = vld [vmem:[#allocation4 + $0x1f8] sm:$0xff]
    %405 = vmatpush.msra.mxu0 %v401
    %406 = vmatpush.msra.mxu0 %v397
    %407 = vmatpush.msra.mxu0 %v393
    %408 = vmatpush.msra.mxu0 %v389
    %409 = vmatpush.msra.mxu0 %v385
    %410 = vmatpush.msra.mxu0 %v381
    %411 = vmatpush.msra.mxu0 %v377
    %412 = vmatpush.msra.mxu0 %v373
    %413 = vmatpush.msra.mxu0 %v369
    %414 = vmatpush.msra.mxu0 %v365
    %415 = vmatpush.msra.mxu0 %v361
    %416 = vmatpush.msra.mxu0 %v357
    %417 = vmatpush.msra.mxu0 %v353
    %418 = vmatpush.msra.mxu0 %v349
    %419 = vmatpush.msra.mxu0 %v345
    %420 = vmatpush.msra.mxu0 %v341
    %421 = vmatmul.f32.gmra.mxu0 0.0
    %v422 = vpop.f32.mrf.mxu0
    %v423 = vadd.f32 0.0, %v422
    %424 = vdwg.mxu0
    %425 = vmatpush.msra.mxu0 %v402
    %426 = vmatpush.msra.mxu0 %v398
    %427 = vmatpush.msra.mxu0 %v394
    %428 = vmatpush.msra.mxu0 %v390
    %429 = vmatpush.msra.mxu0 %v386
    %430 = vmatpush.msra.mxu0 %v382
    %431 = vmatpush.msra.mxu0 %v378
    %432 = vmatpush.msra.mxu0 %v374
    %433 = vmatpush.msra.mxu0 %v370
    %434 = vmatpush.msra.mxu0 %v366
    %435 = vmatpush.msra.mxu0 %v362
    %436 = vmatpush.msra.mxu0 %v358
    %437 = vmatpush.msra.mxu0 %v354
    %438 = vmatpush.msra.mxu0 %v350
    %439 = vmatpush.msra.mxu0 %v346
    %440 = vmatpush.msra.mxu0 %v342
    %441 = vmatmul.f32.gmra.mxu0 0.0
    %v442 = vpop.f32.mrf.mxu0
    %v443 = vadd.f32 0.0, %v442
    %444 = vdwg.mxu0
    %445 = vmatpush.msra.mxu0 %v403
    %446 = vmatpush.msra.mxu0 %v399
    %447 = vmatpush.msra.mxu0 %v395
    %448 = vmatpush.msra.mxu0 %v391
    %449 = vmatpush.msra.mxu0 %v387
    %450 = vmatpush.msra.mxu0 %v383
    %451 = vmatpush.msra.mxu0 %v379
    %452 = vmatpush.msra.mxu0 %v375
    %453 = vmatpush.msra.mxu0 %v371
    %454 = vmatpush.msra.mxu0 %v367
    %455 = vmatpush.msra.mxu0 %v363
    %456 = vmatpush.msra.mxu0 %v359
    %457 = vmatpush.msra.mxu0 %v355
    %458 = vmatpush.msra.mxu0 %v351
    %459 = vmatpush.msra.mxu0 %v347
    %460 = vmatpush.msra.mxu0 %v343
    %461 = vmatmul.f32.gmra.mxu0 0.0
    %v462 = vpop.f32.mrf.mxu0
    %v463 = vadd.f32 0.0, %v462
    %464 = vdwg.mxu0
    %465 = vmatpush.msra.mxu0 %v404
    %466 = vmatpush.msra.mxu0 %v400
    %467 = vmatpush.msra.mxu0 %v396
    %468 = vmatpush.msra.mxu0 %v392
    %469 = vmatpush.msra.mxu0 %v388
    %470 = vmatpush.msra.mxu0 %v384
    %471 = vmatpush.msra.mxu0 %v380
    %472 = vmatpush.msra.mxu0 %v376
    %473 = vmatpush.msra.mxu0 %v372
    %474 = vmatpush.msra.mxu0 %v368
    %475 = vmatpush.msra.mxu0 %v364
    %476 = vmatpush.msra.mxu0 %v360
    %477 = vmatpush.msra.mxu0 %v356
    %478 = vmatpush.msra.mxu0 %v352
    %479 = vmatpush.msra.mxu0 %v348
    %480 = vmatpush.msra.mxu0 %v344
    %481 = vmatmul.f32.gmra.mxu0 0.0
    %v482 = vpop.f32.mrf.mxu0
    %v483 = vadd.f32 0.0, %v482
    %484 = vdwg.mxu0
    %v485 = vadd.f32 %v337, %v423
    %v486 = vadd.f32 %v338, %v443
    %v487 = vadd.f32 %v339, %v463
    %v488 = vadd.f32 %v340, %v483
    %v489 = vxor.u32 %v485, 2147483648
    %v490 = vmul.f32 %v489, 1.442695
    %v491 = vpow.pop %v490
    %v492 = vadd.f32 %v491, 1.0
    %v493 = vrcp.pop %v492
    %v494 = vmul.f32 %v492, %v493
    %v495 = vsub.f32 1.0, %v494
    %v496 = vmul.f32 %v493, %v495
    %v497 = vadd.f32 %v493, %v496
    %vm498 = vweird.f32 %v492
    %vm499 = vweird.f32 %v493
    %vm500 = vmor %vm498, %vm499
    %v501 = vsel %vm500, %v493, %v497
    %v502 = vand.u32 2147483647, %v492
    %vm503 = vcmp.eq.f32.partialorder %v502, 8.507059e+37
    %v504 = vand.u32 %v492, 2147483648
    %v505 = vor.u32 1.1754944e-38, %v504
    %v506 = vsel %vm503, %v505, %v501
    %v507 = vmul.f32 1.0, %v506
    %v508 = vxor.u32 %v486, 2147483648
    %v509 = vmul.f32 %v508, 1.442695
    %v510 = vpow.pop %v509
    %v511 = vadd.f32 %v510, 1.0
    %v512 = vrcp.pop %v511
    %v513 = vmul.f32 %v511, %v512
    %v514 = vsub.f32 1.0, %v513
    %v515 = vmul.f32 %v512, %v514
    %v516 = vadd.f32 %v512, %v515
    %vm517 = vweird.f32 %v511
    %vm518 = vweird.f32 %v512
    %vm519 = vmor %vm517, %vm518
    %v520 = vsel %vm519, %v512, %v516
    %v521 = vand.u32 2147483647, %v511
    %vm522 = vcmp.eq.f32.partialorder %v521, 8.507059e+37
    %v523 = vand.u32 %v511, 2147483648
    %v524 = vor.u32 1.1754944e-38, %v523
    %v525 = vsel %vm522, %v524, %v520
    %v526 = vmul.f32 1.0, %v525
    %v527 = vtanh.pop %v487
    %v528 = vxor.u32 %v488, 2147483648
    %v529 = vmul.f32 %v528, 1.442695
    %v530 = vpow.pop %v529
    %v531 = vadd.f32 %v530, 1.0
    %v532 = vrcp.pop %v531
    %v533 = vmul.f32 %v531, %v532
    %v534 = vsub.f32 1.0, %v533
    %v535 = vmul.f32 %v532, %v534
    %v536 = vadd.f32 %v532, %v535
    %vm537 = vweird.f32 %v531
    %vm538 = vweird.f32 %v532
    %vm539 = vmor %vm537, %vm538
    %v540 = vsel %vm539, %v532, %v536
    %v541 = vand.u32 2147483647, %v531
    %vm542 = vcmp.eq.f32.partialorder %v541, 8.507059e+37
    %v543 = vand.u32 %v531, 2147483648
    %v544 = vor.u32 1.1754944e-38, %v543
    %v545 = vsel %vm542, %v544, %v540
    %v546 = vmul.f32 1.0, %v545
    %v547 = vmul.f32 %v526, 0.0
    %v548 = vmul.f32 %v507, %v527
    %v549 = vadd.f32 %v547, %v548
    %v550 = vtanh.pop %v549
    %v551 = vmul.f32 %v546, %v550
    %552 = vst [vmem:[#allocation3] sm:$0xff] %v551
    %s553 = smul.u32 1, 4
    %s554 = smul.addr %s553, 8
    %s555 = scalar_lea.vmem [#allocation2], %s554
    %v556 = vld [vmem:[%s555] sm:$0xff]
    %v557 = vld [vmem:[%s555 + $0x8] sm:$0xff]
    %v558 = vld [vmem:[%s555 + $0x10] sm:$0xff]
    %v559 = vld [vmem:[%s555 + $0x18] sm:$0xff]
    %v560 = vld [vmem:[#allocation4] sm:$0xff]
    %v561 = vld [vmem:[#allocation4 + $0x8] sm:$0xff]
    %v562 = vld [vmem:[#allocation4 + $0x10] sm:$0xff]
    %v563 = vld [vmem:[#allocation4 + $0x18] sm:$0xff]
    %v564 = vld [vmem:[#allocation4 + $0x20] sm:$0xff]
    %v565 = vld [vmem:[#allocation4 + $0x28] sm:$0xff]
    %v566 = vld [vmem:[#allocation4 + $0x30] sm:$0xff]
    %v567 = vld [vmem:[#allocation4 + $0x38] sm:$0xff]
    %v568 = vld [vmem:[#allocation4 + $0x40] sm:$0xff]
    %v569 = vld [vmem:[#allocation4 + $0x48] sm:$0xff]
    %v570 = vld [vmem:[#allocation4 + $0x50] sm:$0xff]
    %v571 = vld [vmem:[#allocation4 + $0x58] sm:$0xff]
    %v572 = vld [vmem:[#allocation4 + $0x60] sm:$0xff]
    %v573 = vld [vmem:[#allocation4 + $0x68] sm:$0xff]
    %v574 = vld [vmem:[#allocation4 + $0x70] sm:$0xff]
    %v575 = vld [vmem:[#allocation4 + $0x78] sm:$0xff]
    %v576 = vld [vmem:[#allocation4 + $0x80] sm:$0xff]
    %v577 = vld [vmem:[#allocation4 + $0x88] sm:$0xff]
    %v578 = vld [vmem:[#allocation4 + $0x90] sm:$0xff]
    %v579 = vld [vmem:[#allocation4 + $0x98] sm:$0xff]
    %v580 = vld [vmem:[#allocation4 + $0xa0] sm:$0xff]
    %v581 = vld [vmem:[#allocation4 + $0xa8] sm:$0xff]
    %v582 = vld [vmem:[#allocation4 + $0xb0] sm:$0xff]
    %v583 = vld [vmem:[#allocation4 + $0xb8] sm:$0xff]
    %v584 = vld [vmem:[#allocation4 + $0xc0] sm:$0xff]
    %v585 = vld [vmem:[#allocation4 + $0xc8] sm:$0xff]
    %v586 = vld [vmem:[#allocation4 + $0xd0] sm:$0xff]
    %v587 = vld [vmem:[#allocation4 + $0xd8] sm:$0xff]
    %v588 = vld [vmem:[#allocation4 + $0xe0] sm:$0xff]
    %v589 = vld [vmem:[#allocation4 + $0xe8] sm:$0xff]
    %v590 = vld [vmem:[#allocation4 + $0xf0] sm:$0xff]
    %v591 = vld [vmem:[#allocation4 + $0xf8] sm:$0xff]
    %v592 = vld [vmem:[#allocation4 + $0x100] sm:$0xff]
    %v593 = vld [vmem:[#allocation4 + $0x108] sm:$0xff]
    %v594 = vld [vmem:[#allocation4 + $0x110] sm:$0xff]
    %v595 = vld [vmem:[#allocation4 + $0x118] sm:$0xff]
    %v596 = vld [vmem:[#allocation4 + $0x120] sm:$0xff]
    %v597 = vld [vmem:[#allocation4 + $0x128] sm:$0xff]
    %v598 = vld [vmem:[#allocation4 + $0x130] sm:$0xff]
    %v599 = vld [vmem:[#allocation4 + $0x138] sm:$0xff]
    %v600 = vld [vmem:[#allocation4 + $0x140] sm:$0xff]
    %v601 = vld [vmem:[#allocation4 + $0x148] sm:$0xff]
    %v602 = vld [vmem:[#allocation4 + $0x150] sm:$0xff]
    %v603 = vld [vmem:[#allocation4 + $0x158] sm:$0xff]
    %v604 = vld [vmem:[#allocation4 + $0x160] sm:$0xff]
    %v605 = vld [vmem:[#allocation4 + $0x168] sm:$0xff]
    %v606 = vld [vmem:[#allocation4 + $0x170] sm:$0xff]
    %v607 = vld [vmem:[#allocation4 + $0x178] sm:$0xff]
    %v608 = vld [vmem:[#allocation4 + $0x180] sm:$0xff]
    %v609 = vld [vmem:[#allocation4 + $0x188] sm:$0xff]
    %v610 = vld [vmem:[#allocation4 + $0x190] sm:$0xff]
    %v611 = vld [vmem:[#allocation4 + $0x198] sm:$0xff]
    %v612 = vld [vmem:[#allocation4 + $0x1a0] sm:$0xff]
    %v613 = vld [vmem:[#allocation4 + $0x1a8] sm:$0xff]
    %v614 = vld [vmem:[#allocation4 + $0x1b0] sm:$0xff]
    %v615 = vld [vmem:[#allocation4 + $0x1b8] sm:$0xff]
    %v616 = vld [vmem:[#allocation4 + $0x1c0] sm:$0xff]
    %v617 = vld [vmem:[#allocation4 + $0x1c8] sm:$0xff]
    %v618 = vld [vmem:[#allocation4 + $0x1d0] sm:$0xff]
    %v619 = vld [vmem:[#allocation4 + $0x1d8] sm:$0xff]
    %v620 = vld [vmem:[#allocation4 + $0x1e0] sm:$0xff]
    %v621 = vld [vmem:[#allocation4 + $0x1e8] sm:$0xff]
    %v622 = vld [vmem:[#allocation4 + $0x1f0] sm:$0xff]
    %v623 = vld [vmem:[#allocation4 + $0x1f8] sm:$0xff]
    %624 = vmatpush.msra.mxu0 %v620
    %625 = vmatpush.msra.mxu0 %v616
    %626 = vmatpush.msra.mxu0 %v612
    %627 = vmatpush.msra.mxu0 %v608
    %628 = vmatpush.msra.mxu0 %v604
    %629 = vmatpush.msra.mxu0 %v600
    %630 = vmatpush.msra.mxu0 %v596
    %631 = vmatpush.msra.mxu0 %v592
    %632 = vmatpush.msra.mxu0 %v588
    %633 = vmatpush.msra.mxu0 %v584
    %634 = vmatpush.msra.mxu0 %v580
    %635 = vmatpush.msra.mxu0 %v576
    %636 = vmatpush.msra.mxu0 %v572
    %637 = vmatpush.msra.mxu0 %v568
    %638 = vmatpush.msra.mxu0 %v564
    %639 = vmatpush.msra.mxu0 %v560
    %640 = vmatmul.f32.gmra.mxu0 %v551
    %v641 = vpop.f32.mrf.mxu0
    %v642 = vadd.f32 0.0, %v641
    %643 = vdwg.mxu0
    %644 = vmatpush.msra.mxu0 %v621
    %645 = vmatpush.msra.mxu0 %v617
    %646 = vmatpush.msra.mxu0 %v613
    %647 = vmatpush.msra.mxu0 %v609
    %648 = vmatpush.msra.mxu0 %v605
    %649 = vmatpush.msra.mxu0 %v601
    %650 = vmatpush.msra.mxu0 %v597
    %651 = vmatpush.msra.mxu0 %v593
    %652 = vmatpush.msra.mxu0 %v589
    %653 = vmatpush.msra.mxu0 %v585
    %654 = vmatpush.msra.mxu0 %v581
    %655 = vmatpush.msra.mxu0 %v577
    %656 = vmatpush.msra.mxu0 %v573
    %657 = vmatpush.msra.mxu0 %v569
    %658 = vmatpush.msra.mxu0 %v565
    %659 = vmatpush.msra.mxu0 %v561
    %660 = vmatmul.f32.gmra.mxu0 %v551
    %v661 = vpop.f32.mrf.mxu0
    %v662 = vadd.f32 0.0, %v661
    %663 = vdwg.mxu0
    %664 = vmatpush.msra.mxu0 %v622
    %665 = vmatpush.msra.mxu0 %v618
    %666 = vmatpush.msra.mxu0 %v614
    %667 = vmatpush.msra.mxu0 %v610
    %668 = vmatpush.msra.mxu0 %v606
    %669 = vmatpush.msra.mxu0 %v602
    %670 = vmatpush.msra.mxu0 %v598
    %671 = vmatpush.msra.mxu0 %v594
    %672 = vmatpush.msra.mxu0 %v590
    %673 = vmatpush.msra.mxu0 %v586
    %674 = vmatpush.msra.mxu0 %v582
    %675 = vmatpush.msra.mxu0 %v578
    %676 = vmatpush.msra.mxu0 %v574
    %677 = vmatpush.msra.mxu0 %v570
    %678 = vmatpush.msra.mxu0 %v566
    %679 = vmatpush.msra.mxu0 %v562
    %680 = vmatmul.f32.gmra.mxu0 %v551
    %v681 = vpop.f32.mrf.mxu0
    %v682 = vadd.f32 0.0, %v681
    %683 = vdwg.mxu0
    %684 = vmatpush.msra.mxu0 %v623
    %685 = vmatpush.msra.mxu0 %v619
    %686 = vmatpush.msra.mxu0 %v615
    %687 = vmatpush.msra.mxu0 %v611
    %688 = vmatpush.msra.mxu0 %v607
    %689 = vmatpush.msra.mxu0 %v603
    %690 = vmatpush.msra.mxu0 %v599
    %691 = vmatpush.msra.mxu0 %v595
    %692 = vmatpush.msra.mxu0 %v591
    %693 = vmatpush.msra.mxu0 %v587
    %694 = vmatpush.msra.mxu0 %v583
    %695 = vmatpush.msra.mxu0 %v579
    %696 = vmatpush.msra.mxu0 %v575
    %697 = vmatpush.msra.mxu0 %v571
    %698 = vmatpush.msra.mxu0 %v567
    %699 = vmatpush.msra.mxu0 %v563
    %700 = vmatmul.f32.gmra.mxu0 %v551
    %v701 = vpop.f32.mrf.mxu0
    %v702 = vadd.f32 0.0, %v701
    %703 = vdwg.mxu0
    %v704 = vadd.f32 %v556, %v642
    %v705 = vadd.f32 %v557, %v662
    %v706 = vadd.f32 %v558, %v682
    %v707 = vadd.f32 %v559, %v702
    %v708 = vxor.u32 %v704, 2147483648
    %v709 = vmul.f32 %v708, 1.442695
    %v710 = vpow.pop %v709
    %v711 = vadd.f32 %v710, 1.0
    %v712 = vrcp.pop %v711
    %v713 = vmul.f32 %v711, %v712
    %v714 = vsub.f32 1.0, %v713
    %v715 = vmul.f32 %v712, %v714
    %v716 = vadd.f32 %v712, %v715
    %vm717 = vweird.f32 %v711
    %vm718 = vweird.f32 %v712
    %vm719 = vmor %vm717, %vm718
    %v720 = vsel %vm719, %v712, %v716
    %v721 = vand.u32 2147483647, %v711
    %vm722 = vcmp.eq.f32.partialorder %v721, 8.507059e+37
    %v723 = vand.u32 %v711, 2147483648
    %v724 = vor.u32 1.1754944e-38, %v723
    %v725 = vsel %vm722, %v724, %v720
    %v726 = vmul.f32 1.0, %v725
    %v727 = vxor.u32 %v705, 2147483648
    %v728 = vmul.f32 %v727, 1.442695
    %v729 = vpow.pop %v728
    %v730 = vadd.f32 %v729, 1.0
    %v731 = vrcp.pop %v730
    %v732 = vmul.f32 %v730, %v731
    %v733 = vsub.f32 1.0, %v732
    %v734 = vmul.f32 %v731, %v733
    %v735 = vadd.f32 %v731, %v734
    %vm736 = vweird.f32 %v730
    %vm737 = vweird.f32 %v731
    %vm738 = vmor %vm736, %vm737
    %v739 = vsel %vm738, %v731, %v735
    %v740 = vand.u32 2147483647, %v730
    %vm741 = vcmp.eq.f32.partialorder %v740, 8.507059e+37
    %v742 = vand.u32 %v730, 2147483648
    %v743 = vor.u32 1.1754944e-38, %v742
    %v744 = vsel %vm741, %v743, %v739
    %v745 = vmul.f32 1.0, %v744
    %v746 = vtanh.pop %v706
    %v747 = vxor.u32 %v707, 2147483648
    %v748 = vmul.f32 %v747, 1.442695
    %v749 = vpow.pop %v748
    %v750 = vadd.f32 %v749, 1.0
    %v751 = vrcp.pop %v750
    %v752 = vmul.f32 %v750, %v751
    %v753 = vsub.f32 1.0, %v752
    %v754 = vmul.f32 %v751, %v753
    %v755 = vadd.f32 %v751, %v754
    %vm756 = vweird.f32 %v750
    %vm757 = vweird.f32 %v751
    %vm758 = vmor %vm756, %vm757
    %v759 = vsel %vm758, %v751, %v755
    %v760 = vand.u32 2147483647, %v750
    %vm761 = vcmp.eq.f32.partialorder %v760, 8.507059e+37
    %v762 = vand.u32 %v750, 2147483648
    %v763 = vor.u32 1.1754944e-38, %v762
    %v764 = vsel %vm761, %v763, %v759
    %v765 = vmul.f32 1.0, %v764
    %v766 = vmul.f32 %v745, %v549
    %v767 = vmul.f32 %v726, %v746
    %v768 = vadd.f32 %v766, %v767
    %v769 = vtanh.pop %v768
    %v770 = vmul.f32 %v765, %v769
    %s771 = scalar_lea.vmem [#allocation3], 8
    %772 = vst [vmem:[%s771] sm:$0xff] %v770
    %s773 = smul.u32 2, 4
    %s774 = smul.addr %s773, 8
    %s775 = scalar_lea.vmem [#allocation2], %s774
    %v776 = vld [vmem:[%s775] sm:$0xff]
    %v777 = vld [vmem:[%s775 + $0x8] sm:$0xff]
    %v778 = vld [vmem:[%s775 + $0x10] sm:$0xff]
    %v779 = vld [vmem:[%s775 + $0x18] sm:$0xff]
    %v780 = vld [vmem:[#allocation4] sm:$0xff]
    %v781 = vld [vmem:[#allocation4 + $0x8] sm:$0xff]
    %v782 = vld [vmem:[#allocation4 + $0x10] sm:$0xff]
    %v783 = vld [vmem:[#allocation4 + $0x18] sm:$0xff]
    %v784 = vld [vmem:[#allocation4 + $0x20] sm:$0xff]
    %v785 = vld [vmem:[#allocation4 + $0x28] sm:$0xff]
    %v786 = vld [vmem:[#allocation4 + $0x30] sm:$0xff]
    %v787 = vld [vmem:[#allocation4 + $0x38] sm:$0xff]
    %v788 = vld [vmem:[#allocation4 + $0x40] sm:$0xff]
    %v789 = vld [vmem:[#allocation4 + $0x48] sm:$0xff]
    %v790 = vld [vmem:[#allocation4 + $0x50] sm:$0xff]
    %v791 = vld [vmem:[#allocation4 + $0x58] sm:$0xff]
    %v792 = vld [vmem:[#allocation4 + $0x60] sm:$0xff]
    %v793 = vld [vmem:[#allocation4 + $0x68] sm:$0xff]
    %v794 = vld [vmem:[#allocation4 + $0x70] sm:$0xff]
    %v795 = vld [vmem:[#allocation4 + $0x78] sm:$0xff]
    %v796 = vld [vmem:[#allocation4 + $0x80] sm:$0xff]
    %v797 = vld [vmem:[#allocation4 + $0x88] sm:$0xff]
    %v798 = vld [vmem:[#allocation4 + $0x90] sm:$0xff]
    %v799 = vld [vmem:[#allocation4 + $0x98] sm:$0xff]
    %v800 = vld [vmem:[#allocation4 + $0xa0] sm:$0xff]
    %v801 = vld [vmem:[#allocation4 + $0xa8] sm:$0xff]
    %v802 = vld [vmem:[#allocation4 + $0xb0] sm:$0xff]
    %v803 = vld [vmem:[#allocation4 + $0xb8] sm:$0xff]
    %v804 = vld [vmem:[#allocation4 + $0xc0] sm:$0xff]
    %v805 = vld [vmem:[#allocation4 + $0xc8] sm:$0xff]
    %v806 = vld [vmem:[#allocation4 + $0xd0] sm:$0xff]
    %v807 = vld [vmem:[#allocation4 + $0xd8] sm:$0xff]
    %v808 = vld [vmem:[#allocation4 + $0xe0] sm:$0xff]
    %v809 = vld [vmem:[#allocation4 + $0xe8] sm:$0xff]
    %v810 = vld [vmem:[#allocation4 + $0xf0] sm:$0xff]
    %v811 = vld [vmem:[#allocation4 + $0xf8] sm:$0xff]
    %v812 = vld [vmem:[#allocation4 + $0x100] sm:$0xff]
    %v813 = vld [vmem:[#allocation4 + $0x108] sm:$0xff]
    %v814 = vld [vmem:[#allocation4 + $0x110] sm:$0xff]
    %v815 = vld [vmem:[#allocation4 + $0x118] sm:$0xff]
    %v816 = vld [vmem:[#allocation4 + $0x120] sm:$0xff]
    %v817 = vld [vmem:[#allocation4 + $0x128] sm:$0xff]
    %v818 = vld [vmem:[#allocation4 + $0x130] sm:$0xff]
    %v819 = vld [vmem:[#allocation4 + $0x138] sm:$0xff]
    %v820 = vld [vmem:[#allocation4 + $0x140] sm:$0xff]
    %v821 = vld [vmem:[#allocation4 + $0x148] sm:$0xff]
    %v822 = vld [vmem:[#allocation4 + $0x150] sm:$0xff]
    %v823 = vld [vmem:[#allocation4 + $0x158] sm:$0xff]
    %v824 = vld [vmem:[#allocation4 + $0x160] sm:$0xff]
    %v825 = vld [vmem:[#allocation4 + $0x168] sm:$0xff]
    %v826 = vld [vmem:[#allocation4 + $0x170] sm:$0xff]
    %v827 = vld [vmem:[#allocation4 + $0x178] sm:$0xff]
    %v828 = vld [vmem:[#allocation4 + $0x180] sm:$0xff]
    %v829 = vld [vmem:[#allocation4 + $0x188] sm:$0xff]
    %v830 = vld [vmem:[#allocation4 + $0x190] sm:$0xff]
    %v831 = vld [vmem:[#allocation4 + $0x198] sm:$0xff]
    %v832 = vld [vmem:[#allocation4 + $0x1a0] sm:$0xff]
    %v833 = vld [vmem:[#allocation4 + $0x1a8] sm:$0xff]
    %v834 = vld [vmem:[#allocation4 + $0x1b0] sm:$0xff]
    %v835 = vld [vmem:[#allocation4 + $0x1b8] sm:$0xff]
    %v836 = vld [vmem:[#allocation4 + $0x1c0] sm:$0xff]
    %v837 = vld [vmem:[#allocation4 + $0x1c8] sm:$0xff]
    %v838 = vld [vmem:[#allocation4 + $0x1d0] sm:$0xff]
    %v839 = vld [vmem:[#allocation4 + $0x1d8] sm:$0xff]
    %v840 = vld [vmem:[#allocation4 + $0x1e0] sm:$0xff]
    %v841 = vld [vmem:[#allocation4 + $0x1e8] sm:$0xff]
    %v842 = vld [vmem:[#allocation4 + $0x1f0] sm:$0xff]
    %v843 = vld [vmem:[#allocation4 + $0x1f8] sm:$0xff]
    %844 = vmatpush.msra.mxu0 %v840
    %845 = vmatpush.msra.mxu0 %v836
    %846 = vmatpush.msra.mxu0 %v832
    %847 = vmatpush.msra.mxu0 %v828
    %848 = vmatpush.msra.mxu0 %v824
    %849 = vmatpush.msra.mxu0 %v820
    %850 = vmatpush.msra.mxu0 %v816
    %851 = vmatpush.msra.mxu0 %v812
    %852 = vmatpush.msra.mxu0 %v808
    %853 = vmatpush.msra.mxu0 %v804
    %854 = vmatpush.msra.mxu0 %v800
    %855 = vmatpush.msra.mxu0 %v796
    %856 = vmatpush.msra.mxu0 %v792
    %857 = vmatpush.msra.mxu0 %v788
    %858 = vmatpush.msra.mxu0 %v784
    %859 = vmatpush.msra.mxu0 %v780
    %860 = vmatmul.f32.gmra.mxu0 %v770
    %v861 = vpop.f32.mrf.mxu0
    %v862 = vadd.f32 0.0, %v861
    %863 = vdwg.mxu0
    %864 = vmatpush.msra.mxu0 %v841
    %865 = vmatpush.msra.mxu0 %v837
    %866 = vmatpush.msra.mxu0 %v833
    %867 = vmatpush.msra.mxu0 %v829
    %868 = vmatpush.msra.mxu0 %v825
    %869 = vmatpush.msra.mxu0 %v821
    %870 = vmatpush.msra.mxu0 %v817
    %871 = vmatpush.msra.mxu0 %v813
    %872 = vmatpush.msra.mxu0 %v809
    %873 = vmatpush.msra.mxu0 %v805
    %874 = vmatpush.msra.mxu0 %v801
    %875 = vmatpush.msra.mxu0 %v797
    %876 = vmatpush.msra.mxu0 %v793
    %877 = vmatpush.msra.mxu0 %v789
    %878 = vmatpush.msra.mxu0 %v785
    %879 = vmatpush.msra.mxu0 %v781
    %880 = vmatmul.f32.gmra.mxu0 %v770
    %v881 = vpop.f32.mrf.mxu0
    %v882 = vadd.f32 0.0, %v881
    %883 = vdwg.mxu0
    %884 = vmatpush.msra.mxu0 %v842
    %885 = vmatpush.msra.mxu0 %v838
    %886 = vmatpush.msra.mxu0 %v834
    %887 = vmatpush.msra.mxu0 %v830
    %888 = vmatpush.msra.mxu0 %v826
    %889 = vmatpush.msra.mxu0 %v822
    %890 = vmatpush.msra.mxu0 %v818
    %891 = vmatpush.msra.mxu0 %v814
    %892 = vmatpush.msra.mxu0 %v810
    %893 = vmatpush.msra.mxu0 %v806
    %894 = vmatpush.msra.mxu0 %v802
    %895 = vmatpush.msra.mxu0 %v798
    %896 = vmatpush.msra.mxu0 %v794
    %897 = vmatpush.msra.mxu0 %v790
    %898 = vmatpush.msra.mxu0 %v786
    %899 = vmatpush.msra.mxu0 %v782
    %900 = vmatmul.f32.gmra.mxu0 %v770
    %v901 = vpop.f32.mrf.mxu0
    %v902 = vadd.f32 0.0, %v901
    %903 = vdwg.mxu0
    %904 = vmatpush.msra.mxu0 %v843
    %905 = vmatpush.msra.mxu0 %v839
    %906 = vmatpush.msra.mxu0 %v835
    %907 = vmatpush.msra.mxu0 %v831
    %908 = vmatpush.msra.mxu0 %v827
    %909 = vmatpush.msra.mxu0 %v823
    %910 = vmatpush.msra.mxu0 %v819
    %911 = vmatpush.msra.mxu0 %v815
    %912 = vmatpush.msra.mxu0 %v811
    %913 = vmatpush.msra.mxu0 %v807
    %914 = vmatpush.msra.mxu0 %v803
    %915 = vmatpush.msra.mxu0 %v799
    %916 = vmatpush.msra.mxu0 %v795
    %917 = vmatpush.msra.mxu0 %v791
    %918 = vmatpush.msra.mxu0 %v787
    %919 = vmatpush.msra.mxu0 %v783
    %920 = vmatmul.f32.gmra.mxu0 %v770
    %v921 = vpop.f32.mrf.mxu0
    %v922 = vadd.f32 0.0, %v921
    %923 = vdwg.mxu0
    %v924 = vadd.f32 %v776, %v862
    %v925 = vadd.f32 %v777, %v882
    %v926 = vadd.f32 %v778, %v902
    %v927 = vadd.f32 %v779, %v922
    %v928 = vxor.u32 %v924, 2147483648
    %v929 = vmul.f32 %v928, 1.442695
    %v930 = vpow.pop %v929
    %v931 = vadd.f32 %v930, 1.0
    %v932 = vrcp.pop %v931
    %v933 = vmul.f32 %v931, %v932
    %v934 = vsub.f32 1.0, %v933
    %v935 = vmul.f32 %v932, %v934
    %v936 = vadd.f32 %v932, %v935
    %vm937 = vweird.f32 %v931
    %vm938 = vweird.f32 %v932
    %vm939 = vmor %vm937, %vm938
    %v940 = vsel %vm939, %v932, %v936
    %v941 = vand.u32 2147483647, %v931
    %vm942 = vcmp.eq.f32.partialorder %v941, 8.507059e+37
    %v943 = vand.u32 %v931, 2147483648
    %v944 = vor.u32 1.1754944e-38, %v943
    %v945 = vsel %vm942, %v944, %v940
    %v946 = vmul.f32 1.0, %v945
    %v947 = vxor.u32 %v925, 2147483648
    %v948 = vmul.f32 %v947, 1.442695
    %v949 = vpow.pop %v948
    %v950 = vadd.f32 %v949, 1.0
    %v951 = vrcp.pop %v950
    %v952 = vmul.f32 %v950, %v951
    %v953 = vsub.f32 1.0, %v952
    %v954 = vmul.f32 %v951, %v953
    %v955 = vadd.f32 %v951, %v954
    %vm956 = vweird.f32 %v950
    %vm957 = vweird.f32 %v951
    %vm958 = vmor %vm956, %vm957
    %v959 = vsel %vm958, %v951, %v955
    %v960 = vand.u32 2147483647, %v950
    %vm961 = vcmp.eq.f32.partialorder %v960, 8.507059e+37
    %v962 = vand.u32 %v950, 2147483648
    %v963 = vor.u32 1.1754944e-38, %v962
    %v964 = vsel %vm961, %v963, %v959
    %v965 = vmul.f32 1.0, %v964
    %v966 = vtanh.pop %v926
    %v967 = vxor.u32 %v927, 2147483648
    %v968 = vmul.f32 %v967, 1.442695
    %v969 = vpow.pop %v968
    %v970 = vadd.f32 %v969, 1.0
    %v971 = vrcp.pop %v970
    %v972 = vmul.f32 %v970, %v971
    %v973 = vsub.f32 1.0, %v972
    %v974 = vmul.f32 %v971, %v973
    %v975 = vadd.f32 %v971, %v974
    %vm976 = vweird.f32 %v970
    %vm977 = vweird.f32 %v971
    %vm978 = vmor %vm976, %vm977
    %v979 = vsel %vm978, %v971, %v975
    %v980 = vand.u32 2147483647, %v970
    %vm981 = vcmp.eq.f32.partialorder %v980, 8.507059e+37
    %v982 = vand.u32 %v970, 2147483648
    %v983 = vor.u32 1.1754944e-38, %v982
    %v984 = vsel %vm981, %v983, %v979
    %v985 = vmul.f32 1.0, %v984
    %v986 = vmul.f32 %v965, %v768
    %v987 = vmul.f32 %v946, %v966
    %v988 = vadd.f32 %v986, %v987
    %v989 = vtanh.pop %v988
    %v990 = vmul.f32 %v985, %v989
    %s991 = scalar_lea.vmem [#allocation3], 16
    %992 = vst [vmem:[%s991] sm:$0xff] %v990
    %s993 = smul.u32 3, 4
    %s994 = smul.addr %s993, 8
    %s995 = scalar_lea.vmem [#allocation2], %s994
    %v996 = vld [vmem:[%s995] sm:$0xff]
    %v997 = vld [vmem:[%s995 + $0x8] sm:$0xff]
    %v998 = vld [vmem:[%s995 + $0x10] sm:$0xff]
    %v999 = vld [vmem:[%s995 + $0x18] sm:$0xff]
    %v1000 = vld [vmem:[#allocation4] sm:$0xff]
    %v1001 = vld [vmem:[#allocation4 + $0x8] sm:$0xff]
    %v1002 = vld [vmem:[#allocation4 + $0x10] sm:$0xff]
    %v1003 = vld [vmem:[#allocation4 + $0x18] sm:$0xff]
    %v1004 = vld [vmem:[#allocation4 + $0x20] sm:$0xff]
    %v1005 = vld [vmem:[#allocation4 + $0x28] sm:$0xff]
    %v1006 = vld [vmem:[#allocation4 + $0x30] sm:$0xff]
    %v1007 = vld [vmem:[#allocation4 + $0x38] sm:$0xff]
    %v1008 = vld [vmem:[#allocation4 + $0x40] sm:$0xff]
    %v1009 = vld [vmem:[#allocation4 + $0x48] sm:$0xff]
    %v1010 = vld [vmem:[#allocation4 + $0x50] sm:$0xff]
    %v1011 = vld [vmem:[#allocation4 + $0x58] sm:$0xff]
    %v1012 = vld [vmem:[#allocation4 + $0x60] sm:$0xff]
    %v1013 = vld [vmem:[#allocation4 + $0x68] sm:$0xff]
    %v1014 = vld [vmem:[#allocation4 + $0x70] sm:$0xff]
    %v1015 = vld [vmem:[#allocation4 + $0x78] sm:$0xff]
    %v1016 = vld [vmem:[#allocation4 + $0x80] sm:$0xff]
    %v1017 = vld [vmem:[#allocation4 + $0x88] sm:$0xff]
    %v1018 = vld [vmem:[#allocation4 + $0x90] sm:$0xff]
    %v1019 = vld [vmem:[#allocation4 + $0x98] sm:$0xff]
    %v1020 = vld [vmem:[#allocation4 + $0xa0] sm:$0xff]
    %v1021 = vld [vmem:[#allocation4 + $0xa8] sm:$0xff]
    %v1022 = vld [vmem:[#allocation4 + $0xb0] sm:$0xff]
    %v1023 = vld [vmem:[#allocation4 + $0xb8] sm:$0xff]
    %v1024 = vld [vmem:[#allocation4 + $0xc0] sm:$0xff]
    %v1025 = vld [vmem:[#allocation4 + $0xc8] sm:$0xff]
    %v1026 = vld [vmem:[#allocation4 + $0xd0] sm:$0xff]
    %v1027 = vld [vmem:[#allocation4 + $0xd8] sm:$0xff]
    %v1028 = vld [vmem:[#allocation4 + $0xe0] sm:$0xff]
    %v1029 = vld [vmem:[#allocation4 + $0xe8] sm:$0xff]
    %v1030 = vld [vmem:[#allocation4 + $0xf0] sm:$0xff]
    %v1031 = vld [vmem:[#allocation4 + $0xf8] sm:$0xff]
    %v1032 = vld [vmem:[#allocation4 + $0x100] sm:$0xff]
    %v1033 = vld [vmem:[#allocation4 + $0x108] sm:$0xff]
    %v1034 = vld [vmem:[#allocation4 + $0x110] sm:$0xff]
    %v1035 = vld [vmem:[#allocation4 + $0x118] sm:$0xff]
    %v1036 = vld [vmem:[#allocation4 + $0x120] sm:$0xff]
    %v1037 = vld [vmem:[#allocation4 + $0x128] sm:$0xff]
    %v1038 = vld [vmem:[#allocation4 + $0x130] sm:$0xff]
    %v1039 = vld [vmem:[#allocation4 + $0x138] sm:$0xff]
    %v1040 = vld [vmem:[#allocation4 + $0x140] sm:$0xff]
    %v1041 = vld [vmem:[#allocation4 + $0x148] sm:$0xff]
    %v1042 = vld [vmem:[#allocation4 + $0x150] sm:$0xff]
    %v1043 = vld [vmem:[#allocation4 + $0x158] sm:$0xff]
    %v1044 = vld [vmem:[#allocation4 + $0x160] sm:$0xff]
    %v1045 = vld [vmem:[#allocation4 + $0x168] sm:$0xff]
    %v1046 = vld [vmem:[#allocation4 + $0x170] sm:$0xff]
    %v1047 = vld [vmem:[#allocation4 + $0x178] sm:$0xff]
    %v1048 = vld [vmem:[#allocation4 + $0x180] sm:$0xff]
    %v1049 = vld [vmem:[#allocation4 + $0x188] sm:$0xff]
    %v1050 = vld [vmem:[#allocation4 + $0x190] sm:$0xff]
    %v1051 = vld [vmem:[#allocation4 + $0x198] sm:$0xff]
    %v1052 = vld [vmem:[#allocation4 + $0x1a0] sm:$0xff]
    %v1053 = vld [vmem:[#allocation4 + $0x1a8] sm:$0xff]
    %v1054 = vld [vmem:[#allocation4 + $0x1b0] sm:$0xff]
    %v1055 = vld [vmem:[#allocation4 + $0x1b8] sm:$0xff]
    %v1056 = vld [vmem:[#allocation4 + $0x1c0] sm:$0xff]
    %v1057 = vld [vmem:[#allocation4 + $0x1c8] sm:$0xff]
    %v1058 = vld [vmem:[#allocation4 + $0x1d0] sm:$0xff]
    %v1059 = vld [vmem:[#allocation4 + $0x1d8] sm:$0xff]
    %v1060 = vld [vmem:[#allocation4 + $0x1e0] sm:$0xff]
    %v1061 = vld [vmem:[#allocation4 + $0x1e8] sm:$0xff]
    %v1062 = vld [vmem:[#allocation4 + $0x1f0] sm:$0xff]
    %v1063 = vld [vmem:[#allocation4 + $0x1f8] sm:$0xff]
    %1064 = vmatpush.msra.mxu0 %v1060
    %1065 = vmatpush.msra.mxu0 %v1056
    %1066 = vmatpush.msra.mxu0 %v1052
    %1067 = vmatpush.msra.mxu0 %v1048
    %1068 = vmatpush.msra.mxu0 %v1044
    %1069 = vmatpush.msra.mxu0 %v1040
    %1070 = vmatpush.msra.mxu0 %v1036
    %1071 = vmatpush.msra.mxu0 %v1032
    %1072 = vmatpush.msra.mxu0 %v1028
    %1073 = vmatpush.msra.mxu0 %v1024
    %1074 = vmatpush.msra.mxu0 %v1020
    %1075 = vmatpush.msra.mxu0 %v1016
    %1076 = vmatpush.msra.mxu0 %v1012
    %1077 = vmatpush.msra.mxu0 %v1008
    %1078 = vmatpush.msra.mxu0 %v1004
    %1079 = vmatpush.msra.mxu0 %v1000
    %1080 = vmatmul.f32.gmra.mxu0 %v990
    %v1081 = vpop.f32.mrf.mxu0
    %v1082 = vadd.f32 0.0, %v1081
    %1083 = vdwg.mxu0
    %1084 = vmatpush.msra.mxu0 %v1061
    %1085 = vmatpush.msra.mxu0 %v1057
    %1086 = vmatpush.msra.mxu0 %v1053
    %1087 = vmatpush.msra.mxu0 %v1049
    %1088 = vmatpush.msra.mxu0 %v1045
    %1089 = vmatpush.msra.mxu0 %v1041
    %1090 = vmatpush.msra.mxu0 %v1037
    %1091 = vmatpush.msra.mxu0 %v1033
    %1092 = vmatpush.msra.mxu0 %v1029
    %1093 = vmatpush.msra.mxu0 %v1025
    %1094 = vmatpush.msra.mxu0 %v1021
    %1095 = vmatpush.msra.mxu0 %v1017
    %1096 = vmatpush.msra.mxu0 %v1013
    %1097 = vmatpush.msra.mxu0 %v1009
    %1098 = vmatpush.msra.mxu0 %v1005
    %1099 = vmatpush.msra.mxu0 %v1001
    %1100 = vmatmul.f32.gmra.mxu0 %v990
    %v1101 = vpop.f32.mrf.mxu0
    %v1102 = vadd.f32 0.0, %v1101
    %1103 = vdwg.mxu0
    %1104 = vmatpush.msra.mxu0 %v1062
    %1105 = vmatpush.msra.mxu0 %v1058
    %1106 = vmatpush.msra.mxu0 %v1054
    %1107 = vmatpush.msra.mxu0 %v1050
    %1108 = vmatpush.msra.mxu0 %v1046
    %1109 = vmatpush.msra.mxu0 %v1042
    %1110 = vmatpush.msra.mxu0 %v1038
    %1111 = vmatpush.msra.mxu0 %v1034
    %1112 = vmatpush.msra.mxu0 %v1030
    %1113 = vmatpush.msra.mxu0 %v1026
    %1114 = vmatpush.msra.mxu0 %v1022
    %1115 = vmatpush.msra.mxu0 %v1018
    %1116 = vmatpush.msra.mxu0 %v1014
    %1117 = vmatpush.msra.mxu0 %v1010
    %1118 = vmatpush.msra.mxu0 %v1006
    %1119 = vmatpush.msra.mxu0 %v1002
    %1120 = vmatmul.f32.gmra.mxu0 %v990
    %v1121 = vpop.f32.mrf.mxu0
    %v1122 = vadd.f32 0.0, %v1121
    %1123 = vdwg.mxu0
    %1124 = vmatpush.msra.mxu0 %v1063
    %1125 = vmatpush.msra.mxu0 %v1059
    %1126 = vmatpush.msra.mxu0 %v1055
    %1127 = vmatpush.msra.mxu0 %v1051
    %1128 = vmatpush.msra.mxu0 %v1047
    %1129 = vmatpush.msra.mxu0 %v1043
    %1130 = vmatpush.msra.mxu0 %v1039
    %1131 = vmatpush.msra.mxu0 %v1035
    %1132 = vmatpush.msra.mxu0 %v1031
    %1133 = vmatpush.msra.mxu0 %v1027
    %1134 = vmatpush.msra.mxu0 %v1023
    %1135 = vmatpush.msra.mxu0 %v1019
    %1136 = vmatpush.msra.mxu0 %v1015
    %1137 = vmatpush.msra.mxu0 %v1011
    %1138 = vmatpush.msra.mxu0 %v1007
    %1139 = vmatpush.msra.mxu0 %v1003
    %1140 = vmatmul.f32.gmra.mxu0 %v990
    %v1141 = vpop.f32.mrf.mxu0
    %v1142 = vadd.f32 0.0, %v1141
    %1143 = vdwg.mxu0
    %v1144 = vadd.f32 %v996, %v1082
    %v1145 = vadd.f32 %v997, %v1102
    %v1146 = vadd.f32 %v998, %v1122
    %v1147 = vadd.f32 %v999, %v1142
    %v1148 = vxor.u32 %v1144, 2147483648
    %v1149 = vmul.f32 %v1148, 1.442695
    %v1150 = vpow.pop %v1149
    %v1151 = vadd.f32 %v1150, 1.0
    %v1152 = vrcp.pop %v1151
    %v1153 = vmul.f32 %v1151, %v1152
    %v1154 = vsub.f32 1.0, %v1153
    %v1155 = vmul.f32 %v1152, %v1154
    %v1156 = vadd.f32 %v1152, %v1155
    %vm1157 = vweird.f32 %v1151
    %vm1158 = vweird.f32 %v1152
    %vm1159 = vmor %vm1157, %vm1158
    %v1160 = vsel %vm1159, %v1152, %v1156
    %v1161 = vand.u32 2147483647, %v1151
    %vm1162 = vcmp.eq.f32.partialorder %v1161, 8.507059e+37
    %v1163 = vand.u32 %v1151, 2147483648
    %v1164 = vor.u32 1.1754944e-38, %v1163
    %v1165 = vsel %vm1162, %v1164, %v1160
    %v1166 = vmul.f32 1.0, %v1165
    %v1167 = vxor.u32 %v1145, 2147483648
    %v1168 = vmul.f32 %v1167, 1.442695
    %v1169 = vpow.pop %v1168
    %v1170 = vadd.f32 %v1169, 1.0
    %v1171 = vrcp.pop %v1170
    %v1172 = vmul.f32 %v1170, %v1171
    %v1173 = vsub.f32 1.0, %v1172
    %v1174 = vmul.f32 %v1171, %v1173
    %v1175 = vadd.f32 %v1171, %v1174
    %vm1176 = vweird.f32 %v1170
    %vm1177 = vweird.f32 %v1171
    %vm1178 = vmor %vm1176, %vm1177
    %v1179 = vsel %vm1178, %v1171, %v1175
    %v1180 = vand.u32 2147483647, %v1170
    %vm1181 = vcmp.eq.f32.partialorder %v1180, 8.507059e+37
    %v1182 = vand.u32 %v1170, 2147483648
    %v1183 = vor.u32 1.1754944e-38, %v1182
    %v1184 = vsel %vm1181, %v1183, %v1179
    %v1185 = vmul.f32 1.0, %v1184
    %v1186 = vtanh.pop %v1146
    %v1187 = vxor.u32 %v1147, 2147483648
    %v1188 = vmul.f32 %v1187, 1.442695
    %v1189 = vpow.pop %v1188
    %v1190 = vadd.f32 %v1189, 1.0
    %v1191 = vrcp.pop %v1190
    %v1192 = vmul.f32 %v1190, %v1191
    %v1193 = vsub.f32 1.0, %v1192
    %v1194 = vmul.f32 %v1191, %v1193
    %v1195 = vadd.f32 %v1191, %v1194
    %vm1196 = vweird.f32 %v1190
    %vm1197 = vweird.f32 %v1191
    %vm1198 = vmor %vm1196, %vm1197
    %v1199 = vsel %vm1198, %v1191, %v1195
    %v1200 = vand.u32 2147483647, %v1190
    %vm1201 = vcmp.eq.f32.partialorder %v1200, 8.507059e+37
    %v1202 = vand.u32 %v1190, 2147483648
    %v1203 = vor.u32 1.1754944e-38, %v1202
    %v1204 = vsel %vm1201, %v1203, %v1199
    %v1205 = vmul.f32 1.0, %v1204
    %v1206 = vmul.f32 %v1185, %v988
    %v1207 = vmul.f32 %v1166, %v1186
    %v1208 = vadd.f32 %v1206, %v1207
    %v1209 = vtanh.pop %v1208
    %v1210 = vmul.f32 %v1205, %v1209
    %s1211 = scalar_lea.vmem [#allocation3], 24
    %1212 = vst [vmem:[%s1211] sm:$0xff] %v1210
    %s1213 = smul.u32 4, 4
    %s1214 = smul.addr %s1213, 8
    %s1215 = scalar_lea.vmem [#allocation2], %s1214
    %v1216 = vld [vmem:[%s1215] sm:$0xff]
    %v1217 = vld [vmem:[%s1215 + $0x8] sm:$0xff]
    %v1218 = vld [vmem:[%s1215 + $0x10] sm:$0xff]
    %v1219 = vld [vmem:[%s1215 + $0x18] sm:$0xff]
    %v1220 = vld [vmem:[#allocation4] sm:$0xff]
    %v1221 = vld [vmem:[#allocation4 + $0x8] sm:$0xff]
    %v1222 = vld [vmem:[#allocation4 + $0x10] sm:$0xff]
    %v1223 = vld [vmem:[#allocation4 + $0x18] sm:$0xff]
    %v1224 = vld [vmem:[#allocation4 + $0x20] sm:$0xff]
    %v1225 = vld [vmem:[#allocation4 + $0x28] sm:$0xff]
    %v1226 = vld [vmem:[#allocation4 + $0x30] sm:$0xff]
    %v1227 = vld [vmem:[#allocation4 + $0x38] sm:$0xff]
    %v1228 = vld [vmem:[#allocation4 + $0x40] sm:$0xff]
    %v1229 = vld [vmem:[#allocation4 + $0x48] sm:$0xff]
    %v1230 = vld [vmem:[#allocation4 + $0x50] sm:$0xff]
    %v1231 = vld [vmem:[#allocation4 + $0x58] sm:$0xff]
    %v1232 = vld [vmem:[#allocation4 + $0x60] sm:$0xff]
    %v1233 = vld [vmem:[#allocation4 + $0x68] sm:$0xff]
    %v1234 = vld [vmem:[#allocation4 + $0x70] sm:$0xff]
    %v1235 = vld [vmem:[#allocation4 + $0x78] sm:$0xff]
    %v1236 = vld [vmem:[#allocation4 + $0x80] sm:$0xff]
    %v1237 = vld [vmem:[#allocation4 + $0x88] sm:$0xff]
    %v1238 = vld [vmem:[#allocation4 + $0x90] sm:$0xff]
    %v1239 = vld [vmem:[#allocation4 + $0x98] sm:$0xff]
    %v1240 = vld [vmem:[#allocation4 + $0xa0] sm:$0xff]
    %v1241 = vld [vmem:[#allocation4 + $0xa8] sm:$0xff]
    %v1242 = vld [vmem:[#allocation4 + $0xb0] sm:$0xff]
    %v1243 = vld [vmem:[#allocation4 + $0xb8] sm:$0xff]
    %v1244 = vld [vmem:[#allocation4 + $0xc0] sm:$0xff]
    %v1245 = vld [vmem:[#allocation4 + $0xc8] sm:$0xff]
    %v1246 = vld [vmem:[#allocation4 + $0xd0] sm:$0xff]
    %v1247 = vld [vmem:[#allocation4 + $0xd8] sm:$0xff]
    %v1248 = vld [vmem:[#allocation4 + $0xe0] sm:$0xff]
    %v1249 = vld [vmem:[#allocation4 + $0xe8] sm:$0xff]
    %v1250 = vld [vmem:[#allocation4 + $0xf0] sm:$0xff]
    %v1251 = vld [vmem:[#allocation4 + $0xf8] sm:$0xff]
    %v1252 = vld [vmem:[#allocation4 + $0x100] sm:$0xff]
    %v1253 = vld [vmem:[#allocation4 + $0x108] sm:$0xff]
    %v1254 = vld [vmem:[#allocation4 + $0x110] sm:$0xff]
    %v1255 = vld [vmem:[#allocation4 + $0x118] sm:$0xff]
    %v1256 = vld [vmem:[#allocation4 + $0x120] sm:$0xff]
    %v1257 = vld [vmem:[#allocation4 + $0x128] sm:$0xff]
    %v1258 = vld [vmem:[#allocation4 + $0x130] sm:$0xff]
    %v1259 = vld [vmem:[#allocation4 + $0x138] sm:$0xff]
    %v1260 = vld [vmem:[#allocation4 + $0x140] sm:$0xff]
    %v1261 = vld [vmem:[#allocation4 + $0x148] sm:$0xff]
    %v1262 = vld [vmem:[#allocation4 + $0x150] sm:$0xff]
    %v1263 = vld [vmem:[#allocation4 + $0x158] sm:$0xff]
    %v1264 = vld [vmem:[#allocation4 + $0x160] sm:$0xff]
    %v1265 = vld [vmem:[#allocation4 + $0x168] sm:$0xff]
    %v1266 = vld [vmem:[#allocation4 + $0x170] sm:$0xff]
    %v1267 = vld [vmem:[#allocation4 + $0x178] sm:$0xff]
    %v1268 = vld [vmem:[#allocation4 + $0x180] sm:$0xff]
    %v1269 = vld [vmem:[#allocation4 + $0x188] sm:$0xff]
    %v1270 = vld [vmem:[#allocation4 + $0x190] sm:$0xff]
    %v1271 = vld [vmem:[#allocation4 + $0x198] sm:$0xff]
    %v1272 = vld [vmem:[#allocation4 + $0x1a0] sm:$0xff]
    %v1273 = vld [vmem:[#allocation4 + $0x1a8] sm:$0xff]
    %v1274 = vld [vmem:[#allocation4 + $0x1b0] sm:$0xff]
    %v1275 = vld [vmem:[#allocation4 + $0x1b8] sm:$0xff]
    %v1276 = vld [vmem:[#allocation4 + $0x1c0] sm:$0xff]
    %v1277 = vld [vmem:[#allocation4 + $0x1c8] sm:$0xff]
    %v1278 = vld [vmem:[#allocation4 + $0x1d0] sm:$0xff]
    %v1279 = vld [vmem:[#allocation4 + $0x1d8] sm:$0xff]
    %v1280 = vld [vmem:[#allocation4 + $0x1e0] sm:$0xff]
    %v1281 = vld [vmem:[#allocation4 + $0x1e8] sm:$0xff]
    %v1282 = vld [vmem:[#allocation4 + $0x1f0] sm:$0xff]
    %v1283 = vld [vmem:[#allocation4 + $0x1f8] sm:$0xff]
    %1284 = vmatpush.msra.mxu0 %v1280
    %1285 = vmatpush.msra.mxu0 %v1276
    %1286 = vmatpush.msra.mxu0 %v1272
    %1287 = vmatpush.msra.mxu0 %v1268
    %1288 = vmatpush.msra.mxu0 %v1264
    %1289 = vmatpush.msra.mxu0 %v1260
    %1290 = vmatpush.msra.mxu0 %v1256
    %1291 = vmatpush.msra.mxu0 %v1252
    %1292 = vmatpush.msra.mxu0 %v1248
    %1293 = vmatpush.msra.mxu0 %v1244
    %1294 = vmatpush.msra.mxu0 %v1240
    %1295 = vmatpush.msra.mxu0 %v1236
    %1296 = vmatpush.msra.mxu0 %v1232
    %1297 = vmatpush.msra.mxu0 %v1228
    %1298 = vmatpush.msra.mxu0 %v1224
    %1299 = vmatpush.msra.mxu0 %v1220
    %1300 = vmatmul.f32.gmra.mxu0 %v1210
    %v1301 = vpop.f32.mrf.mxu0
    %v1302 = vadd.f32 0.0, %v1301
    %1303 = vdwg.mxu0
    %1304 = vmatpush.msra.mxu0 %v1281
    %1305 = vmatpush.msra.mxu0 %v1277
    %1306 = vmatpush.msra.mxu0 %v1273
    %1307 = vmatpush.msra.mxu0 %v1269
    %1308 = vmatpush.msra.mxu0 %v1265
    %1309 = vmatpush.msra.mxu0 %v1261
    %1310 = vmatpush.msra.mxu0 %v1257
    %1311 = vmatpush.msra.mxu0 %v1253
    %1312 = vmatpush.msra.mxu0 %v1249
    %1313 = vmatpush.msra.mxu0 %v1245
    %1314 = vmatpush.msra.mxu0 %v1241
    %1315 = vmatpush.msra.mxu0 %v1237
    %1316 = vmatpush.msra.mxu0 %v1233
    %1317 = vmatpush.msra.mxu0 %v1229
    %1318 = vmatpush.msra.mxu0 %v1225
    %1319 = vmatpush.msra.mxu0 %v1221
    %1320 = vmatmul.f32.gmra.mxu0 %v1210
    %v1321 = vpop.f32.mrf.mxu0
    %v1322 = vadd.f32 0.0, %v1321
    %1323 = vdwg.mxu0
    %1324 = vmatpush.msra.mxu0 %v1282
    %1325 = vmatpush.msra.mxu0 %v1278
    %1326 = vmatpush.msra.mxu0 %v1274
    %1327 = vmatpush.msra.mxu0 %v1270
    %1328 = vmatpush.msra.mxu0 %v1266
    %1329 = vmatpush.msra.mxu0 %v1262
    %1330 = vmatpush.msra.mxu0 %v1258
    %1331 = vmatpush.msra.mxu0 %v1254
    %1332 = vmatpush.msra.mxu0 %v1250
    %1333 = vmatpush.msra.mxu0 %v1246
    %1334 = vmatpush.msra.mxu0 %v1242
    %1335 = vmatpush.msra.mxu0 %v1238
    %1336 = vmatpush.msra.mxu0 %v1234
    %1337 = vmatpush.msra.mxu0 %v1230
    %1338 = vmatpush.msra.mxu0 %v1226
    %1339 = vmatpush.msra.mxu0 %v1222
    %1340 = vmatmul.f32.gmra.mxu0 %v1210
    %v1341 = vpop.f32.mrf.mxu0
    %v1342 = vadd.f32 0.0, %v1341
    %1343 = vdwg.mxu0
    %1344 = vmatpush.msra.mxu0 %v1283
    %1345 = vmatpush.msra.mxu0 %v1279
    %1346 = vmatpush.msra.mxu0 %v1275
    %1347 = vmatpush.msra.mxu0 %v1271
    %1348 = vmatpush.msra.mxu0 %v1267
    %1349 = vmatpush.msra.mxu0 %v1263
    %1350 = vmatpush.msra.mxu0 %v1259
    %1351 = vmatpush.msra.mxu0 %v1255
    %1352 = vmatpush.msra.mxu0 %v1251
    %1353 = vmatpush.msra.mxu0 %v1247
    %1354 = vmatpush.msra.mxu0 %v1243
    %1355 = vmatpush.msra.mxu0 %v1239
    %1356 = vmatpush.msra.mxu0 %v1235
    %1357 = vmatpush.msra.mxu0 %v1231
    %1358 = vmatpush.msra.mxu0 %v1227
    %1359 = vmatpush.msra.mxu0 %v1223
    %1360 = vmatmul.f32.gmra.mxu0 %v1210
    %v1361 = vpop.f32.mrf.mxu0
    %v1362 = vadd.f32 0.0, %v1361
    %1363 = vdwg.mxu0
    %v1364 = vadd.f32 %v1216, %v1302
    %v1365 = vadd.f32 %v1217, %v1322
    %v1366 = vadd.f32 %v1218, %v1342
    %v1367 = vadd.f32 %v1219, %v1362
    %v1368 = vxor.u32 %v1364, 2147483648
    %v1369 = vmul.f32 %v1368, 1.442695
    %v1370 = vpow.pop %v1369
    %v1371 = vadd.f32 %v1370, 1.0
    %v1372 = vrcp.pop %v1371
    %v1373 = vmul.f32 %v1371, %v1372
    %v1374 = vsub.f32 1.0, %v1373
    %v1375 = vmul.f32 %v1372, %v1374
    %v1376 = vadd.f32 %v1372, %v1375
    %vm1377 = vweird.f32 %v1371
    %vm1378 = vweird.f32 %v1372
    %vm1379 = vmor %vm1377, %vm1378
    %v1380 = vsel %vm1379, %v1372, %v1376
    %v1381 = vand.u32 2147483647, %v1371
    %vm1382 = vcmp.eq.f32.partialorder %v1381, 8.507059e+37
    %v1383 = vand.u32 %v1371, 2147483648
    %v1384 = vor.u32 1.1754944e-38, %v1383
    %v1385 = vsel %vm1382, %v1384, %v1380
    %v1386 = vmul.f32 1.0, %v1385
    %v1387 = vxor.u32 %v1365, 2147483648
    %v1388 = vmul.f32 %v1387, 1.442695
    %v1389 = vpow.pop %v1388
    %v1390 = vadd.f32 %v1389, 1.0
    %v1391 = vrcp.pop %v1390
    %v1392 = vmul.f32 %v1390, %v1391
    %v1393 = vsub.f32 1.0, %v1392
    %v1394 = vmul.f32 %v1391, %v1393
    %v1395 = vadd.f32 %v1391, %v1394
    %vm1396 = vweird.f32 %v1390
    %vm1397 = vweird.f32 %v1391
    %vm1398 = vmor %vm1396, %vm1397
    %v1399 = vsel %vm1398, %v1391, %v1395
    %v1400 = vand.u32 2147483647, %v1390
    %vm1401 = vcmp.eq.f32.partialorder %v1400, 8.507059e+37
    %v1402 = vand.u32 %v1390, 2147483648
    %v1403 = vor.u32 1.1754944e-38, %v1402
    %v1404 = vsel %vm1401, %v1403, %v1399
    %v1405 = vmul.f32 1.0, %v1404
    %v1406 = vtanh.pop %v1366
    %v1407 = vxor.u32 %v1367, 2147483648
    %v1408 = vmul.f32 %v1407, 1.442695
    %v1409 = vpow.pop %v1408
    %v1410 = vadd.f32 %v1409, 1.0
    %v1411 = vrcp.pop %v1410
    %v1412 = vmul.f32 %v1410, %v1411
    %v1413 = vsub.f32 1.0, %v1412
    %v1414 = vmul.f32 %v1411, %v1413
    %v1415 = vadd.f32 %v1411, %v1414
    %vm1416 = vweird.f32 %v1410
    %vm1417 = vweird.f32 %v1411
    %vm1418 = vmor %vm1416, %vm1417
    %v1419 = vsel %vm1418, %v1411, %v1415
    %v1420 = vand.u32 2147483647, %v1410
    %vm1421 = vcmp.eq.f32.partialorder %v1420, 8.507059e+37
    %v1422 = vand.u32 %v1410, 2147483648
    %v1423 = vor.u32 1.1754944e-38, %v1422
    %v1424 = vsel %vm1421, %v1423, %v1419
    %v1425 = vmul.f32 1.0, %v1424
    %v1426 = vmul.f32 %v1405, %v1208
    %v1427 = vmul.f32 %v1386, %v1406
    %v1428 = vadd.f32 %v1426, %v1427
    %v1429 = vtanh.pop %v1428
    %v1430 = vmul.f32 %v1425, %v1429
    %s1431 = scalar_lea.vmem [#allocation3], 32
    %1432 = vst [vmem:[%s1431] sm:$0xff] %v1430
    %s1433 = smul.u32 5, 4
    %s1434 = smul.addr %s1433, 8
    %s1435 = scalar_lea.vmem [#allocation2], %s1434
    %v1436 = vld [vmem:[%s1435] sm:$0xff]
    %v1437 = vld [vmem:[%s1435 + $0x8] sm:$0xff]
    %v1438 = vld [vmem:[%s1435 + $0x10] sm:$0xff]
    %v1439 = vld [vmem:[%s1435 + $0x18] sm:$0xff]
    %v1440 = vld [vmem:[#allocation4] sm:$0xff]
    %v1441 = vld [vmem:[#allocation4 + $0x8] sm:$0xff]
    %v1442 = vld [vmem:[#allocation4 + $0x10] sm:$0xff]
    %v1443 = vld [vmem:[#allocation4 + $0x18] sm:$0xff]
    %v1444 = vld [vmem:[#allocation4 + $0x20] sm:$0xff]
    %v1445 = vld [vmem:[#allocation4 + $0x28] sm:$0xff]
    %v1446 = vld [vmem:[#allocation4 + $0x30] sm:$0xff]
    %v1447 = vld [vmem:[#allocation4 + $0x38] sm:$0xff]
    %v1448 = vld [vmem:[#allocation4 + $0x40] sm:$0xff]
    %v1449 = vld [vmem:[#allocation4 + $0x48] sm:$0xff]
    %v1450 = vld [vmem:[#allocation4 + $0x50] sm:$0xff]
    %v1451 = vld [vmem:[#allocation4 + $0x58] sm:$0xff]
    %v1452 = vld [vmem:[#allocation4 + $0x60] sm:$0xff]
    %v1453 = vld [vmem:[#allocation4 + $0x68] sm:$0xff]
    %v1454 = vld [vmem:[#allocation4 + $0x70] sm:$0xff]
    %v1455 = vld [vmem:[#allocation4 + $0x78] sm:$0xff]
    %v1456 = vld [vmem:[#allocation4 + $0x80] sm:$0xff]
    %v1457 = vld [vmem:[#allocation4 + $0x88] sm:$0xff]
    %v1458 = vld [vmem:[#allocation4 + $0x90] sm:$0xff]
    %v1459 = vld [vmem:[#allocation4 + $0x98] sm:$0xff]
    %v1460 = vld [vmem:[#allocation4 + $0xa0] sm:$0xff]
    %v1461 = vld [vmem:[#allocation4 + $0xa8] sm:$0xff]
    %v1462 = vld [vmem:[#allocation4 + $0xb0] sm:$0xff]
    %v1463 = vld [vmem:[#allocation4 + $0xb8] sm:$0xff]
    %v1464 = vld [vmem:[#allocation4 + $0xc0] sm:$0xff]
    %v1465 = vld [vmem:[#allocation4 + $0xc8] sm:$0xff]
    %v1466 = vld [vmem:[#allocation4 + $0xd0] sm:$0xff]
    %v1467 = vld [vmem:[#allocation4 + $0xd8] sm:$0xff]
    %v1468 = vld [vmem:[#allocation4 + $0xe0] sm:$0xff]
    %v1469 = vld [vmem:[#allocation4 + $0xe8] sm:$0xff]
    %v1470 = vld [vmem:[#allocation4 + $0xf0] sm:$0xff]
    %v1471 = vld [vmem:[#allocation4 + $0xf8] sm:$0xff]
    %v1472 = vld [vmem:[#allocation4 + $0x100] sm:$0xff]
    %v1473 = vld [vmem:[#allocation4 + $0x108] sm:$0xff]
    %v1474 = vld [vmem:[#allocation4 + $0x110] sm:$0xff]
    %v1475 = vld [vmem:[#allocation4 + $0x118] sm:$0xff]
    %v1476 = vld [vmem:[#allocation4 + $0x120] sm:$0xff]
    %v1477 = vld [vmem:[#allocation4 + $0x128] sm:$0xff]
    %v1478 = vld [vmem:[#allocation4 + $0x130] sm:$0xff]
    %v1479 = vld [vmem:[#allocation4 + $0x138] sm:$0xff]
    %v1480 = vld [vmem:[#allocation4 + $0x140] sm:$0xff]
    %v1481 = vld [vmem:[#allocation4 + $0x148] sm:$0xff]
    %v1482 = vld [vmem:[#allocation4 + $0x150] sm:$0xff]
    %v1483 = vld [vmem:[#allocation4 + $0x158] sm:$0xff]
    %v1484 = vld [vmem:[#allocation4 + $0x160] sm:$0xff]
    %v1485 = vld [vmem:[#allocation4 + $0x168] sm:$0xff]
    %v1486 = vld [vmem:[#allocation4 + $0x170] sm:$0xff]
    %v1487 = vld [vmem:[#allocation4 + $0x178] sm:$0xff]
    %v1488 = vld [vmem:[#allocation4 + $0x180] sm:$0xff]
    %v1489 = vld [vmem:[#allocation4 + $0x188] sm:$0xff]
    %v1490 = vld [vmem:[#allocation4 + $0x190] sm:$0xff]
    %v1491 = vld [vmem:[#allocation4 + $0x198] sm:$0xff]
    %v1492 = vld [vmem:[#allocation4 + $0x1a0] sm:$0xff]
    %v1493 = vld [vmem:[#allocation4 + $0x1a8] sm:$0xff]
    %v1494 = vld [vmem:[#allocation4 + $0x1b0] sm:$0xff]
    %v1495 = vld [vmem:[#allocation4 + $0x1b8] sm:$0xff]
    %v1496 = vld [vmem:[#allocation4 + $0x1c0] sm:$0xff]
    %v1497 = vld [vmem:[#allocation4 + $0x1c8] sm:$0xff]
    %v1498 = vld [vmem:[#allocation4 + $0x1d0] sm:$0xff]
    %v1499 = vld [vmem:[#allocation4 + $0x1d8] sm:$0xff]
    %v1500 = vld [vmem:[#allocation4 + $0x1e0] sm:$0xff]
    %v1501 = vld [vmem:[#allocation4 + $0x1e8] sm:$0xff]
    %v1502 = vld [vmem:[#allocation4 + $0x1f0] sm:$0xff]
    %v1503 = vld [vmem:[#allocation4 + $0x1f8] sm:$0xff]
    %1504 = vmatpush.msra.mxu0 %v1500
    %1505 = vmatpush.msra.mxu0 %v1496
    %1506 = vmatpush.msra.mxu0 %v1492
    %1507 = vmatpush.msra.mxu0 %v1488
    %1508 = vmatpush.msra.mxu0 %v1484
    %1509 = vmatpush.msra.mxu0 %v1480
    %1510 = vmatpush.msra.mxu0 %v1476
    %1511 = vmatpush.msra.mxu0 %v1472
    %1512 = vmatpush.msra.mxu0 %v1468
    %1513 = vmatpush.msra.mxu0 %v1464
    %1514 = vmatpush.msra.mxu0 %v1460
    %1515 = vmatpush.msra.mxu0 %v1456
    %1516 = vmatpush.msra.mxu0 %v1452
    %1517 = vmatpush.msra.mxu0 %v1448
    %1518 = vmatpush.msra.mxu0 %v1444
    %1519 = vmatpush.msra.mxu0 %v1440
    %1520 = vmatmul.f32.gmra.mxu0 %v1430
    %v1521 = vpop.f32.mrf.mxu0
    %v1522 = vadd.f32 0.0, %v1521
    %1523 = vdwg.mxu0
    %1524 = vmatpush.msra.mxu0 %v1501
    %1525 = vmatpush.msra.mxu0 %v1497
    %1526 = vmatpush.msra.mxu0 %v1493
    %1527 = vmatpush.msra.mxu0 %v1489
    %1528 = vmatpush.msra.mxu0 %v1485
    %1529 = vmatpush.msra.mxu0 %v1481
    %1530 = vmatpush.msra.mxu0 %v1477
    %1531 = vmatpush.msra.mxu0 %v1473
    %1532 = vmatpush.msra.mxu0 %v1469
    %1533 = vmatpush.msra.mxu0 %v1465
    %1534 = vmatpush.msra.mxu0 %v1461
    %1535 = vmatpush.msra.mxu0 %v1457
    %1536 = vmatpush.msra.mxu0 %v1453
    %1537 = vmatpush.msra.mxu0 %v1449
    %1538 = vmatpush.msra.mxu0 %v1445
    %1539 = vmatpush.msra.mxu0 %v1441
    %1540 = vmatmul.f32.gmra.mxu0 %v1430
    %v1541 = vpop.f32.mrf.mxu0
    %v1542 = vadd.f32 0.0, %v1541
    %1543 = vdwg.mxu0
    %1544 = vmatpush.msra.mxu0 %v1502
    %1545 = vmatpush.msra.mxu0 %v1498
    %1546 = vmatpush.msra.mxu0 %v1494
    %1547 = vmatpush.msra.mxu0 %v1490
    %1548 = vmatpush.msra.mxu0 %v1486
    %1549 = vmatpush.msra.mxu0 %v1482
    %1550 = vmatpush.msra.mxu0 %v1478
    %1551 = vmatpush.msra.mxu0 %v1474
    %1552 = vmatpush.msra.mxu0 %v1470
    %1553 = vmatpush.msra.mxu0 %v1466
    %1554 = vmatpush.msra.mxu0 %v1462
    %1555 = vmatpush.msra.mxu0 %v1458
    %1556 = vmatpush.msra.mxu0 %v1454
    %1557 = vmatpush.msra.mxu0 %v1450
    %1558 = vmatpush.msra.mxu0 %v1446
    %1559 = vmatpush.msra.mxu0 %v1442
    %1560 = vmatmul.f32.gmra.mxu0 %v1430
    %v1561 = vpop.f32.mrf.mxu0
    %v1562 = vadd.f32 0.0, %v1561
    %1563 = vdwg.mxu0
    %1564 = vmatpush.msra.mxu0 %v1503
    %1565 = vmatpush.msra.mxu0 %v1499
    %1566 = vmatpush.msra.mxu0 %v1495
    %1567 = vmatpush.msra.mxu0 %v1491
    %1568 = vmatpush.msra.mxu0 %v1487
    %1569 = vmatpush.msra.mxu0 %v1483
    %1570 = vmatpush.msra.mxu0 %v1479
    %1571 = vmatpush.msra.mxu0 %v1475
    %1572 = vmatpush.msra.mxu0 %v1471
    %1573 = vmatpush.msra.mxu0 %v1467
    %1574 = vmatpush.msra.mxu0 %v1463
    %1575 = vmatpush.msra.mxu0 %v1459
    %1576 = vmatpush.msra.mxu0 %v1455
    %1577 = vmatpush.msra.mxu0 %v1451
    %1578 = vmatpush.msra.mxu0 %v1447
    %1579 = vmatpush.msra.mxu0 %v1443
    %1580 = vmatmul.f32.gmra.mxu0 %v1430
    %v1581 = vpop.f32.mrf.mxu0
    %v1582 = vadd.f32 0.0, %v1581
    %1583 = vdwg.mxu0
    %v1584 = vadd.f32 %v1436, %v1522
    %v1585 = vadd.f32 %v1437, %v1542
    %v1586 = vadd.f32 %v1438, %v1562
    %v1587 = vadd.f32 %v1439, %v1582
    %v1588 = vxor.u32 %v1584, 2147483648
    %v1589 = vmul.f32 %v1588, 1.442695
    %v1590 = vpow.pop %v1589
    %v1591 = vadd.f32 %v1590, 1.0
    %v1592 = vrcp.pop %v1591
    %v1593 = vmul.f32 %v1591, %v1592
    %v1594 = vsub.f32 1.0, %v1593
    %v1595 = vmul.f32 %v1592, %v1594
    %v1596 = vadd.f32 %v1592, %v1595
    %vm1597 = vweird.f32 %v1591
    %vm1598 = vweird.f32 %v1592
    %vm1599 = vmor %vm1597, %vm1598
    %v1600 = vsel %vm1599, %v1592, %v1596
    %v1601 = vand.u32 2147483647, %v1591
    %vm1602 = vcmp.eq.f32.partialorder %v1601, 8.507059e+37
    %v1603 = vand.u32 %v1591, 2147483648
    %v1604 = vor.u32 1.1754944e-38, %v1603
    %v1605 = vsel %vm1602, %v1604, %v1600
    %v1606 = vmul.f32 1.0, %v1605
    %v1607 = vxor.u32 %v1585, 2147483648
    %v1608 = vmul.f32 %v1607, 1.442695
    %v1609 = vpow.pop %v1608
    %v1610 = vadd.f32 %v1609, 1.0
    %v1611 = vrcp.pop %v1610
    %v1612 = vmul.f32 %v1610, %v1611
    %v1613 = vsub.f32 1.0, %v1612
    %v1614 = vmul.f32 %v1611, %v1613
    %v1615 = vadd.f32 %v1611, %v1614
    %vm1616 = vweird.f32 %v1610
    %vm1617 = vweird.f32 %v1611
    %vm1618 = vmor %vm1616, %vm1617
    %v1619 = vsel %vm1618, %v1611, %v1615
    %v1620 = vand.u32 2147483647, %v1610
    %vm1621 = vcmp.eq.f32.partialorder %v1620, 8.507059e+37
    %v1622 = vand.u32 %v1610, 2147483648
    %v1623 = vor.u32 1.1754944e-38, %v1622
    %v1624 = vsel %vm1621, %v1623, %v1619
    %v1625 = vmul.f32 1.0, %v1624
    %v1626 = vtanh.pop %v1586
    %v1627 = vxor.u32 %v1587, 2147483648
    %v1628 = vmul.f32 %v1627, 1.442695
    %v1629 = vpow.pop %v1628
    %v1630 = vadd.f32 %v1629, 1.0
    %v1631 = vrcp.pop %v1630
    %v1632 = vmul.f32 %v1630, %v1631
    %v1633 = vsub.f32 1.0, %v1632
    %v1634 = vmul.f32 %v1631, %v1633
    %v1635 = vadd.f32 %v1631, %v1634
    %vm1636 = vweird.f32 %v1630
    %vm1637 = vweird.f32 %v1631
    %vm1638 = vmor %vm1636, %vm1637
    %v1639 = vsel %vm1638, %v1631, %v1635
    %v1640 = vand.u32 2147483647, %v1630
    %vm1641 = vcmp.eq.f32.partialorder %v1640, 8.507059e+37
    %v1642 = vand.u32 %v1630, 2147483648
    %v1643 = vor.u32 1.1754944e-38, %v1642
    %v1644 = vsel %vm1641, %v1643, %v1639
    %v1645 = vmul.f32 1.0, %v1644
    %v1646 = vmul.f32 %v1625, %v1428
    %v1647 = vmul.f32 %v1606, %v1626
    %v1648 = vadd.f32 %v1646, %v1647
    %v1649 = vtanh.pop %v1648
    %v1650 = vmul.f32 %v1645, %v1649
    %s1651 = scalar_lea.vmem [#allocation3], 40
    %1652 = vst [vmem:[%s1651] sm:$0xff] %v1650
    %s1653 = smul.u32 6, 4
    %s1654 = smul.addr %s1653, 8
    %s1655 = scalar_lea.vmem [#allocation2], %s1654
    %v1656 = vld [vmem:[%s1655] sm:$0xff]
    %v1657 = vld [vmem:[%s1655 + $0x8] sm:$0xff]
    %v1658 = vld [vmem:[%s1655 + $0x10] sm:$0xff]
    %v1659 = vld [vmem:[%s1655 + $0x18] sm:$0xff]
    %v1660 = vld [vmem:[#allocation4] sm:$0xff]
    %v1661 = vld [vmem:[#allocation4 + $0x8] sm:$0xff]
    %v1662 = vld [vmem:[#allocation4 + $0x10] sm:$0xff]
    %v1663 = vld [vmem:[#allocation4 + $0x18] sm:$0xff]
    %v1664 = vld [vmem:[#allocation4 + $0x20] sm:$0xff]
    %v1665 = vld [vmem:[#allocation4 + $0x28] sm:$0xff]
    %v1666 = vld [vmem:[#allocation4 + $0x30] sm:$0xff]
    %v1667 = vld [vmem:[#allocation4 + $0x38] sm:$0xff]
    %v1668 = vld [vmem:[#allocation4 + $0x40] sm:$0xff]
    %v1669 = vld [vmem:[#allocation4 + $0x48] sm:$0xff]
    %v1670 = vld [vmem:[#allocation4 + $0x50] sm:$0xff]
    %v1671 = vld [vmem:[#allocation4 + $0x58] sm:$0xff]
    %v1672 = vld [vmem:[#allocation4 + $0x60] sm:$0xff]
    %v1673 = vld [vmem:[#allocation4 + $0x68] sm:$0xff]
    %v1674 = vld [vmem:[#allocation4 + $0x70] sm:$0xff]
    %v1675 = vld [vmem:[#allocation4 + $0x78] sm:$0xff]
    %v1676 = vld [vmem:[#allocation4 + $0x80] sm:$0xff]
    %v1677 = vld [vmem:[#allocation4 + $0x88] sm:$0xff]
    %v1678 = vld [vmem:[#allocation4 + $0x90] sm:$0xff]
    %v1679 = vld [vmem:[#allocation4 + $0x98] sm:$0xff]
    %v1680 = vld [vmem:[#allocation4 + $0xa0] sm:$0xff]
    %v1681 = vld [vmem:[#allocation4 + $0xa8] sm:$0xff]
    %v1682 = vld [vmem:[#allocation4 + $0xb0] sm:$0xff]
    %v1683 = vld [vmem:[#allocation4 + $0xb8] sm:$0xff]
    %v1684 = vld [vmem:[#allocation4 + $0xc0] sm:$0xff]
    %v1685 = vld [vmem:[#allocation4 + $0xc8] sm:$0xff]
    %v1686 = vld [vmem:[#allocation4 + $0xd0] sm:$0xff]
    %v1687 = vld [vmem:[#allocation4 + $0xd8] sm:$0xff]
    %v1688 = vld [vmem:[#allocation4 + $0xe0] sm:$0xff]
    %v1689 = vld [vmem:[#allocation4 + $0xe8] sm:$0xff]
    %v1690 = vld [vmem:[#allocation4 + $0xf0] sm:$0xff]
    %v1691 = vld [vmem:[#allocation4 + $0xf8] sm:$0xff]
    %v1692 = vld [vmem:[#allocation4 + $0x100] sm:$0xff]
    %v1693 = vld [vmem:[#allocation4 + $0x108] sm:$0xff]
    %v1694 = vld [vmem:[#allocation4 + $0x110] sm:$0xff]
    %v1695 = vld [vmem:[#allocation4 + $0x118] sm:$0xff]
    %v1696 = vld [vmem:[#allocation4 + $0x120] sm:$0xff]
    %v1697 = vld [vmem:[#allocation4 + $0x128] sm:$0xff]
    %v1698 = vld [vmem:[#allocation4 + $0x130] sm:$0xff]
    %v1699 = vld [vmem:[#allocation4 + $0x138] sm:$0xff]
    %v1700 = vld [vmem:[#allocation4 + $0x140] sm:$0xff]
    %v1701 = vld [vmem:[#allocation4 + $0x148] sm:$0xff]
    %v1702 = vld [vmem:[#allocation4 + $0x150] sm:$0xff]
    %v1703 = vld [vmem:[#allocation4 + $0x158] sm:$0xff]
    %v1704 = vld [vmem:[#allocation4 + $0x160] sm:$0xff]
    %v1705 = vld [vmem:[#allocation4 + $0x168] sm:$0xff]
    %v1706 = vld [vmem:[#allocation4 + $0x170] sm:$0xff]
    %v1707 = vld [vmem:[#allocation4 + $0x178] sm:$0xff]
    %v1708 = vld [vmem:[#allocation4 + $0x180] sm:$0xff]
    %v1709 = vld [vmem:[#allocation4 + $0x188] sm:$0xff]
    %v1710 = vld [vmem:[#allocation4 + $0x190] sm:$0xff]
    %v1711 = vld [vmem:[#allocation4 + $0x198] sm:$0xff]
    %v1712 = vld [vmem:[#allocation4 + $0x1a0] sm:$0xff]
    %v1713 = vld [vmem:[#allocation4 + $0x1a8] sm:$0xff]
    %v1714 = vld [vmem:[#allocation4 + $0x1b0] sm:$0xff]
    %v1715 = vld [vmem:[#allocation4 + $0x1b8] sm:$0xff]
    %v1716 = vld [vmem:[#allocation4 + $0x1c0] sm:$0xff]
    %v1717 = vld [vmem:[#allocation4 + $0x1c8] sm:$0xff]
    %v1718 = vld [vmem:[#allocation4 + $0x1d0] sm:$0xff]
    %v1719 = vld [vmem:[#allocation4 + $0x1d8] sm:$0xff]
    %v1720 = vld [vmem:[#allocation4 + $0x1e0] sm:$0xff]
    %v1721 = vld [vmem:[#allocation4 + $0x1e8] sm:$0xff]
    %v1722 = vld [vmem:[#allocation4 + $0x1f0] sm:$0xff]
    %v1723 = vld [vmem:[#allocation4 + $0x1f8] sm:$0xff]
    %1724 = vmatpush.msra.mxu0 %v1720
    %1725 = vmatpush.msra.mxu0 %v1716
    %1726 = vmatpush.msra.mxu0 %v1712
    %1727 = vmatpush.msra.mxu0 %v1708
    %1728 = vmatpush.msra.mxu0 %v1704
    %1729 = vmatpush.msra.mxu0 %v1700
    %1730 = vmatpush.msra.mxu0 %v1696
    %1731 = vmatpush.msra.mxu0 %v1692
    %1732 = vmatpush.msra.mxu0 %v1688
    %1733 = vmatpush.msra.mxu0 %v1684
    %1734 = vmatpush.msra.mxu0 %v1680
    %1735 = vmatpush.msra.mxu0 %v1676
    %1736 = vmatpush.msra.mxu0 %v1672
    %1737 = vmatpush.msra.mxu0 %v1668
    %1738 = vmatpush.msra.mxu0 %v1664
    %1739 = vmatpush.msra.mxu0 %v1660
    %1740 = vmatmul.f32.gmra.mxu0 %v1650
    %v1741 = vpop.f32.mrf.mxu0
    %v1742 = vadd.f32 0.0, %v1741
    %1743 = vdwg.mxu0
    %1744 = vmatpush.msra.mxu0 %v1721
    %1745 = vmatpush.msra.mxu0 %v1717
    %1746 = vmatpush.msra.mxu0 %v1713
    %1747 = vmatpush.msra.mxu0 %v1709
    %1748 = vmatpush.msra.mxu0 %v1705
    %1749 = vmatpush.msra.mxu0 %v1701
    %1750 = vmatpush.msra.mxu0 %v1697
    %1751 = vmatpush.msra.mxu0 %v1693
    %1752 = vmatpush.msra.mxu0 %v1689
    %1753 = vmatpush.msra.mxu0 %v1685
    %1754 = vmatpush.msra.mxu0 %v1681
    %1755 = vmatpush.msra.mxu0 %v1677
    %1756 = vmatpush.msra.mxu0 %v1673
    %1757 = vmatpush.msra.mxu0 %v1669
    %1758 = vmatpush.msra.mxu0 %v1665
    %1759 = vmatpush.msra.mxu0 %v1661
    %1760 = vmatmul.f32.gmra.mxu0 %v1650
    %v1761 = vpop.f32.mrf.mxu0
    %v1762 = vadd.f32 0.0, %v1761
    %1763 = vdwg.mxu0
    %1764 = vmatpush.msra.mxu0 %v1722
    %1765 = vmatpush.msra.mxu0 %v1718
    %1766 = vmatpush.msra.mxu0 %v1714
    %1767 = vmatpush.msra.mxu0 %v1710
    %1768 = vmatpush.msra.mxu0 %v1706
    %1769 = vmatpush.msra.mxu0 %v1702
    %1770 = vmatpush.msra.mxu0 %v1698
    %1771 = vmatpush.msra.mxu0 %v1694
    %1772 = vmatpush.msra.mxu0 %v1690
    %1773 = vmatpush.msra.mxu0 %v1686
    %1774 = vmatpush.msra.mxu0 %v1682
    %1775 = vmatpush.msra.mxu0 %v1678
    %1776 = vmatpush.msra.mxu0 %v1674
    %1777 = vmatpush.msra.mxu0 %v1670
    %1778 = vmatpush.msra.mxu0 %v1666
    %1779 = vmatpush.msra.mxu0 %v1662
    %1780 = vmatmul.f32.gmra.mxu0 %v1650
    %v1781 = vpop.f32.mrf.mxu0
    %v1782 = vadd.f32 0.0, %v1781
    %1783 = vdwg.mxu0
    %1784 = vmatpush.msra.mxu0 %v1723
    %1785 = vmatpush.msra.mxu0 %v1719
    %1786 = vmatpush.msra.mxu0 %v1715
    %1787 = vmatpush.msra.mxu0 %v1711
    %1788 = vmatpush.msra.mxu0 %v1707
    %1789 = vmatpush.msra.mxu0 %v1703
    %1790 = vmatpush.msra.mxu0 %v1699
    %1791 = vmatpush.msra.mxu0 %v1695
    %1792 = vmatpush.msra.mxu0 %v1691
    %1793 = vmatpush.msra.mxu0 %v1687
    %1794 = vmatpush.msra.mxu0 %v1683
    %1795 = vmatpush.msra.mxu0 %v1679
    %1796 = vmatpush.msra.mxu0 %v1675
    %1797 = vmatpush.msra.mxu0 %v1671
    %1798 = vmatpush.msra.mxu0 %v1667
    %1799 = vmatpush.msra.mxu0 %v1663
    %1800 = vmatmul.f32.gmra.mxu0 %v1650
    %v1801 = vpop.f32.mrf.mxu0
    %v1802 = vadd.f32 0.0, %v1801
    %1803 = vdwg.mxu0
    %v1804 = vadd.f32 %v1656, %v1742
    %v1805 = vadd.f32 %v1657, %v1762
    %v1806 = vadd.f32 %v1658, %v1782
    %v1807 = vadd.f32 %v1659, %v1802
    %v1808 = vxor.u32 %v1804, 2147483648
    %v1809 = vmul.f32 %v1808, 1.442695
    %v1810 = vpow.pop %v1809
    %v1811 = vadd.f32 %v1810, 1.0
    %v1812 = vrcp.pop %v1811
    %v1813 = vmul.f32 %v1811, %v1812
    %v1814 = vsub.f32 1.0, %v1813
    %v1815 = vmul.f32 %v1812, %v1814
    %v1816 = vadd.f32 %v1812, %v1815
    %vm1817 = vweird.f32 %v1811
    %vm1818 = vweird.f32 %v1812
    %vm1819 = vmor %vm1817, %vm1818
    %v1820 = vsel %vm1819, %v1812, %v1816
    %v1821 = vand.u32 2147483647, %v1811
    %vm1822 = vcmp.eq.f32.partialorder %v1821, 8.507059e+37
    %v1823 = vand.u32 %v1811, 2147483648
    %v1824 = vor.u32 1.1754944e-38, %v1823
    %v1825 = vsel %vm1822, %v1824, %v1820
    %v1826 = vmul.f32 1.0, %v1825
    %v1827 = vxor.u32 %v1805, 2147483648
    %v1828 = vmul.f32 %v1827, 1.442695
    %v1829 = vpow.pop %v1828
    %v1830 = vadd.f32 %v1829, 1.0
    %v1831 = vrcp.pop %v1830
    %v1832 = vmul.f32 %v1830, %v1831
    %v1833 = vsub.f32 1.0, %v1832
    %v1834 = vmul.f32 %v1831, %v1833
    %v1835 = vadd.f32 %v1831, %v1834
    %vm1836 = vweird.f32 %v1830
    %vm1837 = vweird.f32 %v1831
    %vm1838 = vmor %vm1836, %vm1837
    %v1839 = vsel %vm1838, %v1831, %v1835
    %v1840 = vand.u32 2147483647, %v1830
    %vm1841 = vcmp.eq.f32.partialorder %v1840, 8.507059e+37
    %v1842 = vand.u32 %v1830, 2147483648
    %v1843 = vor.u32 1.1754944e-38, %v1842
    %v1844 = vsel %vm1841, %v1843, %v1839
    %v1845 = vmul.f32 1.0, %v1844
    %v1846 = vtanh.pop %v1806
    %v1847 = vxor.u32 %v1807, 2147483648
    %v1848 = vmul.f32 %v1847, 1.442695
    %v1849 = vpow.pop %v1848
    %v1850 = vadd.f32 %v1849, 1.0
    %v1851 = vrcp.pop %v1850
    %v1852 = vmul.f32 %v1850, %v1851
    %v1853 = vsub.f32 1.0, %v1852
    %v1854 = vmul.f32 %v1851, %v1853
    %v1855 = vadd.f32 %v1851, %v1854
    %vm1856 = vweird.f32 %v1850
    %vm1857 = vweird.f32 %v1851
    %vm1858 = vmor %vm1856, %vm1857
    %v1859 = vsel %vm1858, %v1851, %v1855
    %v1860 = vand.u32 2147483647, %v1850
    %vm1861 = vcmp.eq.f32.partialorder %v1860, 8.507059e+37
    %v1862 = vand.u32 %v1850, 2147483648
    %v1863 = vor.u32 1.1754944e-38, %v1862
    %v1864 = vsel %vm1861, %v1863, %v1859
    %v1865 = vmul.f32 1.0, %v1864
    %v1866 = vmul.f32 %v1845, %v1648
    %v1867 = vmul.f32 %v1826, %v1846
    %v1868 = vadd.f32 %v1866, %v1867
    %v1869 = vtanh.pop %v1868
    %v1870 = vmul.f32 %v1865, %v1869
    %s1871 = scalar_lea.vmem [#allocation3], 48
    %1872 = vst [vmem:[%s1871] sm:$0xff] %v1870
    %s1873 = smul.u32 7, 4
    %s1874 = smul.addr %s1873, 8
    %s1875 = scalar_lea.vmem [#allocation2], %s1874
    %v1876 = vld [vmem:[%s1875] sm:$0xff]
    %v1877 = vld [vmem:[%s1875 + $0x8] sm:$0xff]
    %v1878 = vld [vmem:[%s1875 + $0x10] sm:$0xff]
    %v1879 = vld [vmem:[%s1875 + $0x18] sm:$0xff]
    %v1880 = vld [vmem:[#allocation4] sm:$0xff]
    %v1881 = vld [vmem:[#allocation4 + $0x8] sm:$0xff]
    %v1882 = vld [vmem:[#allocation4 + $0x10] sm:$0xff]
    %v1883 = vld [vmem:[#allocation4 + $0x18] sm:$0xff]
    %v1884 = vld [vmem:[#allocation4 + $0x20] sm:$0xff]
    %v1885 = vld [vmem:[#allocation4 + $0x28] sm:$0xff]
    %v1886 = vld [vmem:[#allocation4 + $0x30] sm:$0xff]
    %v1887 = vld [vmem:[#allocation4 + $0x38] sm:$0xff]
    %v1888 = vld [vmem:[#allocation4 + $0x40] sm:$0xff]
    %v1889 = vld [vmem:[#allocation4 + $0x48] sm:$0xff]
    %v1890 = vld [vmem:[#allocation4 + $0x50] sm:$0xff]
    %v1891 = vld [vmem:[#allocation4 + $0x58] sm:$0xff]
    %v1892 = vld [vmem:[#allocation4 + $0x60] sm:$0xff]
    %v1893 = vld [vmem:[#allocation4 + $0x68] sm:$0xff]
    %v1894 = vld [vmem:[#allocation4 + $0x70] sm:$0xff]
    %v1895 = vld [vmem:[#allocation4 + $0x78] sm:$0xff]
    %v1896 = vld [vmem:[#allocation4 + $0x80] sm:$0xff]
    %v1897 = vld [vmem:[#allocation4 + $0x88] sm:$0xff]
    %v1898 = vld [vmem:[#allocation4 + $0x90] sm:$0xff]
    %v1899 = vld [vmem:[#allocation4 + $0x98] sm:$0xff]
    %v1900 = vld [vmem:[#allocation4 + $0xa0] sm:$0xff]
    %v1901 = vld [vmem:[#allocation4 + $0xa8] sm:$0xff]
    %v1902 = vld [vmem:[#allocation4 + $0xb0] sm:$0xff]
    %v1903 = vld [vmem:[#allocation4 + $0xb8] sm:$0xff]
    %v1904 = vld [vmem:[#allocation4 + $0xc0] sm:$0xff]
    %v1905 = vld [vmem:[#allocation4 + $0xc8] sm:$0xff]
    %v1906 = vld [vmem:[#allocation4 + $0xd0] sm:$0xff]
    %v1907 = vld [vmem:[#allocation4 + $0xd8] sm:$0xff]
    %v1908 = vld [vmem:[#allocation4 + $0xe0] sm:$0xff]
    %v1909 = vld [vmem:[#allocation4 + $0xe8] sm:$0xff]
    %v1910 = vld [vmem:[#allocation4 + $0xf0] sm:$0xff]
    %v1911 = vld [vmem:[#allocation4 + $0xf8] sm:$0xff]
    %v1912 = vld [vmem:[#allocation4 + $0x100] sm:$0xff]
    %v1913 = vld [vmem:[#allocation4 + $0x108] sm:$0xff]
    %v1914 = vld [vmem:[#allocation4 + $0x110] sm:$0xff]
    %v1915 = vld [vmem:[#allocation4 + $0x118] sm:$0xff]
    %v1916 = vld [vmem:[#allocation4 + $0x120] sm:$0xff]
    %v1917 = vld [vmem:[#allocation4 + $0x128] sm:$0xff]
    %v1918 = vld [vmem:[#allocation4 + $0x130] sm:$0xff]
    %v1919 = vld [vmem:[#allocation4 + $0x138] sm:$0xff]
    %v1920 = vld [vmem:[#allocation4 + $0x140] sm:$0xff]
    %v1921 = vld [vmem:[#allocation4 + $0x148] sm:$0xff]
    %v1922 = vld [vmem:[#allocation4 + $0x150] sm:$0xff]
    %v1923 = vld [vmem:[#allocation4 + $0x158] sm:$0xff]
    %v1924 = vld [vmem:[#allocation4 + $0x160] sm:$0xff]
    %v1925 = vld [vmem:[#allocation4 + $0x168] sm:$0xff]
    %v1926 = vld [vmem:[#allocation4 + $0x170] sm:$0xff]
    %v1927 = vld [vmem:[#allocation4 + $0x178] sm:$0xff]
    %v1928 = vld [vmem:[#allocation4 + $0x180] sm:$0xff]
    %v1929 = vld [vmem:[#allocation4 + $0x188] sm:$0xff]
    %v1930 = vld [vmem:[#allocation4 + $0x190] sm:$0xff]
    %v1931 = vld [vmem:[#allocation4 + $0x198] sm:$0xff]
    %v1932 = vld [vmem:[#allocation4 + $0x1a0] sm:$0xff]
    %v1933 = vld [vmem:[#allocation4 + $0x1a8] sm:$0xff]
    %v1934 = vld [vmem:[#allocation4 + $0x1b0] sm:$0xff]
    %v1935 = vld [vmem:[#allocation4 + $0x1b8] sm:$0xff]
    %v1936 = vld [vmem:[#allocation4 + $0x1c0] sm:$0xff]
    %v1937 = vld [vmem:[#allocation4 + $0x1c8] sm:$0xff]
    %v1938 = vld [vmem:[#allocation4 + $0x1d0] sm:$0xff]
    %v1939 = vld [vmem:[#allocation4 + $0x1d8] sm:$0xff]
    %v1940 = vld [vmem:[#allocation4 + $0x1e0] sm:$0xff]
    %v1941 = vld [vmem:[#allocation4 + $0x1e8] sm:$0xff]
    %v1942 = vld [vmem:[#allocation4 + $0x1f0] sm:$0xff]
    %v1943 = vld [vmem:[#allocation4 + $0x1f8] sm:$0xff]
    %1944 = vmatpush.msra.mxu0 %v1940
    %1945 = vmatpush.msra.mxu0 %v1936
    %1946 = vmatpush.msra.mxu0 %v1932
    %1947 = vmatpush.msra.mxu0 %v1928
    %1948 = vmatpush.msra.mxu0 %v1924
    %1949 = vmatpush.msra.mxu0 %v1920
    %1950 = vmatpush.msra.mxu0 %v1916
    %1951 = vmatpush.msra.mxu0 %v1912
    %1952 = vmatpush.msra.mxu0 %v1908
    %1953 = vmatpush.msra.mxu0 %v1904
    %1954 = vmatpush.msra.mxu0 %v1900
    %1955 = vmatpush.msra.mxu0 %v1896
    %1956 = vmatpush.msra.mxu0 %v1892
    %1957 = vmatpush.msra.mxu0 %v1888
    %1958 = vmatpush.msra.mxu0 %v1884
    %1959 = vmatpush.msra.mxu0 %v1880
    %1960 = vmatmul.f32.gmra.mxu0 %v1870
    %v1961 = vpop.f32.mrf.mxu0
    %v1962 = vadd.f32 0.0, %v1961
    %1963 = vdwg.mxu0
    %1964 = vmatpush.msra.mxu0 %v1941
    %1965 = vmatpush.msra.mxu0 %v1937
    %1966 = vmatpush.msra.mxu0 %v1933
    %1967 = vmatpush.msra.mxu0 %v1929
    %1968 = vmatpush.msra.mxu0 %v1925
    %1969 = vmatpush.msra.mxu0 %v1921
    %1970 = vmatpush.msra.mxu0 %v1917
    %1971 = vmatpush.msra.mxu0 %v1913
    %1972 = vmatpush.msra.mxu0 %v1909
    %1973 = vmatpush.msra.mxu0 %v1905
    %1974 = vmatpush.msra.mxu0 %v1901
    %1975 = vmatpush.msra.mxu0 %v1897
    %1976 = vmatpush.msra.mxu0 %v1893
    %1977 = vmatpush.msra.mxu0 %v1889
    %1978 = vmatpush.msra.mxu0 %v1885
    %1979 = vmatpush.msra.mxu0 %v1881
    %1980 = vmatmul.f32.gmra.mxu0 %v1870
    %v1981 = vpop.f32.mrf.mxu0
    %v1982 = vadd.f32 0.0, %v1981
    %1983 = vdwg.mxu0
    %1984 = vmatpush.msra.mxu0 %v1942
    %1985 = vmatpush.msra.mxu0 %v1938
    %1986 = vmatpush.msra.mxu0 %v1934
    %1987 = vmatpush.msra.mxu0 %v1930
    %1988 = vmatpush.msra.mxu0 %v1926
    %1989 = vmatpush.msra.mxu0 %v1922
    %1990 = vmatpush.msra.mxu0 %v1918
    %1991 = vmatpush.msra.mxu0 %v1914
    %1992 = vmatpush.msra.mxu0 %v1910
    %1993 = vmatpush.msra.mxu0 %v1906
    %1994 = vmatpush.msra.mxu0 %v1902
    %1995 = vmatpush.msra.mxu0 %v1898
    %1996 = vmatpush.msra.mxu0 %v1894
    %1997 = vmatpush.msra.mxu0 %v1890
    %1998 = vmatpush.msra.mxu0 %v1886
    %1999 = vmatpush.msra.mxu0 %v1882
    %2000 = vmatmul.f32.gmra.mxu0 %v1870
    %v2001 = vpop.f32.mrf.mxu0
    %v2002 = vadd.f32 0.0, %v2001
    %2003 = vdwg.mxu0
    %2004 = vmatpush.msra.mxu0 %v1943
    %2005 = vmatpush.msra.mxu0 %v1939
    %2006 = vmatpush.msra.mxu0 %v1935
    %2007 = vmatpush.msra.mxu0 %v1931
    %2008 = vmatpush.msra.mxu0 %v1927
    %2009 = vmatpush.msra.mxu0 %v1923
    %2010 = vmatpush.msra.mxu0 %v1919
    %2011 = vmatpush.msra.mxu0 %v1915
    %2012 = vmatpush.msra.mxu0 %v1911
    %2013 = vmatpush.msra.mxu0 %v1907
    %2014 = vmatpush.msra.mxu0 %v1903
    %2015 = vmatpush.msra.mxu0 %v1899
    %2016 = vmatpush.msra.mxu0 %v1895
    %2017 = vmatpush.msra.mxu0 %v1891
    %2018 = vmatpush.msra.mxu0 %v1887
    %2019 = vmatpush.msra.mxu0 %v1883
    %2020 = vmatmul.f32.gmra.mxu0 %v1870
    %v2021 = vpop.f32.mrf.mxu0
    %v2022 = vadd.f32 0.0, %v2021
    %2023 = vdwg.mxu0
    %v2024 = vadd.f32 %v1876, %v1962
    %v2025 = vadd.f32 %v1877, %v1982
    %v2026 = vadd.f32 %v1878, %v2002
    %v2027 = vadd.f32 %v1879, %v2022
    %v2028 = vxor.u32 %v2024, 2147483648
    %v2029 = vmul.f32 %v2028, 1.442695
    %v2030 = vpow.pop %v2029
    %v2031 = vadd.f32 %v2030, 1.0
    %v2032 = vrcp.pop %v2031
    %v2033 = vmul.f32 %v2031, %v2032
    %v2034 = vsub.f32 1.0, %v2033
    %v2035 = vmul.f32 %v2032, %v2034
    %v2036 = vadd.f32 %v2032, %v2035
    %vm2037 = vweird.f32 %v2031
    %vm2038 = vweird.f32 %v2032
    %vm2039 = vmor %vm2037, %vm2038
    %v2040 = vsel %vm2039, %v2032, %v2036
    %v2041 = vand.u32 2147483647, %v2031
    %vm2042 = vcmp.eq.f32.partialorder %v2041, 8.507059e+37
    %v2043 = vand.u32 %v2031, 2147483648
    %v2044 = vor.u32 1.1754944e-38, %v2043
    %v2045 = vsel %vm2042, %v2044, %v2040
    %v2046 = vmul.f32 1.0, %v2045
    %v2047 = vxor.u32 %v2025, 2147483648
    %v2048 = vmul.f32 %v2047, 1.442695
    %v2049 = vpow.pop %v2048
    %v2050 = vadd.f32 %v2049, 1.0
    %v2051 = vrcp.pop %v2050
    %v2052 = vmul.f32 %v2050, %v2051
    %v2053 = vsub.f32 1.0, %v2052
    %v2054 = vmul.f32 %v2051, %v2053
    %v2055 = vadd.f32 %v2051, %v2054
    %vm2056 = vweird.f32 %v2050
    %vm2057 = vweird.f32 %v2051
    %vm2058 = vmor %vm2056, %vm2057
    %v2059 = vsel %vm2058, %v2051, %v2055
    %v2060 = vand.u32 2147483647, %v2050
    %vm2061 = vcmp.eq.f32.partialorder %v2060, 8.507059e+37
    %v2062 = vand.u32 %v2050, 2147483648
    %v2063 = vor.u32 1.1754944e-38, %v2062
    %v2064 = vsel %vm2061, %v2063, %v2059
    %v2065 = vmul.f32 1.0, %v2064
    %v2066 = vtanh.pop %v2026
    %v2067 = vxor.u32 %v2027, 2147483648
    %v2068 = vmul.f32 %v2067, 1.442695
    %v2069 = vpow.pop %v2068
    %v2070 = vadd.f32 %v2069, 1.0
    %v2071 = vrcp.pop %v2070
    %v2072 = vmul.f32 %v2070, %v2071
    %v2073 = vsub.f32 1.0, %v2072
    %v2074 = vmul.f32 %v2071, %v2073
    %v2075 = vadd.f32 %v2071, %v2074
    %vm2076 = vweird.f32 %v2070
    %vm2077 = vweird.f32 %v2071
    %vm2078 = vmor %vm2076, %vm2077
    %v2079 = vsel %vm2078, %v2071, %v2075
    %v2080 = vand.u32 2147483647, %v2070
    %vm2081 = vcmp.eq.f32.partialorder %v2080, 8.507059e+37
    %v2082 = vand.u32 %v2070, 2147483648
    %v2083 = vor.u32 1.1754944e-38, %v2082
    %v2084 = vsel %vm2081, %v2083, %v2079
    %v2085 = vmul.f32 1.0, %v2084
    %v2086 = vmul.f32 %v2065, %v1868
    %v2087 = vmul.f32 %v2046, %v2066
    %v2088 = vadd.f32 %v2086, %v2087
    %v2089 = vtanh.pop %v2088
    %v2090 = vmul.f32 %v2085, %v2089
    %s2091 = scalar_lea.vmem [#allocation3], 56
    %2092 = vst [vmem:[%s2091] sm:$0xff] %v2090
    %v2093 = vlaneseq
    %v2094 = vand.u32 %v2093, 127
    %v2095 = vld [vmem:[#allocation3] sm:$0xff]
    %v2097 = vperm.slane %v333, 0
    %v2099 = vmul.f32 %v2095, %v2097
    %2100 = vadd.xlane.f32.xlu0 %v2099
    %v2101 = vpop.xlane.xlu0 %2100
    %vm2102 = vcmp.eq.s32.totalorder %v2094, 0
    %v2103 = vsel %vm2102, %v2101, -inf
    %v2104 = vld [vmem:[%s771] sm:$0xff]
    %v2105 = vmul.f32 %v2104, %v2097
    %2106 = vadd.xlane.f32.xlu0 %v2105
    %v2107 = vpop.xlane.xlu0 %2106
    %vm2108 = vcmp.eq.s32.totalorder %v2094, 1
    %v2109 = vsel %vm2108, %v2107, %v2103
    %v2110 = vld [vmem:[%s991] sm:$0xff]
    %v2111 = vmul.f32 %v2110, %v2097
    %2112 = vadd.xlane.f32.xlu0 %v2111
    %v2113 = vpop.xlane.xlu0 %2112
    %vm2114 = vcmp.eq.s32.totalorder %v2094, 2
    %v2115 = vsel %vm2114, %v2113, %v2109
    %v2116 = vld [vmem:[%s1211] sm:$0xff]
    %v2117 = vmul.f32 %v2116, %v2097
    %2118 = vadd.xlane.f32.xlu0 %v2117
    %v2119 = vpop.xlane.xlu0 %2118
    %vm2120 = vcmp.eq.s32.totalorder %v2094, 3
    %v2121 = vsel %vm2120, %v2119, %v2115
    %v2122 = vld [vmem:[%s1431] sm:$0xff]
    %v2123 = vmul.f32 %v2122, %v2097
    %2124 = vadd.xlane.f32.xlu0 %v2123
    %v2125 = vpop.xlane.xlu0 %2124
    %vm2126 = vcmp.eq.s32.totalorder %v2094, 4
    %v2127 = vsel %vm2126, %v2125, %v2121
    %v2128 = vld [vmem:[%s1651] sm:$0xff]
    %v2129 = vmul.f32 %v2128, %v2097
    %2130 = vadd.xlane.f32.xlu0 %v2129
    %v2131 = vpop.xlane.xlu0 %2130
    %vm2132 = vcmp.eq.s32.totalorder %v2094, 5
    %v2133 = vsel %vm2132, %v2131, %v2127
    %v2134 = vld [vmem:[%s1871] sm:$0xff]
    %v2135 = vmul.f32 %v2134, %v2097
    %2136 = vadd.xlane.f32.xlu0 %v2135
    %v2137 = vpop.xlane.xlu0 %2136
    %vm2138 = vcmp.eq.s32.totalorder %v2094, 6
    %v2139 = vsel %vm2138, %v2137, %v2133
    %v2140 = vld [vmem:[%s2091] sm:$0xff]
    %v2141 = vmul.f32 %v2140, %v2097
    %2142 = vadd.xlane.f32.xlu0 %v2141
    %v2143 = vpop.xlane.xlu0 %2142
    %vm2144 = vcmp.eq.s32.totalorder %v2094, 7
    %v2145 = vsel %vm2144, %v2143, %v2139
    %2146 = vmax.xlane.f32.xlu0 %v2145
    %v2147 = vpop.xlane.xlu0 %2146
    %v2148 = vsub.f32 %v2145, %v2147
    %v2149 = vmul.f32 %v2148, 1.442695
    %v2150 = vpow.pop %v2149
    %2151 = vadd.xlane.f32.xlu0 %v2150
    %v2152 = vpop.xlane.xlu0 %2151
    %v2153 = vrcp.pop %v2152
    %v2154 = vmul.f32 %v2152, %v2153
    %v2155 = vsub.f32 1.0, %v2154
    %v2156 = vmul.f32 %v2153, %v2155
    %v2157 = vadd.f32 %v2153, %v2156
    %vm2158 = vweird.f32 %v2152
    %vm2159 = vweird.f32 %v2153
    %vm2160 = vmor %vm2158, %vm2159
    %v2161 = vsel %vm2160, %v2153, %v2157
    %v2162 = vand.u32 2147483647, %v2152
    %vm2163 = vcmp.eq.f32.partialorder %v2162, 8.507059e+37
    %v2164 = vand.u32 %v2152, 2147483648
    %v2165 = vor.u32 1.1754944e-38, %v2164
    %v2166 = vsel %vm2163, %v2165, %v2161
    %v2167 = vmul.f32 %v2150, %v2166
    %2168 = vst [vmem:[#allocation10] sm:$0xff] %v2167
    %v2169 = vld [vmem:[#allocation3] sm:$0xff]
    %2171 = vset.pattern.permute.xlu0 0
    %2172 = vperm.xlu0 %2171, %v2167
    %v2173 = vpop.permute.xlu0 %2172
    %v2175 = vmul.f32 %v2173, %v2169
    %v2176 = vadd.f32 %v2175, 0.0
    %v2177 = vld [vmem:[%s771] sm:$0xff]
    %2178 = vset.pattern.permute.xlu0 1
    %2179 = vperm.xlu0 %2178, %v2167
    %v2180 = vpop.permute.xlu0 %2179
    %v2182 = vmul.f32 %v2180, %v2177
    %v2183 = vadd.f32 %v2176, %v2182
    %v2184 = vld [vmem:[%s991] sm:$0xff]
    %2185 = vset.pattern.permute.xlu0 2
    %2186 = vperm.xlu0 %2185, %v2167
    %v2187 = vpop.permute.xlu0 %2186
    %v2189 = vmul.f32 %v2187, %v2184
    %v2190 = vadd.f32 %v2183, %v2189
    %v2191 = vld [vmem:[%s1211] sm:$0xff]
    %2192 = vset.pattern.permute.xlu0 3
    %2193 = vperm.xlu0 %2192, %v2167
    %v2194 = vpop.permute.xlu0 %2193
    %v2196 = vmul.f32 %v2194, %v2191
    %v2197 = vadd.f32 %v2190, %v2196
    %v2198 = vld [vmem:[%s1431] sm:$0xff]
    %2199 = vset.pattern.permute.xlu0 4
    %2200 = vperm.xlu0 %2199, %v2167
    %v2201 = vpop.permute.xlu0 %2200
    %v2203 = vmul.f32 %v2201, %v2198
    %v2204 = vadd.f32 %v2197, %v2203
    %v2205 = vld [vmem:[%s1651] sm:$0xff]
    %2206 = vset.pattern.permute.xlu0 5
    %2207 = vperm.xlu0 %2206, %v2167
    %v2208 = vpop.permute.xlu0 %2207
    %v2210 = vmul.f32 %v2208, %v2205
    %v2211 = vadd.f32 %v2204, %v2210
    %v2212 = vld [vmem:[%s1871] sm:$0xff]
    %2213 = vset.pattern.permute.xlu0 6
    %2214 = vperm.xlu0 %2213, %v2167
    %v2215 = vpop.permute.xlu0 %2214
    %v2217 = vmul.f32 %v2215, %v2212
    %v2218 = vadd.f32 %v2211, %v2217
    %v2219 = vld [vmem:[%s2091] sm:$0xff]
    %2220 = vset.pattern.permute.xlu0 7
    %2221 = vperm.xlu0 %2220, %v2167
    %v2222 = vpop.permute.xlu0 %2221
    %v2224 = vmul.f32 %v2222, %v2219
    %v2225 = vadd.f32 %v2218, %v2224
    %v2226 = vld [vmem:[%s0 + $0x38] sm:$0xff]
    %v2227 = vld [vmem:[%s5] sm:$0xf]
    %v2228 = vld [vmem:[%s6] sm:$0x1]
    %v2230 = vperm.slane %v2228, 0
    %v2233 = vsel %vm103, %v2226, 0
    %v2236 = vsel %vm128, %v2227, 0
    %2238 = vmatpush.msra.mxu0 0.0
    %2239 = vmatpush.msra.mxu0 0.0
    %2240 = vmatpush.msra.mxu0 0.0
    %2241 = vmatpush.msra.mxu0 0.0
    %2242 = vmatpush.msra.mxu0 0.0
    %2243 = vmatpush.msra.mxu0 0.0
    %2244 = vmatpush.msra.mxu0 0.0
    %2245 = vmatpush.msra.mxu0 0.0
    %2246 = vmatpush.msra.mxu0 0.0
    %2247 = vmatpush.msra.mxu0 0.0
    %2248 = vmatpush.msra.mxu0 0.0
    %2249 = vmatpush.msra.mxu0 0.0
    %2250 = vmatpush.msra.mxu0 0.0
    %2251 = vmatpush.msra.mxu0 0.0
    %2252 = vmatpush.msra.mxu0 0.0
    %2253 = vmatpush.msra.mxu0 %v2236
    %2254 = vmatmul.f32.gmra.mxu0 %v2233
    %v2255 = vpop.f32.mrf.mxu0
    %v2256 = vadd.f32 %v2230, %v2255
    %2257 = vdwg.mxu0
    %v2258 = vadd.f32 %v2225, %v2256
    %vm2259 = vcmp.lt.s32.totalorder %v2094, 32
    %v2260 = vsel %vm2259, 1, 0
    %v2261 = vcvt.s32.f32 %v2260
    %2262 = vadd.xlane.f32.xlu0 %v2258
    %v2263 = vpop.xlane.xlu0 %2262
    %v2264 = vmul.f32 %v2263, 0.03125
    %v2265 = vsub.f32 %v2258, %v2264
    %v2266 = vmul.f32 %v2265, %v2261
    %v2267 = vmul.f32 %v2266, %v2266
    %2268 = vadd.xlane.f32.xlu0 %v2267
    %v2269 = vpop.xlane.xlu0 %2268
    %v2270 = vmul.f32 %v2269, 0.03125
    %v2271 = vadd.f32 %v2270, 1e-05
    %v2272 = vrsqrt.pop %v2271
    %v2273 = vmul.f32 %v2272, %v2271
    %v2274 = vmul.f32 %v2273, %v2272
    %v2275 = vmul.f32 0.5, %v2274
    %v2276 = vsub.f32 1.5, %v2275
    %v2277 = vmul.f32 %v2272, %v2276
    %vm2278 = vweird.f32 %v2271
    %vm2279 = vweird.f32 %v2272
    %vm2280 = vmor %vm2278, %vm2279
    %v2281 = vsel %vm2280, %v2272, %v2277
    %v2282 = vmul.f32 %v2266, %v2281
    %v2283 = vld [vmem:[%s7] sm:$0x1]
    %v2285 = vperm.slane %v2283, 0
    %v2287 = vmul.f32 %v2282, %v2285
    %v2288 = vld [vmem:[%s8] sm:$0x1]
    %v2290 = vperm.slane %v2288, 0
    %v2292 = vadd.f32 %v2287, %v2290
    %v2293 = vld [vmem:[#allocation7] sm:$0xff]
    %v2294 = vld [vmem:[#allocation7 + $0x8] sm:$0xff]
    %v2295 = vld [vmem:[#allocation7 + $0x10] sm:$0xff]
    %v2296 = vld [vmem:[#allocation7 + $0x18] sm:$0xff]
    %v2297 = vld [vmem:[#allocation7 + $0x20] sm:$0xff]
    %v2298 = vld [vmem:[#allocation7 + $0x28] sm:$0xff]
    %v2299 = vld [vmem:[#allocation7 + $0x30] sm:$0xff]
    %v2300 = vld [vmem:[#allocation7 + $0x38] sm:$0xff]
    %v2301 = vld [vmem:[#allocation7 + $0x40] sm:$0xff]
    %v2302 = vld [vmem:[#allocation7 + $0x48] sm:$0xff]
    %v2303 = vld [vmem:[#allocation7 + $0x50] sm:$0xff]
    %v2304 = vld [vmem:[#allocation7 + $0x58] sm:$0xff]
    %v2305 = vld [vmem:[#allocation7 + $0x60] sm:$0xff]
    %v2306 = vld [vmem:[#allocation7 + $0x68] sm:$0xff]
    %v2307 = vld [vmem:[#allocation7 + $0x70] sm:$0xff]
    %v2308 = vld [vmem:[#allocation7 + $0x78] sm:$0xff]
    %v2309 = vld [vmem:[%s10] sm:$0x1]
    %v2311 = vperm.slane %v2309, 0
    %2313 = vmatpush.msra.mxu0 %v2308
    %2314 = vmatpush.msra.mxu0 %v2307
    %2315 = vmatpush.msra.mxu0 %v2306
    %2316 = vmatpush.msra.mxu0 %v2305
    %2317 = vmatpush.msra.mxu0 %v2304
    %2318 = vmatpush.msra.mxu0 %v2303
    %2319 = vmatpush.msra.mxu0 %v2302
    %2320 = vmatpush.msra.mxu0 %v2301
    %2321 = vmatpush.msra.mxu0 %v2300
    %2322 = vmatpush.msra.mxu0 %v2299
    %2323 = vmatpush.msra.mxu0 %v2298
    %2324 = vmatpush.msra.mxu0 %v2297
    %2325 = vmatpush.msra.mxu0 %v2296
    %2326 = vmatpush.msra.mxu0 %v2295
    %2327 = vmatpush.msra.mxu0 %v2294
    %2328 = vmatpush.msra.mxu0 %v2293
    %2329 = vmatmul.f32.gmra.mxu0 %v2292
    %v2330 = vpop.f32.mrf.mxu0
    %v2331 = vadd.f32 %v2311, %v2330
    %2332 = vdwg.mxu0
    %2333 = vst [vmem:[#allocation9] sm:$0xff] %v2331
    // Predicated region
    $region54: #{tpu_custom_call.1} parent=1 // pred_check
      _
    $region55: #{tpu_custom_call.1} parent=1 // pred_check_branch
      %2335 = sbr.rel (0) target = $region57
    $region56: #{tpu_custom_call.1} parent=1 // pred_region
      %2337 = vsyncadd [#allocation6], 0
      %s2339 = sshll.u32 [#allocation9], 4
      %s2340 = int_to_ptr.vmem [resolvable:$true] %s2339
      %s2341 = sshll.u32 %s11, 4
      %s2342 = int_to_ptr.hbm [resolvable:$true] %s2341
      %2344 = dma.vmem_to_hbm [thread:$0]  %s2340, 128, %s2342, [#allocation6]
    $region57: #{tpu_custom_call.1} parent=1 // pred_fallthru
      _
    // Predicated region
    $region58: #{tpu_custom_call.1} parent=1 // pred_check
      _
    $region59: #{tpu_custom_call.1} parent=1 // pred_check_branch
      %2346 = sbr.rel (0) target = $region61
    $region60: #{tpu_custom_call.1} parent=1 // pred_region
      %2348 = vsyncadd [#allocation11], 0
      %s2350 = sshll.u32 [#allocation10], 4
      %s2351 = int_to_ptr.vmem [resolvable:$true] %s2350
      %s2352 = sshll.u32 %s12, 4
      %s2353 = int_to_ptr.hbm [resolvable:$true] %s2352
      %2355 = dma.vmem_to_hbm [thread:$0]  %s2351, 128, %s2353, [#allocation11]
    $region61: #{tpu_custom_call.1} parent=1 // pred_fallthru
      _
    // Predicated region
    $region62: #{tpu_custom_call.1} parent=1 // pred_check
      _
    $region63: #{tpu_custom_call.1} parent=1 // pred_check_branch
      %2357 = sbr.rel (0) target = $region65
    $region64: #{tpu_custom_call.1} parent=1 // pred_region
      %2359 = dma.done [#allocation6], 128
    $region65: #{tpu_custom_call.1} parent=1 // pred_fallthru
      _
    // Predicated region
    $region66: #{tpu_custom_call.1} parent=1 // pred_check
      _
    $region67: #{tpu_custom_call.1} parent=1 // pred_check_branch
      %2361 = sbr.rel (0) target = $region69
    $region68: #{tpu_custom_call.1} parent=1 // pred_region
      %2363 = dma.done [#allocation11], 128
    $region69: #{tpu_custom_call.1} parent=1 // pred_fallthru
      _
    %2364 = vsyncpa [#allocation5], 1
    %2365 = vsyncpa [#allocation8], 1
    %2366 = vsyncpa [#allocation6], 1
    %2367 = vsyncpa [#allocation11], 1

</llo_original>
